<compile_context>
chip_gen: v7x
topology: tpu7x:2x2x1
jax: 0.10.0
libtpu: 0.0.40
codegen_flags: <defaults>
</compile_context>

<pallas_src>
import functools

import jax
import jax.numpy as jnp
from jax import lax
from jax.experimental import pallas as pl
from jax.experimental.pallas import tpu as pltpu


# ----------------------------------------------------------------------------
# Config helpers (mirrors the PyTorch InvertedResidualConfig)
# ----------------------------------------------------------------------------
def _make_divisible(ch, divisor=8, min_ch=None):
    if min_ch is None:
        min_ch = divisor
    new_ch = max(min_ch, int(ch + divisor / 2) // divisor * divisor)
    if new_ch < 0.9 * ch:
        new_ch += divisor
    return new_ch


class InvertedResidualConfig:
    def __init__(self, kernel, input_c, out_c, expanded_ratio, stride,
                 use_se, drop_rate, index, width_coefficient):
        self.input_c = self.adjust_channels(input_c, width_coefficient)
        self.kernel = kernel
        self.expanded_c = self.input_c * expanded_ratio
        self.out_c = self.adjust_channels(out_c, width_coefficient)
        self.use_se = use_se
        self.stride = stride
        self.drop_rate = drop_rate
        self.index = index

    @staticmethod
    def adjust_channels(channels, width_coefficient):
        return _make_divisible(channels * width_coefficient, 8)


def _fold_bn(gamma, beta, mean, var, eps=1e-5):
    scale = gamma / jnp.sqrt(var + eps)
    return scale, beta - mean * scale


# ----------------------------------------------------------------------------
# Single fused MBConv kernel (one grid step = one sample)
# ----------------------------------------------------------------------------
def _mbconv_kernel(mask_ref, *refs, H, W, k, stride, pad, keep_prob,
                   has_expand, use_se, use_res, droppath):
    """Fused expand -> dwconv -> SE -> project -> DropPath -> residual.

    Ref order (after the scalar-prefetch keep mask):
      x (1, Cin, H*W),
      [w_exp (Cin,Cexp), exp_scale (1,Cexp), exp_bias (1,Cexp)]  if has_expand,
      w_dw (k*k, Cexp), dw_scale (1,Cexp), dw_bias (1,Cexp),
      [w_se1 (Cexp,Csq), b_se1 (1,Csq), w_se2 (Csq,Cexp), b_se2 (1,Cexp)] if use_se,
      w_proj (Cexp,Cout), proj_scale (1,Cout), proj_bias (1,Cout),
      out (1, Cout, Ho*Wo),
      pad_scratch VMEM (Hp, Wp, Cexp).
    """
    idx = 0
    x_ref = refs[idx]; idx += 1
    if has_expand:
        w_exp_ref, exp_s_ref, exp_b_ref = refs[idx:idx + 3]; idx += 3
    w_dw_ref, dw_s_ref, dw_b_ref = refs[idx:idx + 3]; idx += 3
    if use_se:
        w1_ref, b1_ref, w2_ref, b2_ref = refs[idx:idx + 4]; idx += 4
    wp_ref, ps_ref, pb_ref = refs[idx:idx + 3]; idx += 3
    o_ref = refs[idx]; idx += 1
    pad_ref = refs[idx]

    cexp = w_dw_ref.shape[1]
    ho = (H + 2 * pad - k) // stride + 1
    wo = (W + 2 * pad - k) // stride + 1

    # ---- expand 1x1 conv + folded BN + SiLU (channels-first input) -----------
    x_cn = x_ref[0].astype(jnp.float32)                      # (Cin, H*W)
    x_nc = jnp.transpose(x_cn)                               # (H*W, Cin) small
    if has_expand:
        ex = jnp.dot(x_nc, w_exp_ref[...].astype(jnp.float32),
                     preferred_element_type=jnp.float32)     # (H*W, Cexp)
        ex = ex * exp_s_ref[...] + exp_b_ref[...]
        ex = ex * jax.nn.sigmoid(ex)                         # SiLU
    else:
        ex = x_nc

    # ---- depthwise kxk conv + folded BN + SiLU (zero-padded VMEM scratch) ----
    pad_ref[...] = jnp.zeros_like(pad_ref)
    pad_ref[pad:pad + H, pad:pad + W, :] = ex.reshape(H, W, cexp)
    xp = pad_ref[...]                                        # (Hp, Wp, Cexp)
    wts = w_dw_ref[...].astype(jnp.float32)                  # (k*k, Cexp)
    acc = jnp.zeros((ho, wo, cexp), jnp.float32)
    for kh in range(k):
        for kw in range(k):
            if stride == 1:
                patch = xp[kh:kh + ho, kw:kw + wo, :]
            else:
                # TODO(synk): stride>1 uses strided value slices on the
                # second-minor dims; validate / rewrite as a phase-split
                # reshape before running stride-2 MBConv blocks.
                patch = xp[kh:kh + (ho - 1) * stride + 1:stride,
                           kw:kw + (wo - 1) * stride + 1:stride, :]
            acc = acc + patch * wts[kh * k + kw][None, None, :]
    y = acc * dw_s_ref[0][None, None, :] + dw_b_ref[0][None, None, :]
    y = y * jax.nn.sigmoid(y)                                # SiLU
    y2 = y.reshape(ho * wo, cexp)

    # ---- Squeeze-Excitation: mean-pool -> fc1+SiLU -> fc2+Sigmoid -> gate ----
    if use_se:
        pooled = jnp.mean(y2, axis=0, keepdims=True)         # (1, Cexp)
        h1 = jnp.dot(pooled, w1_ref[...].astype(jnp.float32),
                     preferred_element_type=jnp.float32) + b1_ref[...]
        h1 = h1 * jax.nn.sigmoid(h1)
        g = jnp.dot(h1, w2_ref[...].astype(jnp.float32),
                    preferred_element_type=jnp.float32) + b2_ref[...]
        g = jax.nn.sigmoid(g)
        y2 = y2 * g

    # ---- project 1x1 conv + folded BN (no act) -> DropPath -> residual -------
    out_nc = jnp.dot(y2, wp_ref[...].astype(jnp.float32),
                     preferred_element_type=jnp.float32)     # (Ho*Wo, Cout)
    out_nc = out_nc * ps_ref[...] + pb_ref[...]
    out_cn = jnp.transpose(out_nc)                           # (Cout, Ho*Wo) lane-dense
    if use_res:
        if droppath:
            b = pl.program_id(0)
            scale = mask_ref[b].astype(jnp.float32) * (1.0 / keep_prob)
            out_cn = out_cn * scale
        out_cn = out_cn + x_cn                               # residual (Cin==Cout)
    o_ref[0] = out_cn.astype(o_ref.dtype)


# ----------------------------------------------------------------------------
# pallas_call wrapper: full InvertedResidual forward
# ----------------------------------------------------------------------------
def inverted_residual_pallas(x_nchw, params, cfg, *, training=False, keep_mask=None):
    B, Cin, H, W = x_nchw.shape
    Cexp, Cout, k, stride = cfg.expanded_c, cfg.out_c, cfg.kernel, cfg.stride
    pad = (k - 1) // 2
    Ho = (H + 2 * pad - k) // stride + 1
    Wo = (W + 2 * pad - k) // stride + 1
    N, No = H * W, Ho * Wo
    use_res = stride == 1 and cfg.input_c == cfg.out_c
    has_expand = Cexp != Cin
    use_se = bool(cfg.use_se)
    droppath = bool(use_res and cfg.drop_rate > 0 and training and keep_mask is not None)
    keep_prob = 1.0 - float(cfg.drop_rate) if droppath else 1.0

    if keep_mask is None:
        keep_mask = jnp.ones((B,), jnp.int32)
    keep_mask = keep_mask.astype(jnp.int32)

    # Free reshape only (no XLA transpose): channels-first, lane-dense spatial.
    x_cn = x_nchw.reshape(B, Cin, N)

    args = [x_cn]
    in_specs = [pl.BlockSpec((1, Cin, N), lambda b, *_: (b, 0, 0))]

    def add_weight(*arrs):
        for a in arrs:
            args.append(a)
            in_specs.append(pl.BlockSpec(a.shape, lambda b, *_: (0, 0)))

    if has_expand:
        add_weight(params["w_exp"],
                   params["exp_scale"].reshape(1, -1),
                   params["exp_bias"].reshape(1, -1))
    add_weight(params["w_dw"],
               params["dw_scale"].reshape(1, -1),
               params["dw_bias"].reshape(1, -1))
    if use_se:
        add_weight(params["w_se1"], params["b_se1"].reshape(1, -1),
                   params["w_se2"], params["b_se2"].reshape(1, -1))
    add_weight(params["w_proj"],
               params["proj_scale"].reshape(1, -1),
               params["proj_bias"].reshape(1, -1))

    kernel = functools.partial(
        _mbconv_kernel, H=H, W=W, k=k, stride=stride, pad=pad,
        keep_prob=keep_prob, has_expand=has_expand, use_se=use_se,
        use_res=use_res, droppath=droppath)

    grid_spec = pltpu.PrefetchScalarGridSpec(
        num_scalar_prefetch=1,
        grid=(B,),
        in_specs=in_specs,
        out_specs=pl.BlockSpec((1, Cout, No), lambda b, *_: (b, 0, 0)),
        scratch_shapes=[pltpu.VMEM((H + 2 * pad, W + 2 * pad, Cexp), jnp.float32)],
    )
    out = pl.pallas_call(
        kernel,
        out_shape=jax.ShapeDtypeStruct((B, Cout, No), x_nchw.dtype),
        grid_spec=grid_spec,
        compiler_params=pltpu.CompilerParams(dimension_semantics=("parallel",)),
    )(keep_mask, *args)

    return out.reshape(B, Cout, Ho, Wo)                      # already NCHW


class InvertedResidualPallas:
    """Mirror of the PyTorch InvertedResidual module (folded-BN forward)."""

    def __init__(self, cfg, params):
        self.cfg = cfg
        self.params = params
        self.use_res_connect = cfg.stride == 1 and cfg.input_c == cfg.out_c
        self.out_channels = cfg.out_c

    def __call__(self, x, training=False, keep_mask=None):
        return inverted_residual_pallas(x, self.params, self.cfg,
                                        training=training, keep_mask=keep_mask)


# ----------------------------------------------------------------------------
# Pure-JAX reference (lax.conv) for correctness checking
# ----------------------------------------------------------------------------
def _conv_nchw(x, w_oihw, stride=1, padding=0, groups=1):
    return lax.conv_general_dilated(
        x, w_oihw, window_strides=(stride, stride),
        padding=[(padding, padding), (padding, padding)],
        feature_group_count=groups,
        dimension_numbers=("NCHW", "OIHW", "NCHW"),
        precision=lax.Precision.HIGHEST)


def inverted_residual_reference(x, p, cfg, *, training=False, keep_mask=None):
    Cin, Cexp, Cout, k = cfg.input_c, cfg.expanded_c, cfg.out_c, cfg.kernel
    use_res = cfg.stride == 1 and cfg.input_c == cfg.out_c
    h = x
    if Cexp != Cin:
        w = jnp.transpose(p["w_exp"], (1, 0)).reshape(Cexp, Cin, 1, 1)
        h = _conv_nchw(h, w)
        h = h * p["exp_scale"][None, :, None, None] + p["exp_bias"][None, :, None, None]
        h = h * jax.nn.sigmoid(h)
    wdw = jnp.transpose(p["w_dw"], (1, 0)).reshape(Cexp, 1, k, k)
    pad = (k - 1) // 2
    h = _conv_nchw(h, wdw, stride=cfg.stride, padding=pad, groups=Cexp)
    h = h * p["dw_scale"][None, :, None, None] + p["dw_bias"][None, :, None, None]
    h = h * jax.nn.sigmoid(h)
    if cfg.use_se:
        s = jnp.mean(h, axis=(2, 3))
        s = jnp.dot(s, p["w_se1"], precision=lax.Precision.HIGHEST) + p["b_se1"]
        s = s * jax.nn.sigmoid(s)
        s = jnp.dot(s, p["w_se2"], precision=lax.Precision.HIGHEST) + p["b_se2"]
        s = jax.nn.sigmoid(s)
        h = h * s[:, :, None, None]
    wp = jnp.transpose(p["w_proj"], (1, 0)).reshape(Cout, Cexp, 1, 1)
    h = _conv_nchw(h, wp)
    h = h * p["proj_scale"][None, :, None, None] + p["proj_bias"][None, :, None, None]
    if use_res:
        if training and cfg.drop_rate > 0 and keep_mask is not None:
            keep_prob = 1.0 - cfg.drop_rate
            h = h / keep_prob * keep_mask.astype(h.dtype)[:, None, None, None]
        h = h + x
    return h


# ----------------------------------------------------------------------------
# Parameter construction
# ----------------------------------------------------------------------------
def init_params(key, cfg):
    Cin, Cexp, Cout, k = cfg.input_c, cfg.expanded_c, cfg.out_c, cfg.kernel
    Csq = cfg.input_c // 4
    ks = jax.random.split(key, 10)

    def bn(kk, c):
        k0, k1, k2, k3 = jax.random.split(kk, 4)
        gamma = 1.0 + 0.1 * jax.random.normal(k0, (c,), jnp.float32)
        beta = 0.1 * jax.random.normal(k1, (c,), jnp.float32)
        mean = 0.1 * jax.random.normal(k2, (c,), jnp.float32)
        var = jnp.abs(jax.random.normal(k3, (c,), jnp.float32)) + 0.5
        return _fold_bn(gamma, beta, mean, var)

    p = {}
    p["w_exp"] = 0.2 * jax.random.normal(ks[0], (Cin, Cexp), jnp.float32)
    p["exp_scale"], p["exp_bias"] = bn(ks[1], Cexp)
    p["w_dw"] = 0.2 * jax.random.normal(ks[2], (k * k, Cexp), jnp.float32)
    p["dw_scale"], p["dw_bias"] = bn(ks[3], Cexp)
    p["w_se1"] = 0.2 * jax.random.normal(ks[4], (Cexp, Csq), jnp.float32)
    p["b_se1"] = 0.1 * jax.random.normal(ks[5], (Csq,), jnp.float32)
    p["w_se2"] = 0.2 * jax.random.normal(ks[6], (Csq, Cexp), jnp.float32)
    p["b_se2"] = 0.1 * jax.random.normal(ks[7], (Cexp,), jnp.float32)
    p["w_proj"] = 0.2 * jax.random.normal(ks[8], (Cexp, Cout), jnp.float32)
    p["proj_scale"], p["proj_bias"] = bn(ks[9], Cout)
    return p


# ----------------------------------------------------------------------------
# Demo / self-test
# ----------------------------------------------------------------------------
if __name__ == "__main__":
    root = jax.random.PRNGKey(0)
    k_x, k_p, k_mask = jax.random.split(root, 3)

    B, H, W = 2, 16, 16
    cfg = InvertedResidualConfig(kernel=3, input_c=16, out_c=16, expanded_ratio=4,
                                 stride=1, use_se=True, drop_rate=0.25,
                                 index="1a", width_coefficient=1.0)

    x = jax.random.normal(k_x, (B, cfg.input_c, H, W), jnp.float32)
    params = init_params(k_p, cfg)
    block = InvertedResidualPallas(cfg, params)

    # Per-sample stochastic-depth keep mask, drawn host-side (timm semantics).
    keep_prob = 1.0 - cfg.drop_rate
    keep_mask = jax.random.bernoulli(k_mask, p=keep_prob, shape=(B,)).astype(jnp.int32)

    # Training mode (DropPath active).
    y_train = block(x, training=True, keep_mask=keep_mask)
    jax.block_until_ready(y_train)
    y_train_ref = inverted_residual_reference(x, params, cfg,
                                              training=True, keep_mask=keep_mask)
    err_tr = float(jnp.max(jnp.abs(y_train - y_train_ref)))
    assert y_train.shape == (B, cfg.out_c, H, W)
    assert jnp.allclose(y_train, y_train_ref, rtol=2e-3, atol=2e-3), err_tr

    # Eval mode (DropPath is identity).
    y_eval = block(x, training=False)
    jax.block_until_ready(y_eval)
    y_eval_ref = inverted_residual_reference(x, params, cfg, training=False)
    err_ev = float(jnp.max(jnp.abs(y_eval - y_eval_ref)))
    assert jnp.allclose(y_eval, y_eval_ref, rtol=2e-3, atol=2e-3), err_ev

    print("KERNEL_OK")
</pallas_src>

<mosaic_0001>
module attributes {stable_mosaic.version = 11 : i64} {
  func.func @_mbconv_kernel(%arg0: i32, %arg1: memref<2xi32, #tpu.memory_space<smem>>, %arg2: memref<1x16x256xf32, #tpu.memory_space<vmem>>, %arg3: memref<16x64xf32, #tpu.memory_space<vmem>>, %arg4: memref<1x64xf32, #tpu.memory_space<vmem>>, %arg5: memref<1x64xf32, #tpu.memory_space<vmem>>, %arg6: memref<9x64xf32, #tpu.memory_space<vmem>>, %arg7: memref<1x64xf32, #tpu.memory_space<vmem>>, %arg8: memref<1x64xf32, #tpu.memory_space<vmem>>, %arg9: memref<64x4xf32, #tpu.memory_space<vmem>>, %arg10: memref<1x4xf32, #tpu.memory_space<vmem>>, %arg11: memref<4x64xf32, #tpu.memory_space<vmem>>, %arg12: memref<1x64xf32, #tpu.memory_space<vmem>>, %arg13: memref<64x16xf32, #tpu.memory_space<vmem>>, %arg14: memref<1x16xf32, #tpu.memory_space<vmem>>, %arg15: memref<1x16xf32, #tpu.memory_space<vmem>>, %arg16: memref<1x16x256xf32, #tpu.memory_space<vmem>>, %arg17: memref<18x18x64xf32, #tpu.memory_space<vmem>>) attributes {dimension_semantics = [#tpu.dimension_semantics<parallel>], iteration_bounds = array<i64: 2>, scalar_prefetch = 1 : i64, scratch_operands = 1 : i64, tpu.core_type = #tpu.core_type<tc>, window_params = [{transform_indices = @transform_0, window_bounds = array<i64: 1, 16, 256>}, {pipeline_mode = #tpu.pipeline_mode<synchronous>, transform_indices = @transform_1, window_bounds = array<i64: 16, 64>}, {pipeline_mode = #tpu.pipeline_mode<synchronous>, transform_indices = @transform_2, window_bounds = array<i64: 1, 64>}, {pipeline_mode = #tpu.pipeline_mode<synchronous>, transform_indices = @transform_3, window_bounds = array<i64: 1, 64>}, {pipeline_mode = #tpu.pipeline_mode<synchronous>, transform_indices = @transform_4, window_bounds = array<i64: 9, 64>}, {pipeline_mode = #tpu.pipeline_mode<synchronous>, transform_indices = @transform_5, window_bounds = array<i64: 1, 64>}, {pipeline_mode = #tpu.pipeline_mode<synchronous>, transform_indices = @transform_6, window_bounds = array<i64: 1, 64>}, {pipeline_mode = #tpu.pipeline_mode<synchronous>, transform_indices = @transform_7, window_bounds = array<i64: 64, 4>}, {pipeline_mode = #tpu.pipeline_mode<synchronous>, transform_indices = @transform_8, window_bounds = array<i64: 1, 4>}, {pipeline_mode = #tpu.pipeline_mode<synchronous>, transform_indices = @transform_9, window_bounds = array<i64: 4, 64>}, {pipeline_mode = #tpu.pipeline_mode<synchronous>, transform_indices = @transform_10, window_bounds = array<i64: 1, 64>}, {pipeline_mode = #tpu.pipeline_mode<synchronous>, transform_indices = @transform_11, window_bounds = array<i64: 64, 16>}, {pipeline_mode = #tpu.pipeline_mode<synchronous>, transform_indices = @transform_12, window_bounds = array<i64: 1, 16>}, {pipeline_mode = #tpu.pipeline_mode<synchronous>, transform_indices = @transform_13, window_bounds = array<i64: 1, 16>}, {transform_indices = @transform_14, window_bounds = array<i64: 1, 16, 256>}]} {
    %c0 = arith.constant 0 : index
    %c0_0 = arith.constant 0 : index
    %c0_1 = arith.constant 0 : index
    %0 = vector.load %arg2[%c0, %c0_0, %c0_1] : memref<1x16x256xf32, #tpu.memory_space<vmem>>, vector<1x16x256xf32>
    %1 = vector.shape_cast %0 : vector<1x16x256xf32> to vector<16x256xf32>
    %2 = tpu.transpose %1, [1, 0] : vector<16x256xf32> -> vector<256x16xf32>
    %c0_2 = arith.constant 0 : index
    %c0_3 = arith.constant 0 : index
    %3 = vector.load %arg3[%c0_2, %c0_3] : memref<16x64xf32, #tpu.memory_space<vmem>>, vector<16x64xf32>
    %cst = arith.constant dense<0.000000e+00> : vector<256x64xf32>
    %4 = tpu.matmul %2, %3, %cst {dimension_numbers = #tpu.dot_dimension_numbers<[1], [0], [0], [1], [0, 0, 1, 1], [], []>} : vector<256x16xf32>, vector<16x64xf32>, vector<256x64xf32> -> vector<256x64xf32>
    %c0_4 = arith.constant 0 : index
    %c0_5 = arith.constant 0 : index
    %5 = vector.load %arg4[%c0_4, %c0_5] : memref<1x64xf32, #tpu.memory_space<vmem>>, vector<1x64xf32>
    %6 = vector.broadcast %5 : vector<1x64xf32> to vector<256x64xf32>
    %7 = arith.mulf %4, %6 : vector<256x64xf32>
    %c0_6 = arith.constant 0 : index
    %c0_7 = arith.constant 0 : index
    %8 = vector.load %arg5[%c0_6, %c0_7] : memref<1x64xf32, #tpu.memory_space<vmem>>, vector<1x64xf32>
    %9 = vector.broadcast %8 : vector<1x64xf32> to vector<256x64xf32>
    %10 = arith.addf %7, %9 : vector<256x64xf32>
    %11 = arith.negf %10 : vector<256x64xf32>
    %12 = math.exp %11 : vector<256x64xf32>
    %cst_8 = arith.constant 1.000000e+00 : f32
    %13 = vector.broadcast %cst_8 : f32 to vector<256x64xf32>
    %14 = arith.addf %13, %12 : vector<256x64xf32>
    %15 = arith.divf %13, %14 : vector<256x64xf32>
    %16 = arith.mulf %10, %15 : vector<256x64xf32>
    %cst_9 = arith.constant 0.000000e+00 : f32
    %17 = vector.broadcast %cst_9 : f32 to vector<18x18x64xf32>
    %c0_10 = arith.constant 0 : index
    %c0_11 = arith.constant 0 : index
    %c0_12 = arith.constant 0 : index
    %18 = vector.load %arg17[%c0_10, %c0_11, %c0_12] : memref<18x18x64xf32, #tpu.memory_space<vmem>>, vector<18x18x64xf32>
    tpu.vector_store %arg17[%c0_10, %c0_11, %c0_12], %17 {strides = array<i32>} : memref<18x18x64xf32, #tpu.memory_space<vmem>>, vector<18x18x64xf32>,
    %19 = vector.shape_cast %16 : vector<256x64xf32> to vector<16x16x64xf32>
    %c1 = arith.constant 1 : index
    %c1_13 = arith.constant 1 : index
    %c0_14 = arith.constant 0 : index
    %20 = vector.load %arg17[%c1, %c1_13, %c0_14] : memref<18x18x64xf32, #tpu.memory_space<vmem>>, vector<16x16x64xf32>
    tpu.vector_store %arg17[%c1, %c1_13, %c0_14], %19 {strides = array<i32>} : memref<18x18x64xf32, #tpu.memory_space<vmem>>, vector<16x16x64xf32>,
    %c0_15 = arith.constant 0 : index
    %c0_16 = arith.constant 0 : index
    %c0_17 = arith.constant 0 : index
    %21 = vector.load %arg17[%c0_15, %c0_16, %c0_17] : memref<18x18x64xf32, #tpu.memory_space<vmem>>, vector<18x18x64xf32>
    %c0_18 = arith.constant 0 : index
    %c0_19 = arith.constant 0 : index
    %22 = vector.load %arg6[%c0_18, %c0_19] : memref<9x64xf32, #tpu.memory_space<vmem>>, vector<9x64xf32>
    %cst_20 = arith.constant 0.000000e+00 : f32
    %23 = vector.broadcast %cst_20 : f32 to vector<16x16x64xf32>
    %24 = vector.extract_strided_slice %21 {offsets = [0, 0, 0], sizes = [16, 16, 64], strides = [1, 1, 1]} : vector<18x18x64xf32> to vector<16x16x64xf32>
    %25 = vector.extract_strided_slice %22 {offsets = [0, 0], sizes = [1, 64], strides = [1, 1]} : vector<9x64xf32> to vector<1x64xf32>
    %26 = vector.shape_cast %25 : vector<1x64xf32> to vector<64xf32>
    %27 = vector.shape_cast %26 : vector<64xf32> to vector<1x1x64xf32>
    %28 = vector.broadcast %27 : vector<1x1x64xf32> to vector<16x16x64xf32>
    %29 = arith.mulf %24, %28 : vector<16x16x64xf32>
    %30 = arith.addf %23, %29 : vector<16x16x64xf32>
    %31 = vector.extract_strided_slice %21 {offsets = [0, 1, 0], sizes = [16, 16, 64], strides = [1, 1, 1]} : vector<18x18x64xf32> to vector<16x16x64xf32>
    %32 = vector.extract_strided_slice %22 {offsets = [1, 0], sizes = [1, 64], strides = [1, 1]} : vector<9x64xf32> to vector<1x64xf32>
    %33 = vector.shape_cast %32 : vector<1x64xf32> to vector<64xf32>
    %34 = vector.shape_cast %33 : vector<64xf32> to vector<1x1x64xf32>
    %35 = vector.broadcast %34 : vector<1x1x64xf32> to vector<16x16x64xf32>
    %36 = arith.mulf %31, %35 : vector<16x16x64xf32>
    %37 = arith.addf %30, %36 : vector<16x16x64xf32>
    %38 = vector.extract_strided_slice %21 {offsets = [0, 2, 0], sizes = [16, 16, 64], strides = [1, 1, 1]} : vector<18x18x64xf32> to vector<16x16x64xf32>
    %39 = vector.extract_strided_slice %22 {offsets = [2, 0], sizes = [1, 64], strides = [1, 1]} : vector<9x64xf32> to vector<1x64xf32>
    %40 = vector.shape_cast %39 : vector<1x64xf32> to vector<64xf32>
    %41 = vector.shape_cast %40 : vector<64xf32> to vector<1x1x64xf32>
    %42 = vector.broadcast %41 : vector<1x1x64xf32> to vector<16x16x64xf32>
    %43 = arith.mulf %38, %42 : vector<16x16x64xf32>
    %44 = arith.addf %37, %43 : vector<16x16x64xf32>
    %45 = vector.extract_strided_slice %21 {offsets = [1, 0, 0], sizes = [16, 16, 64], strides = [1, 1, 1]} : vector<18x18x64xf32> to vector<16x16x64xf32>
    %46 = vector.extract_strided_slice %22 {offsets = [3, 0], sizes = [1, 64], strides = [1, 1]} : vector<9x64xf32> to vector<1x64xf32>
    %47 = vector.shape_cast %46 : vector<1x64xf32> to vector<64xf32>
    %48 = vector.shape_cast %47 : vector<64xf32> to vector<1x1x64xf32>
    %49 = vector.broadcast %48 : vector<1x1x64xf32> to vector<16x16x64xf32>
    %50 = arith.mulf %45, %49 : vector<16x16x64xf32>
    %51 = arith.addf %44, %50 : vector<16x16x64xf32>
    %52 = vector.extract_strided_slice %21 {offsets = [1, 1, 0], sizes = [16, 16, 64], strides = [1, 1, 1]} : vector<18x18x64xf32> to vector<16x16x64xf32>
    %53 = vector.extract_strided_slice %22 {offsets = [4, 0], sizes = [1, 64], strides = [1, 1]} : vector<9x64xf32> to vector<1x64xf32>
    %54 = vector.shape_cast %53 : vector<1x64xf32> to vector<64xf32>
    %55 = vector.shape_cast %54 : vector<64xf32> to vector<1x1x64xf32>
    %56 = vector.broadcast %55 : vector<1x1x64xf32> to vector<16x16x64xf32>
    %57 = arith.mulf %52, %56 : vector<16x16x64xf32>
    %58 = arith.addf %51, %57 : vector<16x16x64xf32>
    %59 = vector.extract_strided_slice %21 {offsets = [1, 2, 0], sizes = [16, 16, 64], strides = [1, 1, 1]} : vector<18x18x64xf32> to vector<16x16x64xf32>
    %60 = vector.extract_strided_slice %22 {offsets = [5, 0], sizes = [1, 64], strides = [1, 1]} : vector<9x64xf32> to vector<1x64xf32>
    %61 = vector.shape_cast %60 : vector<1x64xf32> to vector<64xf32>
    %62 = vector.shape_cast %61 : vector<64xf32> to vector<1x1x64xf32>
    %63 = vector.broadcast %62 : vector<1x1x64xf32> to vector<16x16x64xf32>
    %64 = arith.mulf %59, %63 : vector<16x16x64xf32>
    %65 = arith.addf %58, %64 : vector<16x16x64xf32>
    %66 = vector.extract_strided_slice %21 {offsets = [2, 0, 0], sizes = [16, 16, 64], strides = [1, 1, 1]} : vector<18x18x64xf32> to vector<16x16x64xf32>
    %67 = vector.extract_strided_slice %22 {offsets = [6, 0], sizes = [1, 64], strides = [1, 1]} : vector<9x64xf32> to vector<1x64xf32>
    %68 = vector.shape_cast %67 : vector<1x64xf32> to vector<64xf32>
    %69 = vector.shape_cast %68 : vector<64xf32> to vector<1x1x64xf32>
    %70 = vector.broadcast %69 : vector<1x1x64xf32> to vector<16x16x64xf32>
    %71 = arith.mulf %66, %70 : vector<16x16x64xf32>
    %72 = arith.addf %65, %71 : vector<16x16x64xf32>
    %73 = vector.extract_strided_slice %21 {offsets = [2, 1, 0], sizes = [16, 16, 64], strides = [1, 1, 1]} : vector<18x18x64xf32> to vector<16x16x64xf32>
    %74 = vector.extract_strided_slice %22 {offsets = [7, 0], sizes = [1, 64], strides = [1, 1]} : vector<9x64xf32> to vector<1x64xf32>
    %75 = vector.shape_cast %74 : vector<1x64xf32> to vector<64xf32>
    %76 = vector.shape_cast %75 : vector<64xf32> to vector<1x1x64xf32>
    %77 = vector.broadcast %76 : vector<1x1x64xf32> to vector<16x16x64xf32>
    %78 = arith.mulf %73, %77 : vector<16x16x64xf32>
    %79 = arith.addf %72, %78 : vector<16x16x64xf32>
    %80 = vector.extract_strided_slice %21 {offsets = [2, 2, 0], sizes = [16, 16, 64], strides = [1, 1, 1]} : vector<18x18x64xf32> to vector<16x16x64xf32>
    %81 = vector.extract_strided_slice %22 {offsets = [8, 0], sizes = [1, 64], strides = [1, 1]} : vector<9x64xf32> to vector<1x64xf32>
    %82 = vector.shape_cast %81 : vector<1x64xf32> to vector<64xf32>
    %83 = vector.shape_cast %82 : vector<64xf32> to vector<1x1x64xf32>
    %84 = vector.broadcast %83 : vector<1x1x64xf32> to vector<16x16x64xf32>
    %85 = arith.mulf %80, %84 : vector<16x16x64xf32>
    %86 = arith.addf %79, %85 : vector<16x16x64xf32>
    %c0_21 = arith.constant 0 : index
    %c0_22 = arith.constant 0 : index
    %87 = vector.load %arg7[%c0_21, %c0_22] : memref<1x64xf32, #tpu.memory_space<vmem>>, vector<1x64xf32>
    %88 = vector.shape_cast %87 : vector<1x64xf32> to vector<64xf32>
    %89 = vector.shape_cast %88 : vector<64xf32> to vector<1x1x64xf32>
    %90 = vector.broadcast %89 : vector<1x1x64xf32> to vector<16x16x64xf32>
    %91 = arith.mulf %86, %90 : vector<16x16x64xf32>
    %c0_23 = arith.constant 0 : index
    %c0_24 = arith.constant 0 : index
    %92 = vector.load %arg8[%c0_23, %c0_24] : memref<1x64xf32, #tpu.memory_space<vmem>>, vector<1x64xf32>
    %93 = vector.shape_cast %92 : vector<1x64xf32> to vector<64xf32>
    %94 = vector.shape_cast %93 : vector<64xf32> to vector<1x1x64xf32>
    %95 = vector.broadcast %94 : vector<1x1x64xf32> to vector<16x16x64xf32>
    %96 = arith.addf %91, %95 : vector<16x16x64xf32>
    %97 = arith.negf %96 : vector<16x16x64xf32>
    %98 = math.exp %97 : vector<16x16x64xf32>
    %cst_25 = arith.constant 1.000000e+00 : f32
    %99 = vector.broadcast %cst_25 : f32 to vector<16x16x64xf32>
    %100 = arith.addf %99, %98 : vector<16x16x64xf32>
    %101 = arith.divf %99, %100 : vector<16x16x64xf32>
    %102 = arith.mulf %96, %101 : vector<16x16x64xf32>
    %103 = vector.shape_cast %102 : vector<16x16x64xf32> to vector<256x64xf32>
    %cst_26 = arith.constant dense<0.000000e+00> : vector<64xf32>
    %104 = vector.multi_reduction <add>, %103, %cst_26 [0] : vector<256x64xf32> to vector<64xf32>
    %105 = vector.shape_cast %104 : vector<64xf32> to vector<1x64xf32>
    %cst_27 = arith.constant 2.560000e+02 : f32
    %106 = vector.broadcast %cst_27 : f32 to vector<1x64xf32>
    %107 = arith.divf %105, %106 : vector<1x64xf32>
    %c0_28 = arith.constant 0 : index
    %c0_29 = arith.constant 0 : index
    %108 = vector.load %arg9[%c0_28, %c0_29] : memref<64x4xf32, #tpu.memory_space<vmem>>, vector<64x4xf32>
    %cst_30 = arith.constant dense<0.000000e+00> : vector<1x4xf32>
    %109 = tpu.matmul %107, %108, %cst_30 {dimension_numbers = #tpu.dot_dimension_numbers<[1], [0], [0], [1], [0, 0, 1, 1], [], []>} : vector<1x64xf32>, vector<64x4xf32>, vector<1x4xf32> -> vector<1x4xf32>
    %c0_31 = arith.constant 0 : index
    %c0_32 = arith.constant 0 : index
    %110 = vector.load %arg10[%c0_31, %c0_32] : memref<1x4xf32, #tpu.memory_space<vmem>>, vector<1x4xf32>
    %111 = arith.addf %109, %110 : vector<1x4xf32>
    %112 = arith.negf %111 : vector<1x4xf32>
    %113 = math.exp %112 : vector<1x4xf32>
    %cst_33 = arith.constant 1.000000e+00 : f32
    %114 = vector.broadcast %cst_33 : f32 to vector<1x4xf32>
    %115 = arith.addf %114, %113 : vector<1x4xf32>
    %116 = arith.divf %114, %115 : vector<1x4xf32>
    %117 = arith.mulf %111, %116 : vector<1x4xf32>
    %c0_34 = arith.constant 0 : index
    %c0_35 = arith.constant 0 : index
    %118 = vector.load %arg11[%c0_34, %c0_35] : memref<4x64xf32, #tpu.memory_space<vmem>>, vector<4x64xf32>
    %cst_36 = arith.constant dense<0.000000e+00> : vector<1x64xf32>
    %119 = tpu.matmul %117, %118, %cst_36 {dimension_numbers = #tpu.dot_dimension_numbers<[1], [0], [0], [1], [0, 0, 1, 1], [], []>} : vector<1x4xf32>, vector<4x64xf32>, vector<1x64xf32> -> vector<1x64xf32>
    %c0_37 = arith.constant 0 : index
    %c0_38 = arith.constant 0 : index
    %120 = vector.load %arg12[%c0_37, %c0_38] : memref<1x64xf32, #tpu.memory_space<vmem>>, vector<1x64xf32>
    %121 = arith.addf %119, %120 : vector<1x64xf32>
    %122 = arith.negf %121 : vector<1x64xf32>
    %123 = math.exp %122 : vector<1x64xf32>
    %cst_39 = arith.constant 1.000000e+00 : f32
    %124 = vector.broadcast %cst_39 : f32 to vector<1x64xf32>
    %125 = arith.addf %124, %123 : vector<1x64xf32>
    %126 = arith.divf %124, %125 : vector<1x64xf32>
    %127 = vector.broadcast %126 : vector<1x64xf32> to vector<256x64xf32>
    %128 = arith.mulf %103, %127 : vector<256x64xf32>
    %c0_40 = arith.constant 0 : index
    %c0_41 = arith.constant 0 : index
    %129 = vector.load %arg13[%c0_40, %c0_41] : memref<64x16xf32, #tpu.memory_space<vmem>>, vector<64x16xf32>
    %cst_42 = arith.constant dense<0.000000e+00> : vector<256x16xf32>
    %130 = tpu.matmul %128, %129, %cst_42 {dimension_numbers = #tpu.dot_dimension_numbers<[1], [0], [0], [1], [0, 0, 1, 1], [], []>} : vector<256x64xf32>, vector<64x16xf32>, vector<256x16xf32> -> vector<256x16xf32>
    %c0_43 = arith.constant 0 : index
    %c0_44 = arith.constant 0 : index
    %131 = vector.load %arg14[%c0_43, %c0_44] : memref<1x16xf32, #tpu.memory_space<vmem>>, vector<1x16xf32>
    %132 = vector.broadcast %131 : vector<1x16xf32> to vector<256x16xf32>
    %133 = arith.mulf %130, %132 : vector<256x16xf32>
    %c0_45 = arith.constant 0 : index
    %c0_46 = arith.constant 0 : index
    %134 = vector.load %arg15[%c0_45, %c0_46] : memref<1x16xf32, #tpu.memory_space<vmem>>, vector<1x16xf32>
    %135 = vector.broadcast %134 : vector<1x16xf32> to vector<256x16xf32>
    %136 = arith.addf %133, %135 : vector<256x16xf32>
    %137 = tpu.transpose %136, [1, 0] : vector<256x16xf32> -> vector<16x256xf32>
    %138 = arith.index_cast %arg0 : i32 to index
    %139 = memref.load %arg1[%138] : memref<2xi32, #tpu.memory_space<smem>>
    %140 = arith.sitofp %139 : i32 to f32
    %cst_47 = arith.constant 1.33333337 : f32
    %141 = arith.mulf %140, %cst_47 : f32
    %142 = vector.broadcast %141 : f32 to vector<16x256xf32>
    %143 = arith.mulf %137, %142 : vector<16x256xf32>
    %144 = arith.addf %143, %1 : vector<16x256xf32>
    %c0_48 = arith.constant 0 : index
    %c0_49 = arith.constant 0 : index
    %c0_50 = arith.constant 0 : index
    %145 = vector.load %arg16[%c0_48, %c0_49, %c0_50] : memref<1x16x256xf32, #tpu.memory_space<vmem>>, vector<1x16x256xf32>
    %146 = vector.shape_cast %145 : vector<1x16x256xf32> to vector<16x256xf32>
    %147 = vector.shape_cast %144 : vector<16x256xf32> to vector<1x16x256xf32>
    tpu.vector_store %arg16[%c0_48, %c0_49, %c0_50], %147 {strides = array<i32>} : memref<1x16x256xf32, #tpu.memory_space<vmem>>, vector<1x16x256xf32>,
    return
  }
  func.func @transform_0(%arg0: i32, %arg1: memref<2xi32, #tpu.memory_space<smem>>) -> (i32, i32, i32) {
    %c0_i32 = arith.constant 0 : i32
    %c0_i32_0 = arith.constant 0 : i32
    %c0_i32_1 = arith.constant 0 : i32
    return %arg0, %c0_i32, %c0_i32_0 : i32, i32, i32
  }
  func.func @transform_1(%arg0: i32, %arg1: memref<2xi32, #tpu.memory_space<smem>>) -> (i32, i32) {
    %c0_i32 = arith.constant 0 : i32
    %c0_i32_0 = arith.constant 0 : i32
    %c0_i32_1 = arith.constant 0 : i32
    return %c0_i32, %c0_i32_0 : i32, i32
  }
  func.func @transform_2(%arg0: i32, %arg1: memref<2xi32, #tpu.memory_space<smem>>) -> (i32, i32) {
    %c0_i32 = arith.constant 0 : i32
    %c0_i32_0 = arith.constant 0 : i32
    %c0_i32_1 = arith.constant 0 : i32
    return %c0_i32, %c0_i32_0 : i32, i32
  }
  func.func @transform_3(%arg0: i32, %arg1: memref<2xi32, #tpu.memory_space<smem>>) -> (i32, i32) {
    %c0_i32 = arith.constant 0 : i32
    %c0_i32_0 = arith.constant 0 : i32
    %c0_i32_1 = arith.constant 0 : i32
    return %c0_i32, %c0_i32_0 : i32, i32
  }
  func.func @transform_4(%arg0: i32, %arg1: memref<2xi32, #tpu.memory_space<smem>>) -> (i32, i32) {
    %c0_i32 = arith.constant 0 : i32
    %c0_i32_0 = arith.constant 0 : i32
    %c0_i32_1 = arith.constant 0 : i32
    return %c0_i32, %c0_i32_0 : i32, i32
  }
  func.func @transform_5(%arg0: i32, %arg1: memref<2xi32, #tpu.memory_space<smem>>) -> (i32, i32) {
    %c0_i32 = arith.constant 0 : i32
    %c0_i32_0 = arith.constant 0 : i32
    %c0_i32_1 = arith.constant 0 : i32
    return %c0_i32, %c0_i32_0 : i32, i32
  }
  func.func @transform_6(%arg0: i32, %arg1: memref<2xi32, #tpu.memory_space<smem>>) -> (i32, i32) {
    %c0_i32 = arith.constant 0 : i32
    %c0_i32_0 = arith.constant 0 : i32
    %c0_i32_1 = arith.constant 0 : i32
    return %c0_i32, %c0_i32_0 : i32, i32
  }
  func.func @transform_7(%arg0: i32, %arg1: memref<2xi32, #tpu.memory_space<smem>>) -> (i32, i32) {
    %c0_i32 = arith.constant 0 : i32
    %c0_i32_0 = arith.constant 0 : i32
    %c0_i32_1 = arith.constant 0 : i32
    return %c0_i32, %c0_i32_0 : i32, i32
  }
  func.func @transform_8(%arg0: i32, %arg1: memref<2xi32, #tpu.memory_space<smem>>) -> (i32, i32) {
    %c0_i32 = arith.constant 0 : i32
    %c0_i32_0 = arith.constant 0 : i32
    %c0_i32_1 = arith.constant 0 : i32
    return %c0_i32, %c0_i32_0 : i32, i32
  }
  func.func @transform_9(%arg0: i32, %arg1: memref<2xi32, #tpu.memory_space<smem>>) -> (i32, i32) {
    %c0_i32 = arith.constant 0 : i32
    %c0_i32_0 = arith.constant 0 : i32
    %c0_i32_1 = arith.constant 0 : i32
    return %c0_i32, %c0_i32_0 : i32, i32
  }
  func.func @transform_10(%arg0: i32, %arg1: memref<2xi32, #tpu.memory_space<smem>>) -> (i32, i32) {
    %c0_i32 = arith.constant 0 : i32
    %c0_i32_0 = arith.constant 0 : i32
    %c0_i32_1 = arith.constant 0 : i32
    return %c0_i32, %c0_i32_0 : i32, i32
  }
  func.func @transform_11(%arg0: i32, %arg1: memref<2xi32, #tpu.memory_space<smem>>) -> (i32, i32) {
    %c0_i32 = arith.constant 0 : i32
    %c0_i32_0 = arith.constant 0 : i32
    %c0_i32_1 = arith.constant 0 : i32
    return %c0_i32, %c0_i32_0 : i32, i32
  }
  func.func @transform_12(%arg0: i32, %arg1: memref<2xi32, #tpu.memory_space<smem>>) -> (i32, i32) {
    %c0_i32 = arith.constant 0 : i32
    %c0_i32_0 = arith.constant 0 : i32
    %c0_i32_1 = arith.constant 0 : i32
    return %c0_i32, %c0_i32_0 : i32, i32
  }
  func.func @transform_13(%arg0: i32, %arg1: memref<2xi32, #tpu.memory_space<smem>>) -> (i32, i32) {
    %c0_i32 = arith.constant 0 : i32
    %c0_i32_0 = arith.constant 0 : i32
    %c0_i32_1 = arith.constant 0 : i32
    return %c0_i32, %c0_i32_0 : i32, i32
  }
  func.func @transform_14(%arg0: i32, %arg1: memref<2xi32, #tpu.memory_space<smem>>) -> (i32, i32, i32) {
    %c0_i32 = arith.constant 0 : i32
    %c0_i32_0 = arith.constant 0 : i32
    %c0_i32_1 = arith.constant 0 : i32
    return %arg0, %c0_i32, %c0_i32_0 : i32, i32, i32
  }
}

</mosaic_0001>

<llo_original>
// kernel: tpu_custom_call.1
$region0: #{tpu_custom_call.1}
  #allocation0 [shape = 'u32[]', space=smem, size = 0x4, offset = 0x4, fixed_abs, tag = 'smem constant byte address 0x4 - core index']
  #allocation1 [shape = 'u32[144,128]{1,0:T(1,128)}', space=vmem, size = 0x12000, scoped, tag = 'internal scratch']
  #allocation2 [shape = 'f32[18,18,64]{2,1,0:T(8,128)}', space=vmem, size = 0x36000, scoped, tag = 'scratch operand']
  #allocation3 [shape = 's32[1]{0}', space=sflag, size = 0x4, scoped, tag = 'scoped memory for tpu_custom_call.1']
  #allocation4 [shape = 'u8[512]{0}', space=smem, size = 0x200, scoped, tag = 'prefetched SMEM operand 0']
  %s0 = inlined_call_operand.vmem [shape: s32[2], index: 0, kind: input, shape index: {}]
  %s1 = inlined_call_operand.vmem [shape: f32[2,16,256], index: 1, kind: input, shape index: {}]
  %s2 = inlined_call_operand.vmem [shape: f32[16,64], index: 2, kind: input, shape index: {}]
  %s3 = inlined_call_operand.vmem [shape: f32[1,64], index: 3, kind: input, shape index: {}]
  %s4 = inlined_call_operand.vmem [shape: f32[1,64], index: 4, kind: input, shape index: {}]
  %s5 = inlined_call_operand.vmem [shape: f32[9,64], index: 5, kind: input, shape index: {}]
  %s6 = inlined_call_operand.vmem [shape: f32[1,64], index: 6, kind: input, shape index: {}]
  %s7 = inlined_call_operand.vmem [shape: f32[1,64], index: 7, kind: input, shape index: {}]
  %s8 = inlined_call_operand.vmem [shape: f32[64,4], index: 8, kind: input, shape index: {}]
  %s9 = inlined_call_operand.vmem [shape: f32[1,4], index: 9, kind: input, shape index: {}]
  %s10 = inlined_call_operand.vmem [shape: f32[4,64], index: 10, kind: input, shape index: {}]
  %s11 = inlined_call_operand.vmem [shape: f32[1,64], index: 11, kind: input, shape index: {}]
  %s12 = inlined_call_operand.vmem [shape: f32[64,16], index: 12, kind: input, shape index: {}]
  %s13 = inlined_call_operand.vmem [shape: f32[1,16], index: 13, kind: input, shape index: {}]
  %s14 = inlined_call_operand.vmem [shape: f32[1,16], index: 14, kind: input, shape index: {}]
  %s15 = inlined_call_operand.hbm [shape: f32[2,16,256], index: 15, kind: output, shape index: {}]
  %s16 = sld [smem:[#allocation0]]
  $region89: #{tpu_custom_call.1} parent=0
    _
  %s18 = ssub.s32 1, %s16
  %s19 = scalar_select 0, %s18, %s16
  %s20 = sshll.u32 %s0, 4
  %s21 = int_to_ptr.vmem [resolvable:$true] %s20
  %23 = dma.vmem_to_smem %s21, 16, [#allocation4], [#allocation3]
  %24 = dma.done [#allocation3], 16
  %25 = sfence
  $region1: #{tpu_custom_call.1} parent=0
    #allocation5 [shape = 'u8[32768]{0}', space=vmem, size = 0x8000, scoped, tag = 'output window, operand 0']
    #allocation6 [shape = 's32[2]{0}', space=sflag, size = 0x8, scoped, tag = 'scoped memory for tpu_custom_call.1']
    %26 = vsyncpa [#allocation6], 0
    %s27 = scalar_lea.sflag [#allocation6], 1
    %28 = vsyncpa %s27, 0
    loop: start=0, step=1, limit=4
    $region2: #{tpu_custom_call.1} parent=1 // loop_pre_header
      _
    $region3: #{tpu_custom_call.1} parent=1 // loop_header
      %s30 = sphi 0, %s34
      %p31 = scmp.ge.s32.totalorder %s30, 4
      %s40 = sphi 0, %s42
      %s43 = sphi 0, %s40
      %s44 = sphi 0, %s43
      %s60 = sphi 0, %s44
      %s64 = sphi 0, %s64
      %s66 = sphi 0, %s64
      %s67 = sphi 0, %s66
      %s81 = sphi 0, %s67
      %s85 = sphi 0, %s85
      %s87 = sphi 0, %s85
      %s88 = sphi 0, %s87
      %s102 = sphi 0, %s88
      %s106 = sphi 0, %s106
      %s108 = sphi 0, %s106
      %s109 = sphi 0, %s108
      %s123 = sphi 0, %s109
      %s127 = sphi 0, %s127
      %s129 = sphi 0, %s127
      %s130 = sphi 0, %s129
      %s144 = sphi 0, %s130
      %s148 = sphi 0, %s148
      %s150 = sphi 0, %s148
      %s151 = sphi 0, %s150
      %s165 = sphi 0, %s151
      %s169 = sphi 0, %s169
      %s171 = sphi 0, %s169
      %s172 = sphi 0, %s171
      %s186 = sphi 0, %s172
      %s190 = sphi 0, %s190
      %s192 = sphi 0, %s190
      %s193 = sphi 0, %s192
      %s207 = sphi 0, %s193
      %s211 = sphi 0, %s211
      %s213 = sphi 0, %s211
      %s214 = sphi 0, %s213
      %s228 = sphi 0, %s214
      %s232 = sphi 0, %s232
      %s234 = sphi 0, %s232
      %s235 = sphi 0, %s234
      %s249 = sphi 0, %s235
      %s253 = sphi 0, %s253
      %s255 = sphi 0, %s253
      %s256 = sphi 0, %s255
      %s270 = sphi 0, %s256
      %s274 = sphi 0, %s274
      %s276 = sphi 0, %s274
      %s277 = sphi 0, %s276
      %s291 = sphi 0, %s277
      %s295 = sphi 0, %s295
      %s297 = sphi 0, %s295
      %s298 = sphi 0, %s297
      %s312 = sphi 0, %s298
      %s316 = sphi 0, %s316
      %s318 = sphi 0, %s316
      %s319 = sphi 0, %s318
      %s333 = sphi 0, %s319
      %s339 = sphi 0, %s341
      %s342 = sphi 0, %s339
      %s343 = sphi 0, %s342
      %s359 = sphi 0, %s343
    $region4: #{tpu_custom_call.1} parent=1 // loop_header_branch
      %33 = sbr.rel (%p31) target = $region8
    $region5: #{tpu_custom_call.1} parent=1 // loop_body
      %s35 = ssub.s32 %s30, 1
      %s36 = ssub.s32 %s30, 2
      %s37 = sadd.s32 %s30, 1
      %s38 = ssub.s32 %s30, %s37
      %p39 = scmp.eq.s32.totalorder %s38, 0
      %s41 = sadd.s32 %s40, 1
      %s42 = scalar_select %p39, %s40, %s41
      %p45 = pneg %p39
      %p46 = scmp.eq.s32.totalorder %s30, 1
      %p47 = por %p45, %p46
      %p48 = scmp.ne.s32.totalorder %s40, %s43
      %p49 = scmp.eq.s32.totalorder %s30, 0
      %p50 = por %p48, %p49
      %p51 = scmp.ne.s32.totalorder %s40, %s43
      %p52 = scmp.eq.s32.totalorder %s35, 1
      %p53 = por %p51, %p52
      %p54 = scmp.ne.s32.totalorder %s43, %s44
      %p55 = scmp.eq.s32.totalorder %s35, 0
      %p56 = por %p54, %p55
      %p57 = scmp.ne.s32.totalorder %s43, %s44
      %p58 = scmp.eq.s32.totalorder %s36, 1
      %p59 = por %p57, %p58
      %p61 = scmp.ne.s32.totalorder %s44, %s60
      %p62 = scmp.eq.s32.totalorder %s36, 0
      %p63 = por %p61, %p62
      %s65 = sadd.s32 %s64, 1
      %p68 = scmp.eq.s32.totalorder %s30, 1
      %p69 = scmp.ne.s32.totalorder %s64, %s66
      %p70 = scmp.eq.s32.totalorder %s30, 0
      %p71 = por %p69, %p70
      %p72 = scmp.ne.s32.totalorder %s64, %s66
      %p73 = scmp.eq.s32.totalorder %s35, 1
      %p74 = por %p72, %p73
      %p75 = scmp.ne.s32.totalorder %s66, %s67
      %p76 = scmp.eq.s32.totalorder %s35, 0
      %p77 = por %p75, %p76
      %p78 = scmp.ne.s32.totalorder %s66, %s67
      %p79 = scmp.eq.s32.totalorder %s36, 1
      %p80 = por %p78, %p79
      %p82 = scmp.ne.s32.totalorder %s67, %s81
      %p83 = scmp.eq.s32.totalorder %s36, 0
      %p84 = por %p82, %p83
      %s86 = sadd.s32 %s85, 1
      %p89 = scmp.eq.s32.totalorder %s30, 1
      %p90 = scmp.ne.s32.totalorder %s85, %s87
      %p91 = scmp.eq.s32.totalorder %s30, 0
      %p92 = por %p90, %p91
      %p93 = scmp.ne.s32.totalorder %s85, %s87
      %p94 = scmp.eq.s32.totalorder %s35, 1
      %p95 = por %p93, %p94
      %p96 = scmp.ne.s32.totalorder %s87, %s88
      %p97 = scmp.eq.s32.totalorder %s35, 0
      %p98 = por %p96, %p97
      %p99 = scmp.ne.s32.totalorder %s87, %s88
      %p100 = scmp.eq.s32.totalorder %s36, 1
      %p101 = por %p99, %p100
      %p103 = scmp.ne.s32.totalorder %s88, %s102
      %p104 = scmp.eq.s32.totalorder %s36, 0
      %p105 = por %p103, %p104
      %s107 = sadd.s32 %s106, 1
      %p110 = scmp.eq.s32.totalorder %s30, 1
      %p111 = scmp.ne.s32.totalorder %s106, %s108
      %p112 = scmp.eq.s32.totalorder %s30, 0
      %p113 = por %p111, %p112
      %p114 = scmp.ne.s32.totalorder %s106, %s108
      %p115 = scmp.eq.s32.totalorder %s35, 1
      %p116 = por %p114, %p115
      %p117 = scmp.ne.s32.totalorder %s108, %s109
      %p118 = scmp.eq.s32.totalorder %s35, 0
      %p119 = por %p117, %p118
      %p120 = scmp.ne.s32.totalorder %s108, %s109
      %p121 = scmp.eq.s32.totalorder %s36, 1
      %p122 = por %p120, %p121
      %p124 = scmp.ne.s32.totalorder %s109, %s123
      %p125 = scmp.eq.s32.totalorder %s36, 0
      %p126 = por %p124, %p125
      %s128 = sadd.s32 %s127, 1
      %p131 = scmp.eq.s32.totalorder %s30, 1
      %p132 = scmp.ne.s32.totalorder %s127, %s129
      %p133 = scmp.eq.s32.totalorder %s30, 0
      %p134 = por %p132, %p133
      %p135 = scmp.ne.s32.totalorder %s127, %s129
      %p136 = scmp.eq.s32.totalorder %s35, 1
      %p137 = por %p135, %p136
      %p138 = scmp.ne.s32.totalorder %s129, %s130
      %p139 = scmp.eq.s32.totalorder %s35, 0
      %p140 = por %p138, %p139
      %p141 = scmp.ne.s32.totalorder %s129, %s130
      %p142 = scmp.eq.s32.totalorder %s36, 1
      %p143 = por %p141, %p142
      %p145 = scmp.ne.s32.totalorder %s130, %s144
      %p146 = scmp.eq.s32.totalorder %s36, 0
      %p147 = por %p145, %p146
      %s149 = sadd.s32 %s148, 1
      %p152 = scmp.eq.s32.totalorder %s30, 1
      %p153 = scmp.ne.s32.totalorder %s148, %s150
      %p154 = scmp.eq.s32.totalorder %s30, 0
      %p155 = por %p153, %p154
      %p156 = scmp.ne.s32.totalorder %s148, %s150
      %p157 = scmp.eq.s32.totalorder %s35, 1
      %p158 = por %p156, %p157
      %p159 = scmp.ne.s32.totalorder %s150, %s151
      %p160 = scmp.eq.s32.totalorder %s35, 0
      %p161 = por %p159, %p160
      %p162 = scmp.ne.s32.totalorder %s150, %s151
      %p163 = scmp.eq.s32.totalorder %s36, 1
      %p164 = por %p162, %p163
      %p166 = scmp.ne.s32.totalorder %s151, %s165
      %p167 = scmp.eq.s32.totalorder %s36, 0
      %p168 = por %p166, %p167
      %s170 = sadd.s32 %s169, 1
      %p173 = scmp.eq.s32.totalorder %s30, 1
      %p174 = scmp.ne.s32.totalorder %s169, %s171
      %p175 = scmp.eq.s32.totalorder %s30, 0
      %p176 = por %p174, %p175
      %p177 = scmp.ne.s32.totalorder %s169, %s171
      %p178 = scmp.eq.s32.totalorder %s35, 1
      %p179 = por %p177, %p178
      %p180 = scmp.ne.s32.totalorder %s171, %s172
      %p181 = scmp.eq.s32.totalorder %s35, 0
      %p182 = por %p180, %p181
      %p183 = scmp.ne.s32.totalorder %s171, %s172
      %p184 = scmp.eq.s32.totalorder %s36, 1
      %p185 = por %p183, %p184
      %p187 = scmp.ne.s32.totalorder %s172, %s186
      %p188 = scmp.eq.s32.totalorder %s36, 0
      %p189 = por %p187, %p188
      %s191 = sadd.s32 %s190, 1
      %p194 = scmp.eq.s32.totalorder %s30, 1
      %p195 = scmp.ne.s32.totalorder %s190, %s192
      %p196 = scmp.eq.s32.totalorder %s30, 0
      %p197 = por %p195, %p196
      %p198 = scmp.ne.s32.totalorder %s190, %s192
      %p199 = scmp.eq.s32.totalorder %s35, 1
      %p200 = por %p198, %p199
      %p201 = scmp.ne.s32.totalorder %s192, %s193
      %p202 = scmp.eq.s32.totalorder %s35, 0
      %p203 = por %p201, %p202
      %p204 = scmp.ne.s32.totalorder %s192, %s193
      %p205 = scmp.eq.s32.totalorder %s36, 1
      %p206 = por %p204, %p205
      %p208 = scmp.ne.s32.totalorder %s193, %s207
      %p209 = scmp.eq.s32.totalorder %s36, 0
      %p210 = por %p208, %p209
      %s212 = sadd.s32 %s211, 1
      %p215 = scmp.eq.s32.totalorder %s30, 1
      %p216 = scmp.ne.s32.totalorder %s211, %s213
      %p217 = scmp.eq.s32.totalorder %s30, 0
      %p218 = por %p216, %p217
      %p219 = scmp.ne.s32.totalorder %s211, %s213
      %p220 = scmp.eq.s32.totalorder %s35, 1
      %p221 = por %p219, %p220
      %p222 = scmp.ne.s32.totalorder %s213, %s214
      %p223 = scmp.eq.s32.totalorder %s35, 0
      %p224 = por %p222, %p223
      %p225 = scmp.ne.s32.totalorder %s213, %s214
      %p226 = scmp.eq.s32.totalorder %s36, 1
      %p227 = por %p225, %p226
      %p229 = scmp.ne.s32.totalorder %s214, %s228
      %p230 = scmp.eq.s32.totalorder %s36, 0
      %p231 = por %p229, %p230
      %s233 = sadd.s32 %s232, 1
      %p236 = scmp.eq.s32.totalorder %s30, 1
      %p237 = scmp.ne.s32.totalorder %s232, %s234
      %p238 = scmp.eq.s32.totalorder %s30, 0
      %p239 = por %p237, %p238
      %p240 = scmp.ne.s32.totalorder %s232, %s234
      %p241 = scmp.eq.s32.totalorder %s35, 1
      %p242 = por %p240, %p241
      %p243 = scmp.ne.s32.totalorder %s234, %s235
      %p244 = scmp.eq.s32.totalorder %s35, 0
      %p245 = por %p243, %p244
      %p246 = scmp.ne.s32.totalorder %s234, %s235
      %p247 = scmp.eq.s32.totalorder %s36, 1
      %p248 = por %p246, %p247
      %p250 = scmp.ne.s32.totalorder %s235, %s249
      %p251 = scmp.eq.s32.totalorder %s36, 0
      %p252 = por %p250, %p251
      %s254 = sadd.s32 %s253, 1
      %p257 = scmp.eq.s32.totalorder %s30, 1
      %p258 = scmp.ne.s32.totalorder %s253, %s255
      %p259 = scmp.eq.s32.totalorder %s30, 0
      %p260 = por %p258, %p259
      %p261 = scmp.ne.s32.totalorder %s253, %s255
      %p262 = scmp.eq.s32.totalorder %s35, 1
      %p263 = por %p261, %p262
      %p264 = scmp.ne.s32.totalorder %s255, %s256
      %p265 = scmp.eq.s32.totalorder %s35, 0
      %p266 = por %p264, %p265
      %p267 = scmp.ne.s32.totalorder %s255, %s256
      %p268 = scmp.eq.s32.totalorder %s36, 1
      %p269 = por %p267, %p268
      %p271 = scmp.ne.s32.totalorder %s256, %s270
      %p272 = scmp.eq.s32.totalorder %s36, 0
      %p273 = por %p271, %p272
      %s275 = sadd.s32 %s274, 1
      %p278 = scmp.eq.s32.totalorder %s30, 1
      %p279 = scmp.ne.s32.totalorder %s274, %s276
      %p280 = scmp.eq.s32.totalorder %s30, 0
      %p281 = por %p279, %p280
      %p282 = scmp.ne.s32.totalorder %s274, %s276
      %p283 = scmp.eq.s32.totalorder %s35, 1
      %p284 = por %p282, %p283
      %p285 = scmp.ne.s32.totalorder %s276, %s277
      %p286 = scmp.eq.s32.totalorder %s35, 0
      %p287 = por %p285, %p286
      %p288 = scmp.ne.s32.totalorder %s276, %s277
      %p289 = scmp.eq.s32.totalorder %s36, 1
      %p290 = por %p288, %p289
      %p292 = scmp.ne.s32.totalorder %s277, %s291
      %p293 = scmp.eq.s32.totalorder %s36, 0
      %p294 = por %p292, %p293
      %s296 = sadd.s32 %s295, 1
      %p299 = scmp.eq.s32.totalorder %s30, 1
      %p300 = scmp.ne.s32.totalorder %s295, %s297
      %p301 = scmp.eq.s32.totalorder %s30, 0
      %p302 = por %p300, %p301
      %p303 = scmp.ne.s32.totalorder %s295, %s297
      %p304 = scmp.eq.s32.totalorder %s35, 1
      %p305 = por %p303, %p304
      %p306 = scmp.ne.s32.totalorder %s297, %s298
      %p307 = scmp.eq.s32.totalorder %s35, 0
      %p308 = por %p306, %p307
      %p309 = scmp.ne.s32.totalorder %s297, %s298
      %p310 = scmp.eq.s32.totalorder %s36, 1
      %p311 = por %p309, %p310
      %p313 = scmp.ne.s32.totalorder %s298, %s312
      %p314 = scmp.eq.s32.totalorder %s36, 0
      %p315 = por %p313, %p314
      %s317 = sadd.s32 %s316, 1
      %p320 = scmp.eq.s32.totalorder %s30, 1
      %p321 = scmp.ne.s32.totalorder %s316, %s318
      %p322 = scmp.eq.s32.totalorder %s30, 0
      %p323 = por %p321, %p322
      %p324 = scmp.ne.s32.totalorder %s316, %s318
      %p325 = scmp.eq.s32.totalorder %s35, 1
      %p326 = por %p324, %p325
      %p327 = scmp.ne.s32.totalorder %s318, %s319
      %p328 = scmp.eq.s32.totalorder %s35, 0
      %p329 = por %p327, %p328
      %p330 = scmp.ne.s32.totalorder %s318, %s319
      %p331 = scmp.eq.s32.totalorder %s36, 1
      %p332 = por %p330, %p331
      %p334 = scmp.ne.s32.totalorder %s319, %s333
      %p335 = scmp.eq.s32.totalorder %s36, 0
      %p336 = por %p334, %p335
      %s337 = ssub.s32 %s30, %s37
      %p338 = scmp.eq.s32.totalorder %s337, 0
      %s340 = sadd.s32 %s339, 1
      %s341 = scalar_select %p338, %s339, %s340
      %p344 = pneg %p338
      %p345 = scmp.eq.s32.totalorder %s30, 1
      %p346 = por %p344, %p345
      %p347 = scmp.ne.s32.totalorder %s339, %s342
      %p348 = scmp.eq.s32.totalorder %s30, 0
      %p349 = por %p347, %p348
      %p350 = scmp.ne.s32.totalorder %s339, %s342
      %p351 = scmp.eq.s32.totalorder %s35, 1
      %p352 = por %p350, %p351
      %p353 = scmp.ne.s32.totalorder %s342, %s343
      %p354 = scmp.eq.s32.totalorder %s35, 0
      %p355 = por %p353, %p354
      %p356 = scmp.ne.s32.totalorder %s342, %s343
      %p357 = scmp.eq.s32.totalorder %s36, 1
      %p358 = por %p356, %p357
      %p360 = scmp.ne.s32.totalorder %s343, %s359
      %p361 = scmp.eq.s32.totalorder %s36, 0
      %p362 = por %p360, %p361
      %p363 = scmp.le.s32.totalorder 1, %s30
      %p364 = scmp.lt.s32.totalorder %s30, 3
      %p365 = pnand %p363, %p364
      %p366 = pneg %p365
      // Predicated region
      $region9: #{tpu_custom_call.1} parent=5 // pred_check
        _
      $region10: #{tpu_custom_call.1} parent=5 // pred_check_branch
        %368 = sbr.rel (%p365) target = $region12
      $region11: #{tpu_custom_call.1} parent=5 // pred_region
        %s369 = ssub.s32 %s30, 1
        // Predicated region
        $region13: #{tpu_custom_call.1} parent=11 // pred_check
          %p370 = pneg %p77
        $region14: #{tpu_custom_call.1} parent=11 // pred_check_branch
          %372 = sbr.rel (%p370) target = $region16
        $region15: #{tpu_custom_call.1} parent=11 // pred_region
          _
        $region16: #{tpu_custom_call.1} parent=11 // pred_fallthru
          _
        // Predicated region
        $region17: #{tpu_custom_call.1} parent=11 // pred_check
          %p373 = pneg %p98
        $region18: #{tpu_custom_call.1} parent=11 // pred_check_branch
          %375 = sbr.rel (%p373) target = $region20
        $region19: #{tpu_custom_call.1} parent=11 // pred_region
          _
        $region20: #{tpu_custom_call.1} parent=11 // pred_fallthru
          _
        // Predicated region
        $region21: #{tpu_custom_call.1} parent=11 // pred_check
          %p376 = pneg %p119
        $region22: #{tpu_custom_call.1} parent=11 // pred_check_branch
          %378 = sbr.rel (%p376) target = $region24
        $region23: #{tpu_custom_call.1} parent=11 // pred_region
          _
        $region24: #{tpu_custom_call.1} parent=11 // pred_fallthru
          _
        // Predicated region
        $region25: #{tpu_custom_call.1} parent=11 // pred_check
          %p379 = pneg %p140
        $region26: #{tpu_custom_call.1} parent=11 // pred_check_branch
          %381 = sbr.rel (%p379) target = $region28
        $region27: #{tpu_custom_call.1} parent=11 // pred_region
          _
        $region28: #{tpu_custom_call.1} parent=11 // pred_fallthru
          _
        // Predicated region
        $region29: #{tpu_custom_call.1} parent=11 // pred_check
          %p382 = pneg %p161
        $region30: #{tpu_custom_call.1} parent=11 // pred_check_branch
          %384 = sbr.rel (%p382) target = $region32
        $region31: #{tpu_custom_call.1} parent=11 // pred_region
          _
        $region32: #{tpu_custom_call.1} parent=11 // pred_fallthru
          _
        // Predicated region
        $region33: #{tpu_custom_call.1} parent=11 // pred_check
          %p385 = pneg %p182
        $region34: #{tpu_custom_call.1} parent=11 // pred_check_branch
          %387 = sbr.rel (%p385) target = $region36
        $region35: #{tpu_custom_call.1} parent=11 // pred_region
          _
        $region36: #{tpu_custom_call.1} parent=11 // pred_fallthru
          _
        // Predicated region
        $region37: #{tpu_custom_call.1} parent=11 // pred_check
          %p388 = pneg %p203
        $region38: #{tpu_custom_call.1} parent=11 // pred_check_branch
          %390 = sbr.rel (%p388) target = $region40
        $region39: #{tpu_custom_call.1} parent=11 // pred_region
          _
        $region40: #{tpu_custom_call.1} parent=11 // pred_fallthru
          _
        // Predicated region
        $region41: #{tpu_custom_call.1} parent=11 // pred_check
          %p391 = pneg %p224
        $region42: #{tpu_custom_call.1} parent=11 // pred_check_branch
          %393 = sbr.rel (%p391) target = $region44
        $region43: #{tpu_custom_call.1} parent=11 // pred_region
          _
        $region44: #{tpu_custom_call.1} parent=11 // pred_fallthru
          _
        // Predicated region
        $region45: #{tpu_custom_call.1} parent=11 // pred_check
          %p394 = pneg %p245
        $region46: #{tpu_custom_call.1} parent=11 // pred_check_branch
          %396 = sbr.rel (%p394) target = $region48
        $region47: #{tpu_custom_call.1} parent=11 // pred_region
          _
        $region48: #{tpu_custom_call.1} parent=11 // pred_fallthru
          _
        // Predicated region
        $region49: #{tpu_custom_call.1} parent=11 // pred_check
          %p397 = pneg %p266
        $region50: #{tpu_custom_call.1} parent=11 // pred_check_branch
          %399 = sbr.rel (%p397) target = $region52
        $region51: #{tpu_custom_call.1} parent=11 // pred_region
          _
        $region52: #{tpu_custom_call.1} parent=11 // pred_fallthru
          _
        // Predicated region
        $region53: #{tpu_custom_call.1} parent=11 // pred_check
          %p400 = pneg %p287
        $region54: #{tpu_custom_call.1} parent=11 // pred_check_branch
          %402 = sbr.rel (%p400) target = $region56
        $region55: #{tpu_custom_call.1} parent=11 // pred_region
          _
        $region56: #{tpu_custom_call.1} parent=11 // pred_fallthru
          _
        // Predicated region
        $region57: #{tpu_custom_call.1} parent=11 // pred_check
          %p403 = pneg %p308
        $region58: #{tpu_custom_call.1} parent=11 // pred_check_branch
          %405 = sbr.rel (%p403) target = $region60
        $region59: #{tpu_custom_call.1} parent=11 // pred_region
          _
        $region60: #{tpu_custom_call.1} parent=11 // pred_fallthru
          _
        // Predicated region
        $region61: #{tpu_custom_call.1} parent=11 // pred_check
          %p406 = pneg %p329
        $region62: #{tpu_custom_call.1} parent=11 // pred_check_branch
          %408 = sbr.rel (%p406) target = $region64
        $region63: #{tpu_custom_call.1} parent=11 // pred_region
          _
        $region64: #{tpu_custom_call.1} parent=11 // pred_fallthru
          _
      $region12: #{tpu_custom_call.1} parent=5 // pred_fallthru
        _
      %p409 = scmp.lt.s32.totalorder %s30, 2
      // Predicated region
      $region65: #{tpu_custom_call.1} parent=5 // pred_check
        %p410 = pneg %p409
      $region66: #{tpu_custom_call.1} parent=5 // pred_check_branch
        %412 = sbr.rel (%p410) target = $region68
      $region67: #{tpu_custom_call.1} parent=5 // pred_region
        // Predicated region
        $region69: #{tpu_custom_call.1} parent=67 // pred_check
          %p413 = pneg %p50
        $region70: #{tpu_custom_call.1} parent=67 // pred_check_branch
          %415 = sbr.rel (%p413) target = $region72
        $region71: #{tpu_custom_call.1} parent=67 // pred_region
          %p416 = scmp.lt.s32.totalorder %s30, 1
          %s417 = scalar_select %p416, %s30, 1
          %s418 = smul.addr %s417, 4
          %s419 = smul.addr %s418, 8
          %s420 = scalar_lea.vmem %s1, %s419
        $region72: #{tpu_custom_call.1} parent=67 // pred_fallthru
          _
      $region68: #{tpu_custom_call.1} parent=5 // pred_fallthru
        _
      %p421 = scmp.le.s32.totalorder 1, %s30
      %p422 = scmp.lt.s32.totalorder %s30, 3
      %p423 = pnand %p421, %p422
      %p424 = pneg %p423
      // Predicated region
      $region73: #{tpu_custom_call.1} parent=5 // pred_check
        _
      $region74: #{tpu_custom_call.1} parent=5 // pred_check_branch
        %426 = sbr.rel (%p423) target = $region76
      $region75: #{tpu_custom_call.1} parent=5 // pred_region
        %s427 = ssub.s32 %s30, 1
        %p428 = scmp.lt.s32.totalorder %s35, 1
        %s429 = scalar_select %p428, %s35, 1
        %s430 = smul.addr %s429, 4
        %s431 = smul.addr %s430, 8
        %s432 = scalar_lea.vmem %s1, %s431
        %p433 = pneg %p56
        %p434 = pneg %p53
        %p435 = pneg %p77
        %p436 = pneg %p74
        %p437 = pneg %p98
        %p438 = pneg %p95
        %p439 = pneg %p119
        %p440 = pneg %p116
        %p441 = pneg %p140
        %p442 = pneg %p137
        %p443 = pneg %p161
        %p444 = pneg %p158
        %p445 = pneg %p182
        %p446 = pneg %p179
        %p447 = pneg %p203
        %p448 = pneg %p200
        %p449 = pneg %p224
        %p450 = pneg %p221
        %p451 = pneg %p245
        %p452 = pneg %p242
        %p453 = pneg %p266
        %p454 = pneg %p263
        %p455 = pneg %p287
        %p456 = pneg %p284
        %p457 = pneg %p308
        %p458 = pneg %p305
        %p459 = pneg %p329
        %p460 = pneg %p326
        %p461 = pneg %p355
        %p462 = pneg %p352
        %s463 = sand.u32 %s342, 1
        %s464 = scalar_lea.sflag [#allocation6], %s463
        %s465 = sand.u32 %s342, 1
        %s466 = smul.addr %s465, 32
        %s467 = scalar_lea.vmem [#allocation5], %s466
        %p468 = scmp.lt.s32.totalorder %s35, 1
        %s469 = scalar_select %p468, %s35, 1
        %s470 = smul.addr %s469, 4
        %s471 = smul.addr %s470, 8
        %s472 = scalar_lea.vmem %s1, %s471
        %v473 = vld [vmem:[%s472] sm:$0xff]
        %v474 = vld [vmem:[%s472 + $0x8] sm:$0xff]
        %v475 = vld [vmem:[%s472 + $0x10] sm:$0xff]
        %v476 = vld [vmem:[%s472 + $0x18] sm:$0xff]
        %477 = vxpose.xlu0.b32.start [1/16] %v473, 128
        %478 = vxpose.xlu0.b32.cont [2/16] %v475, 128
        %479 = vxpose.xlu0.b32.cont [3/16] 0.0, 128
        %480 = vxpose.xlu0.b32.cont [4/16] 0.0, 128
        %481 = vxpose.xlu0.b32.cont [5/16] 0.0, 128
        %482 = vxpose.xlu0.b32.cont [6/16] 0.0, 128
        %483 = vxpose.xlu0.b32.cont [7/16] 0.0, 128
        %484 = vxpose.xlu0.b32.cont [8/16] 0.0, 128
        %485 = vxpose.xlu0.b32.cont [9/16] 0.0, 128
        %486 = vxpose.xlu0.b32.cont [10/16] 0.0, 128
        %487 = vxpose.xlu0.b32.cont [11/16] 0.0, 128
        %488 = vxpose.xlu0.b32.cont [12/16] 0.0, 128
        %489 = vxpose.xlu0.b32.cont [13/16] 0.0, 128
        %490 = vxpose.xlu0.b32.cont [14/16] 0.0, 128
        %491 = vxpose.xlu0.b32.cont [15/16] 0.0, 128
        %492 = vxpose.xlu0.b32.end [16/16] 0.0, 128
        %v493 = vpop.trf.xlu0
        %v494 = vpop.trf.xlu0
        %v495 = vpop.trf.xlu0
        %v496 = vpop.trf.xlu0
        %v497 = vpop.trf.xlu0
        %v498 = vpop.trf.xlu0
        %v499 = vpop.trf.xlu0
        %v500 = vpop.trf.xlu0
        %v501 = vpop.trf.xlu0
        %v502 = vpop.trf.xlu0
        %v503 = vpop.trf.xlu0
        %v504 = vpop.trf.xlu0
        %v505 = vpop.trf.xlu0
        %v506 = vpop.trf.xlu0
        %v507 = vpop.trf.xlu0
        %v508 = vpop.trf.xlu0
        %509 = vxpose.xlu0.b32.start [1/16] %v474, 128
        %510 = vxpose.xlu0.b32.cont [2/16] %v476, 128
        %511 = vxpose.xlu0.b32.cont [3/16] 0.0, 128
        %512 = vxpose.xlu0.b32.cont [4/16] 0.0, 128
        %513 = vxpose.xlu0.b32.cont [5/16] 0.0, 128
        %514 = vxpose.xlu0.b32.cont [6/16] 0.0, 128
        %515 = vxpose.xlu0.b32.cont [7/16] 0.0, 128
        %516 = vxpose.xlu0.b32.cont [8/16] 0.0, 128
        %517 = vxpose.xlu0.b32.cont [9/16] 0.0, 128
        %518 = vxpose.xlu0.b32.cont [10/16] 0.0, 128
        %519 = vxpose.xlu0.b32.cont [11/16] 0.0, 128
        %520 = vxpose.xlu0.b32.cont [12/16] 0.0, 128
        %521 = vxpose.xlu0.b32.cont [13/16] 0.0, 128
        %522 = vxpose.xlu0.b32.cont [14/16] 0.0, 128
        %523 = vxpose.xlu0.b32.cont [15/16] 0.0, 128
        %524 = vxpose.xlu0.b32.end [16/16] 0.0, 128
        %v525 = vpop.trf.xlu0
        %v526 = vpop.trf.xlu0
        %v527 = vpop.trf.xlu0
        %v528 = vpop.trf.xlu0
        %v529 = vpop.trf.xlu0
        %v530 = vpop.trf.xlu0
        %v531 = vpop.trf.xlu0
        %v532 = vpop.trf.xlu0
        %v533 = vpop.trf.xlu0
        %v534 = vpop.trf.xlu0
        %v535 = vpop.trf.xlu0
        %v536 = vpop.trf.xlu0
        %v537 = vpop.trf.xlu0
        %v538 = vpop.trf.xlu0
        %v539 = vpop.trf.xlu0
        %v540 = vpop.trf.xlu0
        %v541 = vld [vmem:[%s2] sm:$0xff]
        %v542 = vld [vmem:[%s2 + $0x8] sm:$0xff]
        %vm543 = vcmask 130048
        %v545 = vsel %vm543, %v493, 0
        %v548 = vsel %vm543, %v494, 0
        %v551 = vsel %vm543, %v495, 0
        %v554 = vsel %vm543, %v496, 0
        %v557 = vsel %vm543, %v497, 0
        %v560 = vsel %vm543, %v498, 0
        %v563 = vsel %vm543, %v499, 0
        %v566 = vsel %vm543, %v500, 0
        %v569 = vsel %vm543, %v501, 0
        %v572 = vsel %vm543, %v502, 0
        %v575 = vsel %vm543, %v503, 0
        %v578 = vsel %vm543, %v504, 0
        %v581 = vsel %vm543, %v505, 0
        %v584 = vsel %vm543, %v506, 0
        %v587 = vsel %vm543, %v507, 0
        %v590 = vsel %vm543, %v508, 0
        %v593 = vsel %vm543, %v525, 0
        %v596 = vsel %vm543, %v526, 0
        %v599 = vsel %vm543, %v527, 0
        %v602 = vsel %vm543, %v528, 0
        %v605 = vsel %vm543, %v529, 0
        %v608 = vsel %vm543, %v530, 0
        %v611 = vsel %vm543, %v531, 0
        %v614 = vsel %vm543, %v532, 0
        %v617 = vsel %vm543, %v533, 0
        %v620 = vsel %vm543, %v534, 0
        %v623 = vsel %vm543, %v535, 0
        %v626 = vsel %vm543, %v536, 0
        %v629 = vsel %vm543, %v537, 0
        %v632 = vsel %vm543, %v538, 0
        %v635 = vsel %vm543, %v539, 0
        %v638 = vsel %vm543, %v540, 0
        %640 = vmatprep.subr.mxu0 0.0
        %641 = vmatpush1.msra.mxu0 %v541
        %642 = vmatprep.subr.mxu0 0.0
        %643 = vmatpush1.msra.mxu0 %v542
        %644 = vmatprep.subr.mxu0 0.0
        %645 = vmatpush1.msra.mxu0 0.0
        %646 = vmatprep.subr.mxu0 0.0
        %647 = vmatpush1.msra.mxu0 0.0
        %648 = vmatprep.subr.mxu0 0.0
        %649 = vmatpush1.msra.mxu0 0.0
        %650 = vmatprep.subr.mxu0 0.0
        %651 = vmatpush1.msra.mxu0 0.0
        %652 = vmatprep.subr.mxu0 0.0
        %653 = vmatpush1.msra.mxu0 0.0
        %654 = vmatprep.subr.mxu0 0.0
        %655 = vmatpush1.msra.mxu0 0.0
        %656 = vmatprep.subr.mxu0 0.0
        %657 = vmatpush1.msra.mxu0 0.0
        %658 = vmatprep.subr.mxu0 0.0
        %659 = vmatpush1.msra.mxu0 0.0
        %660 = vmatprep.subr.mxu0 0.0
        %661 = vmatpush1.msra.mxu0 0.0
        %662 = vmatprep.subr.mxu0 0.0
        %663 = vmatpush1.msra.mxu0 0.0
        %664 = vmatprep.subr.mxu0 0.0
        %665 = vmatpush1.msra.mxu0 0.0
        %666 = vmatprep.subr.mxu0 0.0
        %667 = vmatpush1.msra.mxu0 0.0
        %668 = vmatprep.subr.mxu0 0.0
        %669 = vmatpush1.msra.mxu0 0.0
        %670 = vmatprep.subr.mxu0 0.0
        %671 = vmatpush1.msra.mxu0 0.0
        %672 = vmatprep.subr.mxu0 0.0
        %673 = vmatpush1.msra.mxu0 0.0
        %674 = vmatprep.subr.mxu0 0.0
        %675 = vmatpush1.msra.mxu0 0.0
        %676 = vmatprep.subr.mxu0 0.0
        %677 = vmatpush1.msra.mxu0 0.0
        %678 = vmatprep.subr.mxu0 0.0
        %679 = vmatpush1.msra.mxu0 0.0
        %680 = vmatprep.subr.mxu0 0.0
        %681 = vmatpush1.msra.mxu0 0.0
        %682 = vmatprep.subr.mxu0 0.0
        %683 = vmatpush1.msra.mxu0 0.0
        %684 = vmatprep.subr.mxu0 0.0
        %685 = vmatpush1.msra.mxu0 0.0
        %686 = vmatprep.subr.mxu0 0.0
        %687 = vmatpush1.msra.mxu0 0.0
        %688 = vmatprep.subr.mxu0 0.0
        %689 = vmatpush1.msra.mxu0 0.0
        %690 = vmatprep.subr.mxu0 0.0
        %691 = vmatpush1.msra.mxu0 0.0
        %692 = vmatprep.subr.mxu0 0.0
        %693 = vmatpush1.msra.mxu0 0.0
        %694 = vmatprep.subr.mxu0 0.0
        %695 = vmatpush1.msra.mxu0 0.0
        %696 = vmatprep.subr.mxu0 0.0
        %697 = vmatpush1.msra.mxu0 0.0
        %698 = vmatprep.subr.mxu0 0.0
        %699 = vmatpush1.msra.mxu0 0.0
        %700 = vmatprep.subr.mxu0 0.0
        %701 = vmatpush1.msra.mxu0 0.0
        %702 = vmatprep.subr.mxu0 0.0
        %703 = vmatpush1.msra.mxu0 0.0
        %704 = vmatprep.mubr.f32.mxu0 0.0
        %705 = vmatmul.mubr.f32.gmra.mrb[0].mxu0 %v545
        %v706 = vpop.f32.mrb[0].mxu0
        %v707 = vadd.f32 0.0, %v706
        %v708 = vpop.f32.mrb[0].mxu0
        %709 = vmatprep.mubr.f32.mxu0 0.0
        %710 = vmatmul.mubr.f32.gmra.mrb[0].mxu0 %v548
        %v711 = vpop.f32.mrb[0].mxu0
        %v712 = vadd.f32 0.0, %v711
        %v713 = vpop.f32.mrb[0].mxu0
        %714 = vmatprep.mubr.f32.mxu0 0.0
        %715 = vmatmul.mubr.f32.gmra.mrb[0].mxu0 %v551
        %v716 = vpop.f32.mrb[0].mxu0
        %v717 = vadd.f32 0.0, %v716
        %v718 = vpop.f32.mrb[0].mxu0
        %719 = vmatprep.mubr.f32.mxu0 0.0
        %720 = vmatmul.mubr.f32.gmra.mrb[0].mxu0 %v554
        %v721 = vpop.f32.mrb[0].mxu0
        %v722 = vadd.f32 0.0, %v721
        %v723 = vpop.f32.mrb[0].mxu0
        %724 = vmatprep.mubr.f32.mxu0 0.0
        %725 = vmatmul.mubr.f32.gmra.mrb[0].mxu0 %v557
        %v726 = vpop.f32.mrb[0].mxu0
        %v727 = vadd.f32 0.0, %v726
        %v728 = vpop.f32.mrb[0].mxu0
        %729 = vmatprep.mubr.f32.mxu0 0.0
        %730 = vmatmul.mubr.f32.gmra.mrb[0].mxu0 %v560
        %v731 = vpop.f32.mrb[0].mxu0
        %v732 = vadd.f32 0.0, %v731
        %v733 = vpop.f32.mrb[0].mxu0
        %734 = vmatprep.mubr.f32.mxu0 0.0
        %735 = vmatmul.mubr.f32.gmra.mrb[0].mxu0 %v563
        %v736 = vpop.f32.mrb[0].mxu0
        %v737 = vadd.f32 0.0, %v736
        %v738 = vpop.f32.mrb[0].mxu0
        %739 = vmatprep.mubr.f32.mxu0 0.0
        %740 = vmatmul.mubr.f32.gmra.mrb[0].mxu0 %v566
        %v741 = vpop.f32.mrb[0].mxu0
        %v742 = vadd.f32 0.0, %v741
        %v743 = vpop.f32.mrb[0].mxu0
        %744 = vmatprep.mubr.f32.mxu0 0.0
        %745 = vmatmul.mubr.f32.gmra.mrb[0].mxu0 %v569
        %v746 = vpop.f32.mrb[0].mxu0
        %v747 = vadd.f32 0.0, %v746
        %v748 = vpop.f32.mrb[0].mxu0
        %749 = vmatprep.mubr.f32.mxu0 0.0
        %750 = vmatmul.mubr.f32.gmra.mrb[0].mxu0 %v572
        %v751 = vpop.f32.mrb[0].mxu0
        %v752 = vadd.f32 0.0, %v751
        %v753 = vpop.f32.mrb[0].mxu0
        %754 = vmatprep.mubr.f32.mxu0 0.0
        %755 = vmatmul.mubr.f32.gmra.mrb[0].mxu0 %v575
        %v756 = vpop.f32.mrb[0].mxu0
        %v757 = vadd.f32 0.0, %v756
        %v758 = vpop.f32.mrb[0].mxu0
        %759 = vmatprep.mubr.f32.mxu0 0.0
        %760 = vmatmul.mubr.f32.gmra.mrb[0].mxu0 %v578
        %v761 = vpop.f32.mrb[0].mxu0
        %v762 = vadd.f32 0.0, %v761
        %v763 = vpop.f32.mrb[0].mxu0
        %764 = vmatprep.mubr.f32.mxu0 0.0
        %765 = vmatmul.mubr.f32.gmra.mrb[0].mxu0 %v581
        %v766 = vpop.f32.mrb[0].mxu0
        %v767 = vadd.f32 0.0, %v766
        %v768 = vpop.f32.mrb[0].mxu0
        %769 = vmatprep.mubr.f32.mxu0 0.0
        %770 = vmatmul.mubr.f32.gmra.mrb[0].mxu0 %v584
        %v771 = vpop.f32.mrb[0].mxu0
        %v772 = vadd.f32 0.0, %v771
        %v773 = vpop.f32.mrb[0].mxu0
        %774 = vmatprep.mubr.f32.mxu0 0.0
        %775 = vmatmul.mubr.f32.gmra.mrb[0].mxu0 %v587
        %v776 = vpop.f32.mrb[0].mxu0
        %v777 = vadd.f32 0.0, %v776
        %v778 = vpop.f32.mrb[0].mxu0
        %779 = vmatprep.mubr.f32.mxu0 0.0
        %780 = vmatmul.mubr.f32.gmra.mrb[0].mxu0 %v590
        %v781 = vpop.f32.mrb[0].mxu0
        %v782 = vadd.f32 0.0, %v781
        %v783 = vpop.f32.mrb[0].mxu0
        %784 = vmatprep.mubr.f32.mxu0 0.0
        %785 = vmatmul.mubr.f32.gmra.mrb[0].mxu0 %v593
        %v786 = vpop.f32.mrb[0].mxu0
        %v787 = vadd.f32 0.0, %v786
        %v788 = vpop.f32.mrb[0].mxu0
        %789 = vmatprep.mubr.f32.mxu0 0.0
        %790 = vmatmul.mubr.f32.gmra.mrb[0].mxu0 %v596
        %v791 = vpop.f32.mrb[0].mxu0
        %v792 = vadd.f32 0.0, %v791
        %v793 = vpop.f32.mrb[0].mxu0
        %794 = vmatprep.mubr.f32.mxu0 0.0
        %795 = vmatmul.mubr.f32.gmra.mrb[0].mxu0 %v599
        %v796 = vpop.f32.mrb[0].mxu0
        %v797 = vadd.f32 0.0, %v796
        %v798 = vpop.f32.mrb[0].mxu0
        %799 = vmatprep.mubr.f32.mxu0 0.0
        %800 = vmatmul.mubr.f32.gmra.mrb[0].mxu0 %v602
        %v801 = vpop.f32.mrb[0].mxu0
        %v802 = vadd.f32 0.0, %v801
        %v803 = vpop.f32.mrb[0].mxu0
        %804 = vmatprep.mubr.f32.mxu0 0.0
        %805 = vmatmul.mubr.f32.gmra.mrb[0].mxu0 %v605
        %v806 = vpop.f32.mrb[0].mxu0
        %v807 = vadd.f32 0.0, %v806
        %v808 = vpop.f32.mrb[0].mxu0
        %809 = vmatprep.mubr.f32.mxu0 0.0
        %810 = vmatmul.mubr.f32.gmra.mrb[0].mxu0 %v608
        %v811 = vpop.f32.mrb[0].mxu0
        %v812 = vadd.f32 0.0, %v811
        %v813 = vpop.f32.mrb[0].mxu0
        %814 = vmatprep.mubr.f32.mxu0 0.0
        %815 = vmatmul.mubr.f32.gmra.mrb[0].mxu0 %v611
        %v816 = vpop.f32.mrb[0].mxu0
        %v817 = vadd.f32 0.0, %v816
        %v818 = vpop.f32.mrb[0].mxu0
        %819 = vmatprep.mubr.f32.mxu0 0.0
        %820 = vmatmul.mubr.f32.gmra.mrb[0].mxu0 %v614
        %v821 = vpop.f32.mrb[0].mxu0
        %v822 = vadd.f32 0.0, %v821
        %v823 = vpop.f32.mrb[0].mxu0
        %824 = vmatprep.mubr.f32.mxu0 0.0
        %825 = vmatmul.mubr.f32.gmra.mrb[0].mxu0 %v617
        %v826 = vpop.f32.mrb[0].mxu0
        %v827 = vadd.f32 0.0, %v826
        %v828 = vpop.f32.mrb[0].mxu0
        %829 = vmatprep.mubr.f32.mxu0 0.0
        %830 = vmatmul.mubr.f32.gmra.mrb[0].mxu0 %v620
        %v831 = vpop.f32.mrb[0].mxu0
        %v832 = vadd.f32 0.0, %v831
        %v833 = vpop.f32.mrb[0].mxu0
        %834 = vmatprep.mubr.f32.mxu0 0.0
        %835 = vmatmul.mubr.f32.gmra.mrb[0].mxu0 %v623
        %v836 = vpop.f32.mrb[0].mxu0
        %v837 = vadd.f32 0.0, %v836
        %v838 = vpop.f32.mrb[0].mxu0
        %839 = vmatprep.mubr.f32.mxu0 0.0
        %840 = vmatmul.mubr.f32.gmra.mrb[0].mxu0 %v626
        %v841 = vpop.f32.mrb[0].mxu0
        %v842 = vadd.f32 0.0, %v841
        %v843 = vpop.f32.mrb[0].mxu0
        %844 = vmatprep.mubr.f32.mxu0 0.0
        %845 = vmatmul.mubr.f32.gmra.mrb[0].mxu0 %v629
        %v846 = vpop.f32.mrb[0].mxu0
        %v847 = vadd.f32 0.0, %v846
        %v848 = vpop.f32.mrb[0].mxu0
        %849 = vmatprep.mubr.f32.mxu0 0.0
        %850 = vmatmul.mubr.f32.gmra.mrb[0].mxu0 %v632
        %v851 = vpop.f32.mrb[0].mxu0
        %v852 = vadd.f32 0.0, %v851
        %v853 = vpop.f32.mrb[0].mxu0
        %854 = vmatprep.mubr.f32.mxu0 0.0
        %855 = vmatmul.mubr.f32.gmra.mrb[0].mxu0 %v635
        %v856 = vpop.f32.mrb[0].mxu0
        %v857 = vadd.f32 0.0, %v856
        %v858 = vpop.f32.mrb[0].mxu0
        %859 = vmatprep.mubr.f32.mxu0 0.0
        %860 = vmatmul.mubr.f32.gmra.mrb[0].mxu0 %v638
        %v861 = vpop.f32.mrb[0].mxu0
        %v862 = vadd.f32 0.0, %v861
        %v863 = vpop.f32.mrb[0].mxu0
        %864 = vdwg.mxu0
        %v865 = vld [vmem:[%s3] sm:$0x1]
        %v867 = vlaneseq
        %v868 = vshrl.u32 %v867, 7
        %v869 = vsub.s32 0, %v868
        %v870 = vrot.slane %v865, %v869
        %v872 = vmul.f32 %v707, %v870
        %v873 = vmul.f32 %v712, %v870
        %v874 = vmul.f32 %v717, %v870
        %v875 = vmul.f32 %v722, %v870
        %v876 = vmul.f32 %v727, %v870
        %v877 = vmul.f32 %v732, %v870
        %v878 = vmul.f32 %v737, %v870
        %v879 = vmul.f32 %v742, %v870
        %v880 = vmul.f32 %v747, %v870
        %v881 = vmul.f32 %v752, %v870
        %v882 = vmul.f32 %v757, %v870
        %v883 = vmul.f32 %v762, %v870
        %v884 = vmul.f32 %v767, %v870
        %v885 = vmul.f32 %v772, %v870
        %v886 = vmul.f32 %v777, %v870
        %v887 = vmul.f32 %v782, %v870
        %v888 = vmul.f32 %v787, %v870
        %v889 = vmul.f32 %v792, %v870
        %v890 = vmul.f32 %v797, %v870
        %v891 = vmul.f32 %v802, %v870
        %v892 = vmul.f32 %v807, %v870
        %v893 = vmul.f32 %v812, %v870
        %v894 = vmul.f32 %v817, %v870
        %v895 = vmul.f32 %v822, %v870
        %v896 = vmul.f32 %v827, %v870
        %v897 = vmul.f32 %v832, %v870
        %v898 = vmul.f32 %v837, %v870
        %v899 = vmul.f32 %v842, %v870
        %v900 = vmul.f32 %v847, %v870
        %v901 = vmul.f32 %v852, %v870
        %v902 = vmul.f32 %v857, %v870
        %v903 = vmul.f32 %v862, %v870
        %v904 = vld [vmem:[%s4] sm:$0x1]
        %v906 = vlaneseq
        %v907 = vshrl.u32 %v906, 7
        %v908 = vsub.s32 0, %v907
        %v909 = vrot.slane %v904, %v908
        %v911 = vadd.f32 %v872, %v909
        %v912 = vadd.f32 %v873, %v909
        %v913 = vadd.f32 %v874, %v909
        %v914 = vadd.f32 %v875, %v909
        %v915 = vadd.f32 %v876, %v909
        %v916 = vadd.f32 %v877, %v909
        %v917 = vadd.f32 %v878, %v909
        %v918 = vadd.f32 %v879, %v909
        %v919 = vadd.f32 %v880, %v909
        %v920 = vadd.f32 %v881, %v909
        %v921 = vadd.f32 %v882, %v909
        %v922 = vadd.f32 %v883, %v909
        %v923 = vadd.f32 %v884, %v909
        %v924 = vadd.f32 %v885, %v909
        %v925 = vadd.f32 %v886, %v909
        %v926 = vadd.f32 %v887, %v909
        %v927 = vadd.f32 %v888, %v909
        %v928 = vadd.f32 %v889, %v909
        %v929 = vadd.f32 %v890, %v909
        %v930 = vadd.f32 %v891, %v909
        %v931 = vadd.f32 %v892, %v909
        %v932 = vadd.f32 %v893, %v909
        %v933 = vadd.f32 %v894, %v909
        %v934 = vadd.f32 %v895, %v909
        %v935 = vadd.f32 %v896, %v909
        %v936 = vadd.f32 %v897, %v909
        %v937 = vadd.f32 %v898, %v909
        %v938 = vadd.f32 %v899, %v909
        %v939 = vadd.f32 %v900, %v909
        %v940 = vadd.f32 %v901, %v909
        %v941 = vadd.f32 %v902, %v909
        %v942 = vadd.f32 %v903, %v909
        %v943 = vxor.u32 %v911, 2147483648
        %v944 = vxor.u32 %v912, 2147483648
        %v945 = vxor.u32 %v913, 2147483648
        %v946 = vxor.u32 %v914, 2147483648
        %v947 = vxor.u32 %v915, 2147483648
        %v948 = vxor.u32 %v916, 2147483648
        %v949 = vxor.u32 %v917, 2147483648
        %v950 = vxor.u32 %v918, 2147483648
        %v951 = vxor.u32 %v919, 2147483648
        %v952 = vxor.u32 %v920, 2147483648
        %v953 = vxor.u32 %v921, 2147483648
        %v954 = vxor.u32 %v922, 2147483648
        %v955 = vxor.u32 %v923, 2147483648
        %v956 = vxor.u32 %v924, 2147483648
        %v957 = vxor.u32 %v925, 2147483648
        %v958 = vxor.u32 %v926, 2147483648
        %v959 = vxor.u32 %v927, 2147483648
        %v960 = vxor.u32 %v928, 2147483648
        %v961 = vxor.u32 %v929, 2147483648
        %v962 = vxor.u32 %v930, 2147483648
        %v963 = vxor.u32 %v931, 2147483648
        %v964 = vxor.u32 %v932, 2147483648
        %v965 = vxor.u32 %v933, 2147483648
        %v966 = vxor.u32 %v934, 2147483648
        %v967 = vxor.u32 %v935, 2147483648
        %v968 = vxor.u32 %v936, 2147483648
        %v969 = vxor.u32 %v937, 2147483648
        %v970 = vxor.u32 %v938, 2147483648
        %v971 = vxor.u32 %v939, 2147483648
        %v972 = vxor.u32 %v940, 2147483648
        %v973 = vxor.u32 %v941, 2147483648
        %v974 = vxor.u32 %v942, 2147483648
        %v975 = vmul.f32 %v943, 1.442695
        %v976 = vpow.pop %v975
        %v977 = vmul.f32 %v944, 1.442695
        %v978 = vpow.pop %v977
        %v979 = vmul.f32 %v945, 1.442695
        %v980 = vpow.pop %v979
        %v981 = vmul.f32 %v946, 1.442695
        %v982 = vpow.pop %v981
        %v983 = vmul.f32 %v947, 1.442695
        %v984 = vpow.pop %v983
        %v985 = vmul.f32 %v948, 1.442695
        %v986 = vpow.pop %v985
        %v987 = vmul.f32 %v949, 1.442695
        %v988 = vpow.pop %v987
        %v989 = vmul.f32 %v950, 1.442695
        %v990 = vpow.pop %v989
        %v991 = vmul.f32 %v951, 1.442695
        %v992 = vpow.pop %v991
        %v993 = vmul.f32 %v952, 1.442695
        %v994 = vpow.pop %v993
        %v995 = vmul.f32 %v953, 1.442695
        %v996 = vpow.pop %v995
        %v997 = vmul.f32 %v954, 1.442695
        %v998 = vpow.pop %v997
        %v999 = vmul.f32 %v955, 1.442695
        %v1000 = vpow.pop %v999
        %v1001 = vmul.f32 %v956, 1.442695
        %v1002 = vpow.pop %v1001
        %v1003 = vmul.f32 %v957, 1.442695
        %v1004 = vpow.pop %v1003
        %v1005 = vmul.f32 %v958, 1.442695
        %v1006 = vpow.pop %v1005
        %v1007 = vmul.f32 %v959, 1.442695
        %v1008 = vpow.pop %v1007
        %v1009 = vmul.f32 %v960, 1.442695
        %v1010 = vpow.pop %v1009
        %v1011 = vmul.f32 %v961, 1.442695
        %v1012 = vpow.pop %v1011
        %v1013 = vmul.f32 %v962, 1.442695
        %v1014 = vpow.pop %v1013
        %v1015 = vmul.f32 %v963, 1.442695
        %v1016 = vpow.pop %v1015
        %v1017 = vmul.f32 %v964, 1.442695
        %v1018 = vpow.pop %v1017
        %v1019 = vmul.f32 %v965, 1.442695
        %v1020 = vpow.pop %v1019
        %v1021 = vmul.f32 %v966, 1.442695
        %v1022 = vpow.pop %v1021
        %v1023 = vmul.f32 %v967, 1.442695
        %v1024 = vpow.pop %v1023
        %v1025 = vmul.f32 %v968, 1.442695
        %v1026 = vpow.pop %v1025
        %v1027 = vmul.f32 %v969, 1.442695
        %v1028 = vpow.pop %v1027
        %v1029 = vmul.f32 %v970, 1.442695
        %v1030 = vpow.pop %v1029
        %v1031 = vmul.f32 %v971, 1.442695
        %v1032 = vpow.pop %v1031
        %v1033 = vmul.f32 %v972, 1.442695
        %v1034 = vpow.pop %v1033
        %v1035 = vmul.f32 %v973, 1.442695
        %v1036 = vpow.pop %v1035
        %v1037 = vmul.f32 %v974, 1.442695
        %v1038 = vpow.pop %v1037
        %v1039 = vadd.f32 %v976, 1.0
        %v1040 = vadd.f32 %v978, 1.0
        %v1041 = vadd.f32 %v980, 1.0
        %v1042 = vadd.f32 %v982, 1.0
        %v1043 = vadd.f32 %v984, 1.0
        %v1044 = vadd.f32 %v986, 1.0
        %v1045 = vadd.f32 %v988, 1.0
        %v1046 = vadd.f32 %v990, 1.0
        %v1047 = vadd.f32 %v992, 1.0
        %v1048 = vadd.f32 %v994, 1.0
        %v1049 = vadd.f32 %v996, 1.0
        %v1050 = vadd.f32 %v998, 1.0
        %v1051 = vadd.f32 %v1000, 1.0
        %v1052 = vadd.f32 %v1002, 1.0
        %v1053 = vadd.f32 %v1004, 1.0
        %v1054 = vadd.f32 %v1006, 1.0
        %v1055 = vadd.f32 %v1008, 1.0
        %v1056 = vadd.f32 %v1010, 1.0
        %v1057 = vadd.f32 %v1012, 1.0
        %v1058 = vadd.f32 %v1014, 1.0
        %v1059 = vadd.f32 %v1016, 1.0
        %v1060 = vadd.f32 %v1018, 1.0
        %v1061 = vadd.f32 %v1020, 1.0
        %v1062 = vadd.f32 %v1022, 1.0
        %v1063 = vadd.f32 %v1024, 1.0
        %v1064 = vadd.f32 %v1026, 1.0
        %v1065 = vadd.f32 %v1028, 1.0
        %v1066 = vadd.f32 %v1030, 1.0
        %v1067 = vadd.f32 %v1032, 1.0
        %v1068 = vadd.f32 %v1034, 1.0
        %v1069 = vadd.f32 %v1036, 1.0
        %v1070 = vadd.f32 %v1038, 1.0
        %v1071 = vrcp.pop %v1039
        %v1072 = vmul.f32 1.0, %v1071
        %v1073 = vrcp.pop %v1040
        %v1074 = vmul.f32 1.0, %v1073
        %v1075 = vrcp.pop %v1041
        %v1076 = vmul.f32 1.0, %v1075
        %v1077 = vrcp.pop %v1042
        %v1078 = vmul.f32 1.0, %v1077
        %v1079 = vrcp.pop %v1043
        %v1080 = vmul.f32 1.0, %v1079
        %v1081 = vrcp.pop %v1044
        %v1082 = vmul.f32 1.0, %v1081
        %v1083 = vrcp.pop %v1045
        %v1084 = vmul.f32 1.0, %v1083
        %v1085 = vrcp.pop %v1046
        %v1086 = vmul.f32 1.0, %v1085
        %v1087 = vrcp.pop %v1047
        %v1088 = vmul.f32 1.0, %v1087
        %v1089 = vrcp.pop %v1048
        %v1090 = vmul.f32 1.0, %v1089
        %v1091 = vrcp.pop %v1049
        %v1092 = vmul.f32 1.0, %v1091
        %v1093 = vrcp.pop %v1050
        %v1094 = vmul.f32 1.0, %v1093
        %v1095 = vrcp.pop %v1051
        %v1096 = vmul.f32 1.0, %v1095
        %v1097 = vrcp.pop %v1052
        %v1098 = vmul.f32 1.0, %v1097
        %v1099 = vrcp.pop %v1053
        %v1100 = vmul.f32 1.0, %v1099
        %v1101 = vrcp.pop %v1054
        %v1102 = vmul.f32 1.0, %v1101
        %v1103 = vrcp.pop %v1055
        %v1104 = vmul.f32 1.0, %v1103
        %v1105 = vrcp.pop %v1056
        %v1106 = vmul.f32 1.0, %v1105
        %v1107 = vrcp.pop %v1057
        %v1108 = vmul.f32 1.0, %v1107
        %v1109 = vrcp.pop %v1058
        %v1110 = vmul.f32 1.0, %v1109
        %v1111 = vrcp.pop %v1059
        %v1112 = vmul.f32 1.0, %v1111
        %v1113 = vrcp.pop %v1060
        %v1114 = vmul.f32 1.0, %v1113
        %v1115 = vrcp.pop %v1061
        %v1116 = vmul.f32 1.0, %v1115
        %v1117 = vrcp.pop %v1062
        %v1118 = vmul.f32 1.0, %v1117
        %v1119 = vrcp.pop %v1063
        %v1120 = vmul.f32 1.0, %v1119
        %v1121 = vrcp.pop %v1064
        %v1122 = vmul.f32 1.0, %v1121
        %v1123 = vrcp.pop %v1065
        %v1124 = vmul.f32 1.0, %v1123
        %v1125 = vrcp.pop %v1066
        %v1126 = vmul.f32 1.0, %v1125
        %v1127 = vrcp.pop %v1067
        %v1128 = vmul.f32 1.0, %v1127
        %v1129 = vrcp.pop %v1068
        %v1130 = vmul.f32 1.0, %v1129
        %v1131 = vrcp.pop %v1069
        %v1132 = vmul.f32 1.0, %v1131
        %v1133 = vrcp.pop %v1070
        %v1134 = vmul.f32 1.0, %v1133
        %v1135 = vmul.f32 %v911, %v1072
        %v1136 = vmul.f32 %v912, %v1074
        %v1137 = vmul.f32 %v913, %v1076
        %v1138 = vmul.f32 %v914, %v1078
        %v1139 = vmul.f32 %v915, %v1080
        %v1140 = vmul.f32 %v916, %v1082
        %v1141 = vmul.f32 %v917, %v1084
        %v1142 = vmul.f32 %v918, %v1086
        %v1143 = vmul.f32 %v919, %v1088
        %v1144 = vmul.f32 %v920, %v1090
        %v1145 = vmul.f32 %v921, %v1092
        %v1146 = vmul.f32 %v922, %v1094
        %v1147 = vmul.f32 %v923, %v1096
        %v1148 = vmul.f32 %v924, %v1098
        %v1149 = vmul.f32 %v925, %v1100
        %v1150 = vmul.f32 %v926, %v1102
        %v1151 = vmul.f32 %v927, %v1104
        %v1152 = vmul.f32 %v928, %v1106
        %v1153 = vmul.f32 %v929, %v1108
        %v1154 = vmul.f32 %v930, %v1110
        %v1155 = vmul.f32 %v931, %v1112
        %v1156 = vmul.f32 %v932, %v1114
        %v1157 = vmul.f32 %v933, %v1116
        %v1158 = vmul.f32 %v934, %v1118
        %v1159 = vmul.f32 %v935, %v1120
        %v1160 = vmul.f32 %v936, %v1122
        %v1161 = vmul.f32 %v937, %v1124
        %v1162 = vmul.f32 %v938, %v1126
        %v1163 = vmul.f32 %v939, %v1128
        %v1164 = vmul.f32 %v940, %v1130
        %v1165 = vmul.f32 %v941, %v1132
        %v1166 = vmul.f32 %v942, %v1134
        %vm1167 = vcmask 523264
        %1168 = vst.msk [vmem:[#allocation2] sm:$0xff] %vm1167, 0.0
        %1169 = vst.msk [vmem:[#allocation2 + $0x8] sm:$0xff] %vm1167, 0.0
        %vm1170 = vcmask 517120
        %1171 = vst.msk [vmem:[#allocation2 + $0x10] sm:$0x3] %vm1170, 0.0
        %1172 = vst.msk [vmem:[#allocation2 + $0x18] sm:$0xff] %vm1167, 0.0
        %1173 = vst.msk [vmem:[#allocation2 + $0x20] sm:$0xff] %vm1167, 0.0
        %1174 = vst.msk [vmem:[#allocation2 + $0x28] sm:$0x3] %vm1170, 0.0
        %1175 = vst.msk [vmem:[#allocation2 + $0x30] sm:$0xff] %vm1167, 0.0
        %1176 = vst.msk [vmem:[#allocation2 + $0x38] sm:$0xff] %vm1167, 0.0
        %1177 = vst.msk [vmem:[#allocation2 + $0x40] sm:$0x3] %vm1170, 0.0
        %1178 = vst.msk [vmem:[#allocation2 + $0x48] sm:$0xff] %vm1167, 0.0
        %1179 = vst.msk [vmem:[#allocation2 + $0x50] sm:$0xff] %vm1167, 0.0
        %1180 = vst.msk [vmem:[#allocation2 + $0x58] sm:$0x3] %vm1170, 0.0
        %1181 = vst.msk [vmem:[#allocation2 + $0x60] sm:$0xff] %vm1167, 0.0
        %1182 = vst.msk [vmem:[#allocation2 + $0x68] sm:$0xff] %vm1167, 0.0
        %1183 = vst.msk [vmem:[#allocation2 + $0x70] sm:$0x3] %vm1170, 0.0
        %1184 = vst.msk [vmem:[#allocation2 + $0x78] sm:$0xff] %vm1167, 0.0
        %1185 = vst.msk [vmem:[#allocation2 + $0x80] sm:$0xff] %vm1167, 0.0
        %1186 = vst.msk [vmem:[#allocation2 + $0x88] sm:$0x3] %vm1170, 0.0
        %1187 = vst.msk [vmem:[#allocation2 + $0x90] sm:$0xff] %vm1167, 0.0
        %1188 = vst.msk [vmem:[#allocation2 + $0x98] sm:$0xff] %vm1167, 0.0
        %1189 = vst.msk [vmem:[#allocation2 + $0xa0] sm:$0x3] %vm1170, 0.0
        %1190 = vst.msk [vmem:[#allocation2 + $0xa8] sm:$0xff] %vm1167, 0.0
        %1191 = vst.msk [vmem:[#allocation2 + $0xb0] sm:$0xff] %vm1167, 0.0
        %1192 = vst.msk [vmem:[#allocation2 + $0xb8] sm:$0x3] %vm1170, 0.0
        %1193 = vst.msk [vmem:[#allocation2 + $0xc0] sm:$0xff] %vm1167, 0.0
        %1194 = vst.msk [vmem:[#allocation2 + $0xc8] sm:$0xff] %vm1167, 0.0
        %1195 = vst.msk [vmem:[#allocation2 + $0xd0] sm:$0x3] %vm1170, 0.0
        %1196 = vst.msk [vmem:[#allocation2 + $0xd8] sm:$0xff] %vm1167, 0.0
        %1197 = vst.msk [vmem:[#allocation2 + $0xe0] sm:$0xff] %vm1167, 0.0
        %1198 = vst.msk [vmem:[#allocation2 + $0xe8] sm:$0x3] %vm1170, 0.0
        %1199 = vst.msk [vmem:[#allocation2 + $0xf0] sm:$0xff] %vm1167, 0.0
        %1200 = vst.msk [vmem:[#allocation2 + $0xf8] sm:$0xff] %vm1167, 0.0
        %1201 = vst.msk [vmem:[#allocation2 + $0x100] sm:$0x3] %vm1170, 0.0
        %1202 = vst.msk [vmem:[#allocation2 + $0x108] sm:$0xff] %vm1167, 0.0
        %1203 = vst.msk [vmem:[#allocation2 + $0x110] sm:$0xff] %vm1167, 0.0
        %1204 = vst.msk [vmem:[#allocation2 + $0x118] sm:$0x3] %vm1170, 0.0
        %1205 = vst.msk [vmem:[#allocation2 + $0x120] sm:$0xff] %vm1167, 0.0
        %1206 = vst.msk [vmem:[#allocation2 + $0x128] sm:$0xff] %vm1167, 0.0
        %1207 = vst.msk [vmem:[#allocation2 + $0x130] sm:$0x3] %vm1170, 0.0
        %1208 = vst.msk [vmem:[#allocation2 + $0x138] sm:$0xff] %vm1167, 0.0
        %1209 = vst.msk [vmem:[#allocation2 + $0x140] sm:$0xff] %vm1167, 0.0
        %1210 = vst.msk [vmem:[#allocation2 + $0x148] sm:$0x3] %vm1170, 0.0
        %1211 = vst.msk [vmem:[#allocation2 + $0x150] sm:$0xff] %vm1167, 0.0
        %1212 = vst.msk [vmem:[#allocation2 + $0x158] sm:$0xff] %vm1167, 0.0
        %1213 = vst.msk [vmem:[#allocation2 + $0x160] sm:$0x3] %vm1170, 0.0
        %1214 = vst.msk [vmem:[#allocation2 + $0x168] sm:$0xff] %vm1167, 0.0
        %1215 = vst.msk [vmem:[#allocation2 + $0x170] sm:$0xff] %vm1167, 0.0
        %1216 = vst.msk [vmem:[#allocation2 + $0x178] sm:$0x3] %vm1170, 0.0
        %1217 = vst.msk [vmem:[#allocation2 + $0x180] sm:$0xff] %vm1167, 0.0
        %1218 = vst.msk [vmem:[#allocation2 + $0x188] sm:$0xff] %vm1167, 0.0
        %1219 = vst.msk [vmem:[#allocation2 + $0x190] sm:$0x3] %vm1170, 0.0
        %1220 = vst.msk [vmem:[#allocation2 + $0x198] sm:$0xff] %vm1167, 0.0
        %1221 = vst.msk [vmem:[#allocation2 + $0x1a0] sm:$0xff] %vm1167, 0.0
        %1222 = vst.msk [vmem:[#allocation2 + $0x1a8] sm:$0x3] %vm1170, 0.0
        %s1223 = scalar_lea.vmem [#allocation2], 24
        %1224 = vst.msk [vmem:[%s1223 + $0x1] sm:$0xff] %vm1167, %v1135
        %1225 = vst.msk [vmem:[%s1223 + $0x9] sm:$0xff] %vm1167, %v1136
        %1226 = vst.msk [vmem:[%s1223 + $0x19] sm:$0xff] %vm1167, %v1137
        %1227 = vst.msk [vmem:[%s1223 + $0x21] sm:$0xff] %vm1167, %v1138
        %1228 = vst.msk [vmem:[%s1223 + $0x31] sm:$0xff] %vm1167, %v1139
        %1229 = vst.msk [vmem:[%s1223 + $0x39] sm:$0xff] %vm1167, %v1140
        %1230 = vst.msk [vmem:[%s1223 + $0x49] sm:$0xff] %vm1167, %v1141
        %1231 = vst.msk [vmem:[%s1223 + $0x51] sm:$0xff] %vm1167, %v1142
        %1232 = vst.msk [vmem:[%s1223 + $0x61] sm:$0xff] %vm1167, %v1143
        %1233 = vst.msk [vmem:[%s1223 + $0x69] sm:$0xff] %vm1167, %v1144
        %1234 = vst.msk [vmem:[%s1223 + $0x79] sm:$0xff] %vm1167, %v1145
        %1235 = vst.msk [vmem:[%s1223 + $0x81] sm:$0xff] %vm1167, %v1146
        %1236 = vst.msk [vmem:[%s1223 + $0x91] sm:$0xff] %vm1167, %v1147
        %1237 = vst.msk [vmem:[%s1223 + $0x99] sm:$0xff] %vm1167, %v1148
        %1238 = vst.msk [vmem:[%s1223 + $0xa9] sm:$0xff] %vm1167, %v1149
        %1239 = vst.msk [vmem:[%s1223 + $0xb1] sm:$0xff] %vm1167, %v1150
        %1240 = vst.msk [vmem:[%s1223 + $0xc1] sm:$0xff] %vm1167, %v1151
        %1241 = vst.msk [vmem:[%s1223 + $0xc9] sm:$0xff] %vm1167, %v1152
        %1242 = vst.msk [vmem:[%s1223 + $0xd9] sm:$0xff] %vm1167, %v1153
        %1243 = vst.msk [vmem:[%s1223 + $0xe1] sm:$0xff] %vm1167, %v1154
        %1244 = vst.msk [vmem:[%s1223 + $0xf1] sm:$0xff] %vm1167, %v1155
        %1245 = vst.msk [vmem:[%s1223 + $0xf9] sm:$0xff] %vm1167, %v1156
        %1246 = vst.msk [vmem:[%s1223 + $0x109] sm:$0xff] %vm1167, %v1157
        %1247 = vst.msk [vmem:[%s1223 + $0x111] sm:$0xff] %vm1167, %v1158
        %1248 = vst.msk [vmem:[%s1223 + $0x121] sm:$0xff] %vm1167, %v1159
        %1249 = vst.msk [vmem:[%s1223 + $0x129] sm:$0xff] %vm1167, %v1160
        %1250 = vst.msk [vmem:[%s1223 + $0x139] sm:$0xff] %vm1167, %v1161
        %1251 = vst.msk [vmem:[%s1223 + $0x141] sm:$0xff] %vm1167, %v1162
        %1252 = vst.msk [vmem:[%s1223 + $0x151] sm:$0xff] %vm1167, %v1163
        %1253 = vst.msk [vmem:[%s1223 + $0x159] sm:$0xff] %vm1167, %v1164
        %1254 = vst.msk [vmem:[%s1223 + $0x169] sm:$0xff] %vm1167, %v1165
        %1255 = vst.msk [vmem:[%s1223 + $0x171] sm:$0xff] %vm1167, %v1166
        %v1256 = vld [vmem:[#allocation2] sm:$0xff]
        %v1257 = vld [vmem:[#allocation2 + $0x8] sm:$0xff]
        %v1258 = vld [vmem:[#allocation2 + $0x10] sm:$0x3]
        %v1259 = vld [vmem:[#allocation2 + $0x18] sm:$0xff]
        %v1260 = vld [vmem:[#allocation2 + $0x20] sm:$0xff]
        %v1261 = vld [vmem:[#allocation2 + $0x28] sm:$0x3]
        %v1262 = vld [vmem:[#allocation2 + $0x30] sm:$0xff]
        %v1263 = vld [vmem:[#allocation2 + $0x38] sm:$0xff]
        %v1264 = vld [vmem:[#allocation2 + $0x40] sm:$0x3]
        %v1265 = vld [vmem:[#allocation2 + $0x48] sm:$0xff]
        %v1266 = vld [vmem:[#allocation2 + $0x50] sm:$0xff]
        %v1267 = vld [vmem:[#allocation2 + $0x58] sm:$0x3]
        %v1268 = vld [vmem:[#allocation2 + $0x60] sm:$0xff]
        %v1269 = vld [vmem:[#allocation2 + $0x68] sm:$0xff]
        %v1270 = vld [vmem:[#allocation2 + $0x70] sm:$0x3]
        %v1271 = vld [vmem:[#allocation2 + $0x78] sm:$0xff]
        %v1272 = vld [vmem:[#allocation2 + $0x80] sm:$0xff]
        %v1273 = vld [vmem:[#allocation2 + $0x88] sm:$0x3]
        %v1274 = vld [vmem:[#allocation2 + $0x90] sm:$0xff]
        %v1275 = vld [vmem:[#allocation2 + $0x98] sm:$0xff]
        %v1276 = vld [vmem:[#allocation2 + $0xa0] sm:$0x3]
        %v1277 = vld [vmem:[#allocation2 + $0xa8] sm:$0xff]
        %v1278 = vld [vmem:[#allocation2 + $0xb0] sm:$0xff]
        %v1279 = vld [vmem:[#allocation2 + $0xb8] sm:$0x3]
        %v1280 = vld [vmem:[#allocation2 + $0xc0] sm:$0xff]
        %v1281 = vld [vmem:[#allocation2 + $0xc8] sm:$0xff]
        %v1282 = vld [vmem:[#allocation2 + $0xd0] sm:$0x3]
        %v1283 = vld [vmem:[#allocation2 + $0xd8] sm:$0xff]
        %v1284 = vld [vmem:[#allocation2 + $0xe0] sm:$0xff]
        %v1285 = vld [vmem:[#allocation2 + $0xe8] sm:$0x3]
        %v1286 = vld [vmem:[#allocation2 + $0xf0] sm:$0xff]
        %v1287 = vld [vmem:[#allocation2 + $0xf8] sm:$0xff]
        %v1288 = vld [vmem:[#allocation2 + $0x100] sm:$0x3]
        %v1289 = vld [vmem:[#allocation2 + $0x108] sm:$0xff]
        %v1290 = vld [vmem:[#allocation2 + $0x110] sm:$0xff]
        %v1291 = vld [vmem:[#allocation2 + $0x118] sm:$0x3]
        %v1292 = vld [vmem:[#allocation2 + $0x120] sm:$0xff]
        %v1293 = vld [vmem:[#allocation2 + $0x128] sm:$0xff]
        %v1294 = vld [vmem:[#allocation2 + $0x130] sm:$0x3]
        %v1295 = vld [vmem:[#allocation2 + $0x138] sm:$0xff]
        %v1296 = vld [vmem:[#allocation2 + $0x140] sm:$0xff]
        %v1297 = vld [vmem:[#allocation2 + $0x148] sm:$0x3]
        %v1298 = vld [vmem:[#allocation2 + $0x150] sm:$0xff]
        %v1299 = vld [vmem:[#allocation2 + $0x158] sm:$0xff]
        %v1300 = vld [vmem:[#allocation2 + $0x160] sm:$0x3]
        %v1301 = vld [vmem:[#allocation2 + $0x168] sm:$0xff]
        %v1302 = vld [vmem:[#allocation2 + $0x170] sm:$0xff]
        %v1303 = vld [vmem:[#allocation2 + $0x178] sm:$0x3]
        %v1304 = vld [vmem:[#allocation2 + $0x180] sm:$0xff]
        %v1305 = vld [vmem:[#allocation2 + $0x188] sm:$0xff]
        %v1306 = vld [vmem:[#allocation2 + $0x190] sm:$0x3]
        %v1307 = vld [vmem:[#allocation2 + $0x198] sm:$0xff]
        %v1308 = vld [vmem:[#allocation2 + $0x1a0] sm:$0xff]
        %v1309 = vld [vmem:[#allocation2 + $0x1a8] sm:$0x3]
        %v1310 = vld [vmem:[%s5] sm:$0xff]
        %v1311 = vld [vmem:[%s5 + $0x8] sm:$0x1]
        %v1312 = vlaneseq
        %v1313 = vshrl.u32 %v1312, 7
        %v1314 = vsub.s32 0, %v1313
        %v1315 = vrot.slane %v1310, %v1314
        %v1316 = vmul.f32 %v1256, %v1315
        %v1317 = vmul.f32 %v1257, %v1315
        %v1318 = vmul.f32 %v1259, %v1315
        %v1319 = vmul.f32 %v1260, %v1315
        %v1320 = vmul.f32 %v1262, %v1315
        %v1321 = vmul.f32 %v1263, %v1315
        %v1322 = vmul.f32 %v1265, %v1315
        %v1323 = vmul.f32 %v1266, %v1315
        %v1324 = vmul.f32 %v1268, %v1315
        %v1325 = vmul.f32 %v1269, %v1315
        %v1326 = vmul.f32 %v1271, %v1315
        %v1327 = vmul.f32 %v1272, %v1315
        %v1328 = vmul.f32 %v1274, %v1315
        %v1329 = vmul.f32 %v1275, %v1315
        %v1330 = vmul.f32 %v1277, %v1315
        %v1331 = vmul.f32 %v1278, %v1315
        %v1332 = vmul.f32 %v1280, %v1315
        %v1333 = vmul.f32 %v1281, %v1315
        %v1334 = vmul.f32 %v1283, %v1315
        %v1335 = vmul.f32 %v1284, %v1315
        %v1336 = vmul.f32 %v1286, %v1315
        %v1337 = vmul.f32 %v1287, %v1315
        %v1338 = vmul.f32 %v1289, %v1315
        %v1339 = vmul.f32 %v1290, %v1315
        %v1340 = vmul.f32 %v1292, %v1315
        %v1341 = vmul.f32 %v1293, %v1315
        %v1342 = vmul.f32 %v1295, %v1315
        %v1343 = vmul.f32 %v1296, %v1315
        %v1344 = vmul.f32 %v1298, %v1315
        %v1345 = vmul.f32 %v1299, %v1315
        %v1346 = vmul.f32 %v1301, %v1315
        %v1347 = vmul.f32 %v1302, %v1315
        %v1348 = vadd.f32 %v1316, 0.0
        %v1349 = vadd.f32 %v1317, 0.0
        %v1350 = vadd.f32 %v1318, 0.0
        %v1351 = vadd.f32 %v1319, 0.0
        %v1352 = vadd.f32 %v1320, 0.0
        %v1353 = vadd.f32 %v1321, 0.0
        %v1354 = vadd.f32 %v1322, 0.0
        %v1355 = vadd.f32 %v1323, 0.0
        %v1356 = vadd.f32 %v1324, 0.0
        %v1357 = vadd.f32 %v1325, 0.0
        %v1358 = vadd.f32 %v1326, 0.0
        %v1359 = vadd.f32 %v1327, 0.0
        %v1360 = vadd.f32 %v1328, 0.0
        %v1361 = vadd.f32 %v1329, 0.0
        %v1362 = vadd.f32 %v1330, 0.0
        %v1363 = vadd.f32 %v1331, 0.0
        %v1364 = vadd.f32 %v1332, 0.0
        %v1365 = vadd.f32 %v1333, 0.0
        %v1366 = vadd.f32 %v1334, 0.0
        %v1367 = vadd.f32 %v1335, 0.0
        %v1368 = vadd.f32 %v1336, 0.0
        %v1369 = vadd.f32 %v1337, 0.0
        %v1370 = vadd.f32 %v1338, 0.0
        %v1371 = vadd.f32 %v1339, 0.0
        %v1372 = vadd.f32 %v1340, 0.0
        %v1373 = vadd.f32 %v1341, 0.0
        %v1374 = vadd.f32 %v1342, 0.0
        %v1375 = vadd.f32 %v1343, 0.0
        %v1376 = vadd.f32 %v1344, 0.0
        %v1377 = vadd.f32 %v1345, 0.0
        %v1378 = vadd.f32 %v1346, 0.0
        %v1379 = vadd.f32 %v1347, 0.0
        %v1380 = vlaneseq
        %v1381 = vshrl.u32 %v1380, 7
        %v1382 = vsub.s32 1, %v1381
        %v1383 = vrot.slane %v1310, %v1382
        %v1384 = vmul.f32 %v1256, %v1383
        %v1385 = vmul.f32 %v1257, %v1383
        %v1386 = vmul.f32 %v1258, %v1383
        %v1387 = vmul.f32 %v1259, %v1383
        %v1388 = vmul.f32 %v1260, %v1383
        %v1389 = vmul.f32 %v1261, %v1383
        %v1390 = vmul.f32 %v1262, %v1383
        %v1391 = vmul.f32 %v1263, %v1383
        %v1392 = vmul.f32 %v1264, %v1383
        %v1393 = vmul.f32 %v1265, %v1383
        %v1394 = vmul.f32 %v1266, %v1383
        %v1395 = vmul.f32 %v1267, %v1383
        %v1396 = vmul.f32 %v1268, %v1383
        %v1397 = vmul.f32 %v1269, %v1383
        %v1398 = vmul.f32 %v1270, %v1383
        %v1399 = vmul.f32 %v1271, %v1383
        %v1400 = vmul.f32 %v1272, %v1383
        %v1401 = vmul.f32 %v1273, %v1383
        %v1402 = vmul.f32 %v1274, %v1383
        %v1403 = vmul.f32 %v1275, %v1383
        %v1404 = vmul.f32 %v1276, %v1383
        %v1405 = vmul.f32 %v1277, %v1383
        %v1406 = vmul.f32 %v1278, %v1383
        %v1407 = vmul.f32 %v1279, %v1383
        %v1408 = vmul.f32 %v1280, %v1383
        %v1409 = vmul.f32 %v1281, %v1383
        %v1410 = vmul.f32 %v1282, %v1383
        %v1411 = vmul.f32 %v1283, %v1383
        %v1412 = vmul.f32 %v1284, %v1383
        %v1413 = vmul.f32 %v1285, %v1383
        %v1414 = vmul.f32 %v1286, %v1383
        %v1415 = vmul.f32 %v1287, %v1383
        %v1416 = vmul.f32 %v1288, %v1383
        %v1417 = vmul.f32 %v1289, %v1383
        %v1418 = vmul.f32 %v1290, %v1383
        %v1419 = vmul.f32 %v1291, %v1383
        %v1420 = vmul.f32 %v1292, %v1383
        %v1421 = vmul.f32 %v1293, %v1383
        %v1422 = vmul.f32 %v1294, %v1383
        %v1423 = vmul.f32 %v1295, %v1383
        %v1424 = vmul.f32 %v1296, %v1383
        %v1425 = vmul.f32 %v1297, %v1383
        %v1426 = vmul.f32 %v1298, %v1383
        %v1427 = vmul.f32 %v1299, %v1383
        %v1428 = vmul.f32 %v1300, %v1383
        %v1429 = vmul.f32 %v1301, %v1383
        %v1430 = vmul.f32 %v1302, %v1383
        %v1431 = vmul.f32 %v1303, %v1383
        %vm1480 = vcmask 1046528
        %v1481 = vrot.slane %v1384, 1
        %v1482 = vrot.slane %v1385, 1
        %v1483 = vsel %vm1480, %v1481, %v1482
        %v1484 = vrot.slane %v1386, 1
        %v1485 = vsel %vm1480, %v1482, %v1484
        %v1486 = vrot.slane %v1387, 1
        %v1487 = vrot.slane %v1388, 1
        %v1488 = vsel %vm1480, %v1486, %v1487
        %v1489 = vrot.slane %v1389, 1
        %v1490 = vsel %vm1480, %v1487, %v1489
        %v1491 = vrot.slane %v1390, 1
        %v1492 = vrot.slane %v1391, 1
        %v1493 = vsel %vm1480, %v1491, %v1492
        %v1494 = vrot.slane %v1392, 1
        %v1495 = vsel %vm1480, %v1492, %v1494
        %v1496 = vrot.slane %v1393, 1
        %v1497 = vrot.slane %v1394, 1
        %v1498 = vsel %vm1480, %v1496, %v1497
        %v1499 = vrot.slane %v1395, 1
        %v1500 = vsel %vm1480, %v1497, %v1499
        %v1501 = vrot.slane %v1396, 1
        %v1502 = vrot.slane %v1397, 1
        %v1503 = vsel %vm1480, %v1501, %v1502
        %v1504 = vrot.slane %v1398, 1
        %v1505 = vsel %vm1480, %v1502, %v1504
        %v1506 = vrot.slane %v1399, 1
        %v1507 = vrot.slane %v1400, 1
        %v1508 = vsel %vm1480, %v1506, %v1507
        %v1509 = vrot.slane %v1401, 1
        %v1510 = vsel %vm1480, %v1507, %v1509
        %v1511 = vrot.slane %v1402, 1
        %v1512 = vrot.slane %v1403, 1
        %v1513 = vsel %vm1480, %v1511, %v1512
        %v1514 = vrot.slane %v1404, 1
        %v1515 = vsel %vm1480, %v1512, %v1514
        %v1516 = vrot.slane %v1405, 1
        %v1517 = vrot.slane %v1406, 1
        %v1518 = vsel %vm1480, %v1516, %v1517
        %v1519 = vrot.slane %v1407, 1
        %v1520 = vsel %vm1480, %v1517, %v1519
        %v1521 = vrot.slane %v1408, 1
        %v1522 = vrot.slane %v1409, 1
        %v1523 = vsel %vm1480, %v1521, %v1522
        %v1524 = vrot.slane %v1410, 1
        %v1525 = vsel %vm1480, %v1522, %v1524
        %v1526 = vrot.slane %v1411, 1
        %v1527 = vrot.slane %v1412, 1
        %v1528 = vsel %vm1480, %v1526, %v1527
        %v1529 = vrot.slane %v1413, 1
        %v1530 = vsel %vm1480, %v1527, %v1529
        %v1531 = vrot.slane %v1414, 1
        %v1532 = vrot.slane %v1415, 1
        %v1533 = vsel %vm1480, %v1531, %v1532
        %v1534 = vrot.slane %v1416, 1
        %v1535 = vsel %vm1480, %v1532, %v1534
        %v1536 = vrot.slane %v1417, 1
        %v1537 = vrot.slane %v1418, 1
        %v1538 = vsel %vm1480, %v1536, %v1537
        %v1539 = vrot.slane %v1419, 1
        %v1540 = vsel %vm1480, %v1537, %v1539
        %v1541 = vrot.slane %v1420, 1
        %v1542 = vrot.slane %v1421, 1
        %v1543 = vsel %vm1480, %v1541, %v1542
        %v1544 = vrot.slane %v1422, 1
        %v1545 = vsel %vm1480, %v1542, %v1544
        %v1546 = vrot.slane %v1423, 1
        %v1547 = vrot.slane %v1424, 1
        %v1548 = vsel %vm1480, %v1546, %v1547
        %v1549 = vrot.slane %v1425, 1
        %v1550 = vsel %vm1480, %v1547, %v1549
        %v1551 = vrot.slane %v1426, 1
        %v1552 = vrot.slane %v1427, 1
        %v1553 = vsel %vm1480, %v1551, %v1552
        %v1554 = vrot.slane %v1428, 1
        %v1555 = vsel %vm1480, %v1552, %v1554
        %v1556 = vrot.slane %v1429, 1
        %v1557 = vrot.slane %v1430, 1
        %v1558 = vsel %vm1480, %v1556, %v1557
        %v1559 = vrot.slane %v1431, 1
        %v1560 = vsel %vm1480, %v1557, %v1559
        %v1593 = vadd.f32 %v1348, %v1483
        %v1594 = vadd.f32 %v1349, %v1485
        %v1595 = vadd.f32 %v1350, %v1488
        %v1596 = vadd.f32 %v1351, %v1490
        %v1597 = vadd.f32 %v1352, %v1493
        %v1598 = vadd.f32 %v1353, %v1495
        %v1599 = vadd.f32 %v1354, %v1498
        %v1600 = vadd.f32 %v1355, %v1500
        %v1601 = vadd.f32 %v1356, %v1503
        %v1602 = vadd.f32 %v1357, %v1505
        %v1603 = vadd.f32 %v1358, %v1508
        %v1604 = vadd.f32 %v1359, %v1510
        %v1605 = vadd.f32 %v1360, %v1513
        %v1606 = vadd.f32 %v1361, %v1515
        %v1607 = vadd.f32 %v1362, %v1518
        %v1608 = vadd.f32 %v1363, %v1520
        %v1609 = vadd.f32 %v1364, %v1523
        %v1610 = vadd.f32 %v1365, %v1525
        %v1611 = vadd.f32 %v1366, %v1528
        %v1612 = vadd.f32 %v1367, %v1530
        %v1613 = vadd.f32 %v1368, %v1533
        %v1614 = vadd.f32 %v1369, %v1535
        %v1615 = vadd.f32 %v1370, %v1538
        %v1616 = vadd.f32 %v1371, %v1540
        %v1617 = vadd.f32 %v1372, %v1543
        %v1618 = vadd.f32 %v1373, %v1545
        %v1619 = vadd.f32 %v1374, %v1548
        %v1620 = vadd.f32 %v1375, %v1550
        %v1621 = vadd.f32 %v1376, %v1553
        %v1622 = vadd.f32 %v1377, %v1555
        %v1623 = vadd.f32 %v1378, %v1558
        %v1624 = vadd.f32 %v1379, %v1560
        %v1625 = vlaneseq
        %v1626 = vshrl.u32 %v1625, 7
        %v1627 = vsub.s32 2, %v1626
        %v1628 = vrot.slane %v1310, %v1627
        %v1629 = vmul.f32 %v1256, %v1628
        %v1630 = vmul.f32 %v1257, %v1628
        %v1631 = vmul.f32 %v1258, %v1628
        %v1632 = vmul.f32 %v1259, %v1628
        %v1633 = vmul.f32 %v1260, %v1628
        %v1634 = vmul.f32 %v1261, %v1628
        %v1635 = vmul.f32 %v1262, %v1628
        %v1636 = vmul.f32 %v1263, %v1628
        %v1637 = vmul.f32 %v1264, %v1628
        %v1638 = vmul.f32 %v1265, %v1628
        %v1639 = vmul.f32 %v1266, %v1628
        %v1640 = vmul.f32 %v1267, %v1628
        %v1641 = vmul.f32 %v1268, %v1628
        %v1642 = vmul.f32 %v1269, %v1628
        %v1643 = vmul.f32 %v1270, %v1628
        %v1644 = vmul.f32 %v1271, %v1628
        %v1645 = vmul.f32 %v1272, %v1628
        %v1646 = vmul.f32 %v1273, %v1628
        %v1647 = vmul.f32 %v1274, %v1628
        %v1648 = vmul.f32 %v1275, %v1628
        %v1649 = vmul.f32 %v1276, %v1628
        %v1650 = vmul.f32 %v1277, %v1628
        %v1651 = vmul.f32 %v1278, %v1628
        %v1652 = vmul.f32 %v1279, %v1628
        %v1653 = vmul.f32 %v1280, %v1628
        %v1654 = vmul.f32 %v1281, %v1628
        %v1655 = vmul.f32 %v1282, %v1628
        %v1656 = vmul.f32 %v1283, %v1628
        %v1657 = vmul.f32 %v1284, %v1628
        %v1658 = vmul.f32 %v1285, %v1628
        %v1659 = vmul.f32 %v1286, %v1628
        %v1660 = vmul.f32 %v1287, %v1628
        %v1661 = vmul.f32 %v1288, %v1628
        %v1662 = vmul.f32 %v1289, %v1628
        %v1663 = vmul.f32 %v1290, %v1628
        %v1664 = vmul.f32 %v1291, %v1628
        %v1665 = vmul.f32 %v1292, %v1628
        %v1666 = vmul.f32 %v1293, %v1628
        %v1667 = vmul.f32 %v1294, %v1628
        %v1668 = vmul.f32 %v1295, %v1628
        %v1669 = vmul.f32 %v1296, %v1628
        %v1670 = vmul.f32 %v1297, %v1628
        %v1671 = vmul.f32 %v1298, %v1628
        %v1672 = vmul.f32 %v1299, %v1628
        %v1673 = vmul.f32 %v1300, %v1628
        %v1674 = vmul.f32 %v1301, %v1628
        %v1675 = vmul.f32 %v1302, %v1628
        %v1676 = vmul.f32 %v1303, %v1628
        %vm1725 = vcmask 1045504
        %v1726 = vrot.slane %v1629, 2
        %v1727 = vrot.slane %v1630, 2
        %v1728 = vsel %vm1725, %v1726, %v1727
        %v1729 = vrot.slane %v1631, 2
        %v1730 = vsel %vm1725, %v1727, %v1729
        %v1731 = vrot.slane %v1632, 2
        %v1732 = vrot.slane %v1633, 2
        %v1733 = vsel %vm1725, %v1731, %v1732
        %v1734 = vrot.slane %v1634, 2
        %v1735 = vsel %vm1725, %v1732, %v1734
        %v1736 = vrot.slane %v1635, 2
        %v1737 = vrot.slane %v1636, 2
        %v1738 = vsel %vm1725, %v1736, %v1737
        %v1739 = vrot.slane %v1637, 2
        %v1740 = vsel %vm1725, %v1737, %v1739
        %v1741 = vrot.slane %v1638, 2
        %v1742 = vrot.slane %v1639, 2
        %v1743 = vsel %vm1725, %v1741, %v1742
        %v1744 = vrot.slane %v1640, 2
        %v1745 = vsel %vm1725, %v1742, %v1744
        %v1746 = vrot.slane %v1641, 2
        %v1747 = vrot.slane %v1642, 2
        %v1748 = vsel %vm1725, %v1746, %v1747
        %v1749 = vrot.slane %v1643, 2
        %v1750 = vsel %vm1725, %v1747, %v1749
        %v1751 = vrot.slane %v1644, 2
        %v1752 = vrot.slane %v1645, 2
        %v1753 = vsel %vm1725, %v1751, %v1752
        %v1754 = vrot.slane %v1646, 2
        %v1755 = vsel %vm1725, %v1752, %v1754
        %v1756 = vrot.slane %v1647, 2
        %v1757 = vrot.slane %v1648, 2
        %v1758 = vsel %vm1725, %v1756, %v1757
        %v1759 = vrot.slane %v1649, 2
        %v1760 = vsel %vm1725, %v1757, %v1759
        %v1761 = vrot.slane %v1650, 2
        %v1762 = vrot.slane %v1651, 2
        %v1763 = vsel %vm1725, %v1761, %v1762
        %v1764 = vrot.slane %v1652, 2
        %v1765 = vsel %vm1725, %v1762, %v1764
        %v1766 = vrot.slane %v1653, 2
        %v1767 = vrot.slane %v1654, 2
        %v1768 = vsel %vm1725, %v1766, %v1767
        %v1769 = vrot.slane %v1655, 2
        %v1770 = vsel %vm1725, %v1767, %v1769
        %v1771 = vrot.slane %v1656, 2
        %v1772 = vrot.slane %v1657, 2
        %v1773 = vsel %vm1725, %v1771, %v1772
        %v1774 = vrot.slane %v1658, 2
        %v1775 = vsel %vm1725, %v1772, %v1774
        %v1776 = vrot.slane %v1659, 2
        %v1777 = vrot.slane %v1660, 2
        %v1778 = vsel %vm1725, %v1776, %v1777
        %v1779 = vrot.slane %v1661, 2
        %v1780 = vsel %vm1725, %v1777, %v1779
        %v1781 = vrot.slane %v1662, 2
        %v1782 = vrot.slane %v1663, 2
        %v1783 = vsel %vm1725, %v1781, %v1782
        %v1784 = vrot.slane %v1664, 2
        %v1785 = vsel %vm1725, %v1782, %v1784
        %v1786 = vrot.slane %v1665, 2
        %v1787 = vrot.slane %v1666, 2
        %v1788 = vsel %vm1725, %v1786, %v1787
        %v1789 = vrot.slane %v1667, 2
        %v1790 = vsel %vm1725, %v1787, %v1789
        %v1791 = vrot.slane %v1668, 2
        %v1792 = vrot.slane %v1669, 2
        %v1793 = vsel %vm1725, %v1791, %v1792
        %v1794 = vrot.slane %v1670, 2
        %v1795 = vsel %vm1725, %v1792, %v1794
        %v1796 = vrot.slane %v1671, 2
        %v1797 = vrot.slane %v1672, 2
        %v1798 = vsel %vm1725, %v1796, %v1797
        %v1799 = vrot.slane %v1673, 2
        %v1800 = vsel %vm1725, %v1797, %v1799
        %v1801 = vrot.slane %v1674, 2
        %v1802 = vrot.slane %v1675, 2
        %v1803 = vsel %vm1725, %v1801, %v1802
        %v1804 = vrot.slane %v1676, 2
        %v1805 = vsel %vm1725, %v1802, %v1804
        %v1838 = vadd.f32 %v1593, %v1728
        %v1839 = vadd.f32 %v1594, %v1730
        %v1840 = vadd.f32 %v1595, %v1733
        %v1841 = vadd.f32 %v1596, %v1735
        %v1842 = vadd.f32 %v1597, %v1738
        %v1843 = vadd.f32 %v1598, %v1740
        %v1844 = vadd.f32 %v1599, %v1743
        %v1845 = vadd.f32 %v1600, %v1745
        %v1846 = vadd.f32 %v1601, %v1748
        %v1847 = vadd.f32 %v1602, %v1750
        %v1848 = vadd.f32 %v1603, %v1753
        %v1849 = vadd.f32 %v1604, %v1755
        %v1850 = vadd.f32 %v1605, %v1758
        %v1851 = vadd.f32 %v1606, %v1760
        %v1852 = vadd.f32 %v1607, %v1763
        %v1853 = vadd.f32 %v1608, %v1765
        %v1854 = vadd.f32 %v1609, %v1768
        %v1855 = vadd.f32 %v1610, %v1770
        %v1856 = vadd.f32 %v1611, %v1773
        %v1857 = vadd.f32 %v1612, %v1775
        %v1858 = vadd.f32 %v1613, %v1778
        %v1859 = vadd.f32 %v1614, %v1780
        %v1860 = vadd.f32 %v1615, %v1783
        %v1861 = vadd.f32 %v1616, %v1785
        %v1862 = vadd.f32 %v1617, %v1788
        %v1863 = vadd.f32 %v1618, %v1790
        %v1864 = vadd.f32 %v1619, %v1793
        %v1865 = vadd.f32 %v1620, %v1795
        %v1866 = vadd.f32 %v1621, %v1798
        %v1867 = vadd.f32 %v1622, %v1800
        %v1868 = vadd.f32 %v1623, %v1803
        %v1869 = vadd.f32 %v1624, %v1805
        %v1870 = vlaneseq
        %v1871 = vshrl.u32 %v1870, 7
        %v1872 = vsub.s32 3, %v1871
        %v1873 = vrot.slane %v1310, %v1872
        %v1874 = vmul.f32 %v1259, %v1873
        %v1875 = vmul.f32 %v1260, %v1873
        %v1876 = vmul.f32 %v1262, %v1873
        %v1877 = vmul.f32 %v1263, %v1873
        %v1878 = vmul.f32 %v1265, %v1873
        %v1879 = vmul.f32 %v1266, %v1873
        %v1880 = vmul.f32 %v1268, %v1873
        %v1881 = vmul.f32 %v1269, %v1873
        %v1882 = vmul.f32 %v1271, %v1873
        %v1883 = vmul.f32 %v1272, %v1873
        %v1884 = vmul.f32 %v1274, %v1873
        %v1885 = vmul.f32 %v1275, %v1873
        %v1886 = vmul.f32 %v1277, %v1873
        %v1887 = vmul.f32 %v1278, %v1873
        %v1888 = vmul.f32 %v1280, %v1873
        %v1889 = vmul.f32 %v1281, %v1873
        %v1890 = vmul.f32 %v1283, %v1873
        %v1891 = vmul.f32 %v1284, %v1873
        %v1892 = vmul.f32 %v1286, %v1873
        %v1893 = vmul.f32 %v1287, %v1873
        %v1894 = vmul.f32 %v1289, %v1873
        %v1895 = vmul.f32 %v1290, %v1873
        %v1896 = vmul.f32 %v1292, %v1873
        %v1897 = vmul.f32 %v1293, %v1873
        %v1898 = vmul.f32 %v1295, %v1873
        %v1899 = vmul.f32 %v1296, %v1873
        %v1900 = vmul.f32 %v1298, %v1873
        %v1901 = vmul.f32 %v1299, %v1873
        %v1902 = vmul.f32 %v1301, %v1873
        %v1903 = vmul.f32 %v1302, %v1873
        %v1904 = vmul.f32 %v1304, %v1873
        %v1905 = vmul.f32 %v1305, %v1873
        %v1906 = vadd.f32 %v1838, %v1874
        %v1907 = vadd.f32 %v1839, %v1875
        %v1908 = vadd.f32 %v1840, %v1876
        %v1909 = vadd.f32 %v1841, %v1877
        %v1910 = vadd.f32 %v1842, %v1878
        %v1911 = vadd.f32 %v1843, %v1879
        %v1912 = vadd.f32 %v1844, %v1880
        %v1913 = vadd.f32 %v1845, %v1881
        %v1914 = vadd.f32 %v1846, %v1882
        %v1915 = vadd.f32 %v1847, %v1883
        %v1916 = vadd.f32 %v1848, %v1884
        %v1917 = vadd.f32 %v1849, %v1885
        %v1918 = vadd.f32 %v1850, %v1886
        %v1919 = vadd.f32 %v1851, %v1887
        %v1920 = vadd.f32 %v1852, %v1888
        %v1921 = vadd.f32 %v1853, %v1889
        %v1922 = vadd.f32 %v1854, %v1890
        %v1923 = vadd.f32 %v1855, %v1891
        %v1924 = vadd.f32 %v1856, %v1892
        %v1925 = vadd.f32 %v1857, %v1893
        %v1926 = vadd.f32 %v1858, %v1894
        %v1927 = vadd.f32 %v1859, %v1895
        %v1928 = vadd.f32 %v1860, %v1896
        %v1929 = vadd.f32 %v1861, %v1897
        %v1930 = vadd.f32 %v1862, %v1898
        %v1931 = vadd.f32 %v1863, %v1899
        %v1932 = vadd.f32 %v1864, %v1900
        %v1933 = vadd.f32 %v1865, %v1901
        %v1934 = vadd.f32 %v1866, %v1902
        %v1935 = vadd.f32 %v1867, %v1903
        %v1936 = vadd.f32 %v1868, %v1904
        %v1937 = vadd.f32 %v1869, %v1905
        %v1938 = vlaneseq
        %v1939 = vshrl.u32 %v1938, 7
        %v1940 = vsub.s32 4, %v1939
        %v1941 = vrot.slane %v1310, %v1940
        %v1942 = vmul.f32 %v1259, %v1941
        %v1943 = vmul.f32 %v1260, %v1941
        %v1944 = vmul.f32 %v1261, %v1941
        %v1945 = vmul.f32 %v1262, %v1941
        %v1946 = vmul.f32 %v1263, %v1941
        %v1947 = vmul.f32 %v1264, %v1941
        %v1948 = vmul.f32 %v1265, %v1941
        %v1949 = vmul.f32 %v1266, %v1941
        %v1950 = vmul.f32 %v1267, %v1941
        %v1951 = vmul.f32 %v1268, %v1941
        %v1952 = vmul.f32 %v1269, %v1941
        %v1953 = vmul.f32 %v1270, %v1941
        %v1954 = vmul.f32 %v1271, %v1941
        %v1955 = vmul.f32 %v1272, %v1941
        %v1956 = vmul.f32 %v1273, %v1941
        %v1957 = vmul.f32 %v1274, %v1941
        %v1958 = vmul.f32 %v1275, %v1941
        %v1959 = vmul.f32 %v1276, %v1941
        %v1960 = vmul.f32 %v1277, %v1941
        %v1961 = vmul.f32 %v1278, %v1941
        %v1962 = vmul.f32 %v1279, %v1941
        %v1963 = vmul.f32 %v1280, %v1941
        %v1964 = vmul.f32 %v1281, %v1941
        %v1965 = vmul.f32 %v1282, %v1941
        %v1966 = vmul.f32 %v1283, %v1941
        %v1967 = vmul.f32 %v1284, %v1941
        %v1968 = vmul.f32 %v1285, %v1941
        %v1969 = vmul.f32 %v1286, %v1941
        %v1970 = vmul.f32 %v1287, %v1941
        %v1971 = vmul.f32 %v1288, %v1941
        %v1972 = vmul.f32 %v1289, %v1941
        %v1973 = vmul.f32 %v1290, %v1941
        %v1974 = vmul.f32 %v1291, %v1941
        %v1975 = vmul.f32 %v1292, %v1941
        %v1976 = vmul.f32 %v1293, %v1941
        %v1977 = vmul.f32 %v1294, %v1941
        %v1978 = vmul.f32 %v1295, %v1941
        %v1979 = vmul.f32 %v1296, %v1941
        %v1980 = vmul.f32 %v1297, %v1941
        %v1981 = vmul.f32 %v1298, %v1941
        %v1982 = vmul.f32 %v1299, %v1941
        %v1983 = vmul.f32 %v1300, %v1941
        %v1984 = vmul.f32 %v1301, %v1941
        %v1985 = vmul.f32 %v1302, %v1941
        %v1986 = vmul.f32 %v1303, %v1941
        %v1987 = vmul.f32 %v1304, %v1941
        %v1988 = vmul.f32 %v1305, %v1941
        %v1989 = vmul.f32 %v1306, %v1941
        %v2038 = vrot.slane %v1942, 1
        %v2039 = vrot.slane %v1943, 1
        %v2040 = vsel %vm1480, %v2038, %v2039
        %v2041 = vrot.slane %v1944, 1
        %v2042 = vsel %vm1480, %v2039, %v2041
        %v2043 = vrot.slane %v1945, 1
        %v2044 = vrot.slane %v1946, 1
        %v2045 = vsel %vm1480, %v2043, %v2044
        %v2046 = vrot.slane %v1947, 1
        %v2047 = vsel %vm1480, %v2044, %v2046
        %v2048 = vrot.slane %v1948, 1
        %v2049 = vrot.slane %v1949, 1
        %v2050 = vsel %vm1480, %v2048, %v2049
        %v2051 = vrot.slane %v1950, 1
        %v2052 = vsel %vm1480, %v2049, %v2051
        %v2053 = vrot.slane %v1951, 1
        %v2054 = vrot.slane %v1952, 1
        %v2055 = vsel %vm1480, %v2053, %v2054
        %v2056 = vrot.slane %v1953, 1
        %v2057 = vsel %vm1480, %v2054, %v2056
        %v2058 = vrot.slane %v1954, 1
        %v2059 = vrot.slane %v1955, 1
        %v2060 = vsel %vm1480, %v2058, %v2059
        %v2061 = vrot.slane %v1956, 1
        %v2062 = vsel %vm1480, %v2059, %v2061
        %v2063 = vrot.slane %v1957, 1
        %v2064 = vrot.slane %v1958, 1
        %v2065 = vsel %vm1480, %v2063, %v2064
        %v2066 = vrot.slane %v1959, 1
        %v2067 = vsel %vm1480, %v2064, %v2066
        %v2068 = vrot.slane %v1960, 1
        %v2069 = vrot.slane %v1961, 1
        %v2070 = vsel %vm1480, %v2068, %v2069
        %v2071 = vrot.slane %v1962, 1
        %v2072 = vsel %vm1480, %v2069, %v2071
        %v2073 = vrot.slane %v1963, 1
        %v2074 = vrot.slane %v1964, 1
        %v2075 = vsel %vm1480, %v2073, %v2074
        %v2076 = vrot.slane %v1965, 1
        %v2077 = vsel %vm1480, %v2074, %v2076
        %v2078 = vrot.slane %v1966, 1
        %v2079 = vrot.slane %v1967, 1
        %v2080 = vsel %vm1480, %v2078, %v2079
        %v2081 = vrot.slane %v1968, 1
        %v2082 = vsel %vm1480, %v2079, %v2081
        %v2083 = vrot.slane %v1969, 1
        %v2084 = vrot.slane %v1970, 1
        %v2085 = vsel %vm1480, %v2083, %v2084
        %v2086 = vrot.slane %v1971, 1
        %v2087 = vsel %vm1480, %v2084, %v2086
        %v2088 = vrot.slane %v1972, 1
        %v2089 = vrot.slane %v1973, 1
        %v2090 = vsel %vm1480, %v2088, %v2089
        %v2091 = vrot.slane %v1974, 1
        %v2092 = vsel %vm1480, %v2089, %v2091
        %v2093 = vrot.slane %v1975, 1
        %v2094 = vrot.slane %v1976, 1
        %v2095 = vsel %vm1480, %v2093, %v2094
        %v2096 = vrot.slane %v1977, 1
        %v2097 = vsel %vm1480, %v2094, %v2096
        %v2098 = vrot.slane %v1978, 1
        %v2099 = vrot.slane %v1979, 1
        %v2100 = vsel %vm1480, %v2098, %v2099
        %v2101 = vrot.slane %v1980, 1
        %v2102 = vsel %vm1480, %v2099, %v2101
        %v2103 = vrot.slane %v1981, 1
        %v2104 = vrot.slane %v1982, 1
        %v2105 = vsel %vm1480, %v2103, %v2104
        %v2106 = vrot.slane %v1983, 1
        %v2107 = vsel %vm1480, %v2104, %v2106
        %v2108 = vrot.slane %v1984, 1
        %v2109 = vrot.slane %v1985, 1
        %v2110 = vsel %vm1480, %v2108, %v2109
        %v2111 = vrot.slane %v1986, 1
        %v2112 = vsel %vm1480, %v2109, %v2111
        %v2113 = vrot.slane %v1987, 1
        %v2114 = vrot.slane %v1988, 1
        %v2115 = vsel %vm1480, %v2113, %v2114
        %v2116 = vrot.slane %v1989, 1
        %v2117 = vsel %vm1480, %v2114, %v2116
        %v2150 = vadd.f32 %v1906, %v2040
        %v2151 = vadd.f32 %v1907, %v2042
        %v2152 = vadd.f32 %v1908, %v2045
        %v2153 = vadd.f32 %v1909, %v2047
        %v2154 = vadd.f32 %v1910, %v2050
        %v2155 = vadd.f32 %v1911, %v2052
        %v2156 = vadd.f32 %v1912, %v2055
        %v2157 = vadd.f32 %v1913, %v2057
        %v2158 = vadd.f32 %v1914, %v2060
        %v2159 = vadd.f32 %v1915, %v2062
        %v2160 = vadd.f32 %v1916, %v2065
        %v2161 = vadd.f32 %v1917, %v2067
        %v2162 = vadd.f32 %v1918, %v2070
        %v2163 = vadd.f32 %v1919, %v2072
        %v2164 = vadd.f32 %v1920, %v2075
        %v2165 = vadd.f32 %v1921, %v2077
        %v2166 = vadd.f32 %v1922, %v2080
        %v2167 = vadd.f32 %v1923, %v2082
        %v2168 = vadd.f32 %v1924, %v2085
        %v2169 = vadd.f32 %v1925, %v2087
        %v2170 = vadd.f32 %v1926, %v2090
        %v2171 = vadd.f32 %v1927, %v2092
        %v2172 = vadd.f32 %v1928, %v2095
        %v2173 = vadd.f32 %v1929, %v2097
        %v2174 = vadd.f32 %v1930, %v2100
        %v2175 = vadd.f32 %v1931, %v2102
        %v2176 = vadd.f32 %v1932, %v2105
        %v2177 = vadd.f32 %v1933, %v2107
        %v2178 = vadd.f32 %v1934, %v2110
        %v2179 = vadd.f32 %v1935, %v2112
        %v2180 = vadd.f32 %v1936, %v2115
        %v2181 = vadd.f32 %v1937, %v2117
        %v2182 = vlaneseq
        %v2183 = vshrl.u32 %v2182, 7
        %v2184 = vsub.s32 5, %v2183
        %v2185 = vrot.slane %v1310, %v2184
        %v2186 = vmul.f32 %v1259, %v2185
        %v2187 = vmul.f32 %v1260, %v2185
        %v2188 = vmul.f32 %v1261, %v2185
        %v2189 = vmul.f32 %v1262, %v2185
        %v2190 = vmul.f32 %v1263, %v2185
        %v2191 = vmul.f32 %v1264, %v2185
        %v2192 = vmul.f32 %v1265, %v2185
        %v2193 = vmul.f32 %v1266, %v2185
        %v2194 = vmul.f32 %v1267, %v2185
        %v2195 = vmul.f32 %v1268, %v2185
        %v2196 = vmul.f32 %v1269, %v2185
        %v2197 = vmul.f32 %v1270, %v2185
        %v2198 = vmul.f32 %v1271, %v2185
        %v2199 = vmul.f32 %v1272, %v2185
        %v2200 = vmul.f32 %v1273, %v2185
        %v2201 = vmul.f32 %v1274, %v2185
        %v2202 = vmul.f32 %v1275, %v2185
        %v2203 = vmul.f32 %v1276, %v2185
        %v2204 = vmul.f32 %v1277, %v2185
        %v2205 = vmul.f32 %v1278, %v2185
        %v2206 = vmul.f32 %v1279, %v2185
        %v2207 = vmul.f32 %v1280, %v2185
        %v2208 = vmul.f32 %v1281, %v2185
        %v2209 = vmul.f32 %v1282, %v2185
        %v2210 = vmul.f32 %v1283, %v2185
        %v2211 = vmul.f32 %v1284, %v2185
        %v2212 = vmul.f32 %v1285, %v2185
        %v2213 = vmul.f32 %v1286, %v2185
        %v2214 = vmul.f32 %v1287, %v2185
        %v2215 = vmul.f32 %v1288, %v2185
        %v2216 = vmul.f32 %v1289, %v2185
        %v2217 = vmul.f32 %v1290, %v2185
        %v2218 = vmul.f32 %v1291, %v2185
        %v2219 = vmul.f32 %v1292, %v2185
        %v2220 = vmul.f32 %v1293, %v2185
        %v2221 = vmul.f32 %v1294, %v2185
        %v2222 = vmul.f32 %v1295, %v2185
        %v2223 = vmul.f32 %v1296, %v2185
        %v2224 = vmul.f32 %v1297, %v2185
        %v2225 = vmul.f32 %v1298, %v2185
        %v2226 = vmul.f32 %v1299, %v2185
        %v2227 = vmul.f32 %v1300, %v2185
        %v2228 = vmul.f32 %v1301, %v2185
        %v2229 = vmul.f32 %v1302, %v2185
        %v2230 = vmul.f32 %v1303, %v2185
        %v2231 = vmul.f32 %v1304, %v2185
        %v2232 = vmul.f32 %v1305, %v2185
        %v2233 = vmul.f32 %v1306, %v2185
        %v2282 = vrot.slane %v2186, 2
        %v2283 = vrot.slane %v2187, 2
        %v2284 = vsel %vm1725, %v2282, %v2283
        %v2285 = vrot.slane %v2188, 2
        %v2286 = vsel %vm1725, %v2283, %v2285
        %v2287 = vrot.slane %v2189, 2
        %v2288 = vrot.slane %v2190, 2
        %v2289 = vsel %vm1725, %v2287, %v2288
        %v2290 = vrot.slane %v2191, 2
        %v2291 = vsel %vm1725, %v2288, %v2290
        %v2292 = vrot.slane %v2192, 2
        %v2293 = vrot.slane %v2193, 2
        %v2294 = vsel %vm1725, %v2292, %v2293
        %v2295 = vrot.slane %v2194, 2
        %v2296 = vsel %vm1725, %v2293, %v2295
        %v2297 = vrot.slane %v2195, 2
        %v2298 = vrot.slane %v2196, 2
        %v2299 = vsel %vm1725, %v2297, %v2298
        %v2300 = vrot.slane %v2197, 2
        %v2301 = vsel %vm1725, %v2298, %v2300
        %v2302 = vrot.slane %v2198, 2
        %v2303 = vrot.slane %v2199, 2
        %v2304 = vsel %vm1725, %v2302, %v2303
        %v2305 = vrot.slane %v2200, 2
        %v2306 = vsel %vm1725, %v2303, %v2305
        %v2307 = vrot.slane %v2201, 2
        %v2308 = vrot.slane %v2202, 2
        %v2309 = vsel %vm1725, %v2307, %v2308
        %v2310 = vrot.slane %v2203, 2
        %v2311 = vsel %vm1725, %v2308, %v2310
        %v2312 = vrot.slane %v2204, 2
        %v2313 = vrot.slane %v2205, 2
        %v2314 = vsel %vm1725, %v2312, %v2313
        %v2315 = vrot.slane %v2206, 2
        %v2316 = vsel %vm1725, %v2313, %v2315
        %v2317 = vrot.slane %v2207, 2
        %v2318 = vrot.slane %v2208, 2
        %v2319 = vsel %vm1725, %v2317, %v2318
        %v2320 = vrot.slane %v2209, 2
        %v2321 = vsel %vm1725, %v2318, %v2320
        %v2322 = vrot.slane %v2210, 2
        %v2323 = vrot.slane %v2211, 2
        %v2324 = vsel %vm1725, %v2322, %v2323
        %v2325 = vrot.slane %v2212, 2
        %v2326 = vsel %vm1725, %v2323, %v2325
        %v2327 = vrot.slane %v2213, 2
        %v2328 = vrot.slane %v2214, 2
        %v2329 = vsel %vm1725, %v2327, %v2328
        %v2330 = vrot.slane %v2215, 2
        %v2331 = vsel %vm1725, %v2328, %v2330
        %v2332 = vrot.slane %v2216, 2
        %v2333 = vrot.slane %v2217, 2
        %v2334 = vsel %vm1725, %v2332, %v2333
        %v2335 = vrot.slane %v2218, 2
        %v2336 = vsel %vm1725, %v2333, %v2335
        %v2337 = vrot.slane %v2219, 2
        %v2338 = vrot.slane %v2220, 2
        %v2339 = vsel %vm1725, %v2337, %v2338
        %v2340 = vrot.slane %v2221, 2
        %v2341 = vsel %vm1725, %v2338, %v2340
        %v2342 = vrot.slane %v2222, 2
        %v2343 = vrot.slane %v2223, 2
        %v2344 = vsel %vm1725, %v2342, %v2343
        %v2345 = vrot.slane %v2224, 2
        %v2346 = vsel %vm1725, %v2343, %v2345
        %v2347 = vrot.slane %v2225, 2
        %v2348 = vrot.slane %v2226, 2
        %v2349 = vsel %vm1725, %v2347, %v2348
        %v2350 = vrot.slane %v2227, 2
        %v2351 = vsel %vm1725, %v2348, %v2350
        %v2352 = vrot.slane %v2228, 2
        %v2353 = vrot.slane %v2229, 2
        %v2354 = vsel %vm1725, %v2352, %v2353
        %v2355 = vrot.slane %v2230, 2
        %v2356 = vsel %vm1725, %v2353, %v2355
        %v2357 = vrot.slane %v2231, 2
        %v2358 = vrot.slane %v2232, 2
        %v2359 = vsel %vm1725, %v2357, %v2358
        %v2360 = vrot.slane %v2233, 2
        %v2361 = vsel %vm1725, %v2358, %v2360
        %v2394 = vadd.f32 %v2150, %v2284
        %v2395 = vadd.f32 %v2151, %v2286
        %v2396 = vadd.f32 %v2152, %v2289
        %v2397 = vadd.f32 %v2153, %v2291
        %v2398 = vadd.f32 %v2154, %v2294
        %v2399 = vadd.f32 %v2155, %v2296
        %v2400 = vadd.f32 %v2156, %v2299
        %v2401 = vadd.f32 %v2157, %v2301
        %v2402 = vadd.f32 %v2158, %v2304
        %v2403 = vadd.f32 %v2159, %v2306
        %v2404 = vadd.f32 %v2160, %v2309
        %v2405 = vadd.f32 %v2161, %v2311
        %v2406 = vadd.f32 %v2162, %v2314
        %v2407 = vadd.f32 %v2163, %v2316
        %v2408 = vadd.f32 %v2164, %v2319
        %v2409 = vadd.f32 %v2165, %v2321
        %v2410 = vadd.f32 %v2166, %v2324
        %v2411 = vadd.f32 %v2167, %v2326
        %v2412 = vadd.f32 %v2168, %v2329
        %v2413 = vadd.f32 %v2169, %v2331
        %v2414 = vadd.f32 %v2170, %v2334
        %v2415 = vadd.f32 %v2171, %v2336
        %v2416 = vadd.f32 %v2172, %v2339
        %v2417 = vadd.f32 %v2173, %v2341
        %v2418 = vadd.f32 %v2174, %v2344
        %v2419 = vadd.f32 %v2175, %v2346
        %v2420 = vadd.f32 %v2176, %v2349
        %v2421 = vadd.f32 %v2177, %v2351
        %v2422 = vadd.f32 %v2178, %v2354
        %v2423 = vadd.f32 %v2179, %v2356
        %v2424 = vadd.f32 %v2180, %v2359
        %v2425 = vadd.f32 %v2181, %v2361
        %v2426 = vlaneseq
        %v2427 = vshrl.u32 %v2426, 7
        %v2428 = vsub.s32 6, %v2427
        %v2429 = vrot.slane %v1310, %v2428
        %v2430 = vmul.f32 %v1262, %v2429
        %v2431 = vmul.f32 %v1263, %v2429
        %v2432 = vmul.f32 %v1265, %v2429
        %v2433 = vmul.f32 %v1266, %v2429
        %v2434 = vmul.f32 %v1268, %v2429
        %v2435 = vmul.f32 %v1269, %v2429
        %v2436 = vmul.f32 %v1271, %v2429
        %v2437 = vmul.f32 %v1272, %v2429
        %v2438 = vmul.f32 %v1274, %v2429
        %v2439 = vmul.f32 %v1275, %v2429
        %v2440 = vmul.f32 %v1277, %v2429
        %v2441 = vmul.f32 %v1278, %v2429
        %v2442 = vmul.f32 %v1280, %v2429
        %v2443 = vmul.f32 %v1281, %v2429
        %v2444 = vmul.f32 %v1283, %v2429
        %v2445 = vmul.f32 %v1284, %v2429
        %v2446 = vmul.f32 %v1286, %v2429
        %v2447 = vmul.f32 %v1287, %v2429
        %v2448 = vmul.f32 %v1289, %v2429
        %v2449 = vmul.f32 %v1290, %v2429
        %v2450 = vmul.f32 %v1292, %v2429
        %v2451 = vmul.f32 %v1293, %v2429
        %v2452 = vmul.f32 %v1295, %v2429
        %v2453 = vmul.f32 %v1296, %v2429
        %v2454 = vmul.f32 %v1298, %v2429
        %v2455 = vmul.f32 %v1299, %v2429
        %v2456 = vmul.f32 %v1301, %v2429
        %v2457 = vmul.f32 %v1302, %v2429
        %v2458 = vmul.f32 %v1304, %v2429
        %v2459 = vmul.f32 %v1305, %v2429
        %v2460 = vmul.f32 %v1307, %v2429
        %v2461 = vmul.f32 %v1308, %v2429
        %v2462 = vadd.f32 %v2394, %v2430
        %v2463 = vadd.f32 %v2395, %v2431
        %v2464 = vadd.f32 %v2396, %v2432
        %v2465 = vadd.f32 %v2397, %v2433
        %v2466 = vadd.f32 %v2398, %v2434
        %v2467 = vadd.f32 %v2399, %v2435
        %v2468 = vadd.f32 %v2400, %v2436
        %v2469 = vadd.f32 %v2401, %v2437
        %v2470 = vadd.f32 %v2402, %v2438
        %v2471 = vadd.f32 %v2403, %v2439
        %v2472 = vadd.f32 %v2404, %v2440
        %v2473 = vadd.f32 %v2405, %v2441
        %v2474 = vadd.f32 %v2406, %v2442
        %v2475 = vadd.f32 %v2407, %v2443
        %v2476 = vadd.f32 %v2408, %v2444
        %v2477 = vadd.f32 %v2409, %v2445
        %v2478 = vadd.f32 %v2410, %v2446
        %v2479 = vadd.f32 %v2411, %v2447
        %v2480 = vadd.f32 %v2412, %v2448
        %v2481 = vadd.f32 %v2413, %v2449
        %v2482 = vadd.f32 %v2414, %v2450
        %v2483 = vadd.f32 %v2415, %v2451
        %v2484 = vadd.f32 %v2416, %v2452
        %v2485 = vadd.f32 %v2417, %v2453
        %v2486 = vadd.f32 %v2418, %v2454
        %v2487 = vadd.f32 %v2419, %v2455
        %v2488 = vadd.f32 %v2420, %v2456
        %v2489 = vadd.f32 %v2421, %v2457
        %v2490 = vadd.f32 %v2422, %v2458
        %v2491 = vadd.f32 %v2423, %v2459
        %v2492 = vadd.f32 %v2424, %v2460
        %v2493 = vadd.f32 %v2425, %v2461
        %v2494 = vlaneseq
        %v2495 = vshrl.u32 %v2494, 7
        %v2496 = vsub.s32 7, %v2495
        %v2497 = vrot.slane %v1310, %v2496
        %v2498 = vmul.f32 %v1262, %v2497
        %v2499 = vmul.f32 %v1263, %v2497
        %v2500 = vmul.f32 %v1264, %v2497
        %v2501 = vmul.f32 %v1265, %v2497
        %v2502 = vmul.f32 %v1266, %v2497
        %v2503 = vmul.f32 %v1267, %v2497
        %v2504 = vmul.f32 %v1268, %v2497
        %v2505 = vmul.f32 %v1269, %v2497
        %v2506 = vmul.f32 %v1270, %v2497
        %v2507 = vmul.f32 %v1271, %v2497
        %v2508 = vmul.f32 %v1272, %v2497
        %v2509 = vmul.f32 %v1273, %v2497
        %v2510 = vmul.f32 %v1274, %v2497
        %v2511 = vmul.f32 %v1275, %v2497
        %v2512 = vmul.f32 %v1276, %v2497
        %v2513 = vmul.f32 %v1277, %v2497
        %v2514 = vmul.f32 %v1278, %v2497
        %v2515 = vmul.f32 %v1279, %v2497
        %v2516 = vmul.f32 %v1280, %v2497
        %v2517 = vmul.f32 %v1281, %v2497
        %v2518 = vmul.f32 %v1282, %v2497
        %v2519 = vmul.f32 %v1283, %v2497
        %v2520 = vmul.f32 %v1284, %v2497
        %v2521 = vmul.f32 %v1285, %v2497
        %v2522 = vmul.f32 %v1286, %v2497
        %v2523 = vmul.f32 %v1287, %v2497
        %v2524 = vmul.f32 %v1288, %v2497
        %v2525 = vmul.f32 %v1289, %v2497
        %v2526 = vmul.f32 %v1290, %v2497
        %v2527 = vmul.f32 %v1291, %v2497
        %v2528 = vmul.f32 %v1292, %v2497
        %v2529 = vmul.f32 %v1293, %v2497
        %v2530 = vmul.f32 %v1294, %v2497
        %v2531 = vmul.f32 %v1295, %v2497
        %v2532 = vmul.f32 %v1296, %v2497
        %v2533 = vmul.f32 %v1297, %v2497
        %v2534 = vmul.f32 %v1298, %v2497
        %v2535 = vmul.f32 %v1299, %v2497
        %v2536 = vmul.f32 %v1300, %v2497
        %v2537 = vmul.f32 %v1301, %v2497
        %v2538 = vmul.f32 %v1302, %v2497
        %v2539 = vmul.f32 %v1303, %v2497
        %v2540 = vmul.f32 %v1304, %v2497
        %v2541 = vmul.f32 %v1305, %v2497
        %v2542 = vmul.f32 %v1306, %v2497
        %v2543 = vmul.f32 %v1307, %v2497
        %v2544 = vmul.f32 %v1308, %v2497
        %v2545 = vmul.f32 %v1309, %v2497
        %v2594 = vrot.slane %v2498, 1
        %v2595 = vrot.slane %v2499, 1
        %v2596 = vsel %vm1480, %v2594, %v2595
        %v2597 = vrot.slane %v2500, 1
        %v2598 = vsel %vm1480, %v2595, %v2597
        %v2599 = vrot.slane %v2501, 1
        %v2600 = vrot.slane %v2502, 1
        %v2601 = vsel %vm1480, %v2599, %v2600
        %v2602 = vrot.slane %v2503, 1
        %v2603 = vsel %vm1480, %v2600, %v2602
        %v2604 = vrot.slane %v2504, 1
        %v2605 = vrot.slane %v2505, 1
        %v2606 = vsel %vm1480, %v2604, %v2605
        %v2607 = vrot.slane %v2506, 1
        %v2608 = vsel %vm1480, %v2605, %v2607
        %v2609 = vrot.slane %v2507, 1
        %v2610 = vrot.slane %v2508, 1
        %v2611 = vsel %vm1480, %v2609, %v2610
        %v2612 = vrot.slane %v2509, 1
        %v2613 = vsel %vm1480, %v2610, %v2612
        %v2614 = vrot.slane %v2510, 1
        %v2615 = vrot.slane %v2511, 1
        %v2616 = vsel %vm1480, %v2614, %v2615
        %v2617 = vrot.slane %v2512, 1
        %v2618 = vsel %vm1480, %v2615, %v2617
        %v2619 = vrot.slane %v2513, 1
        %v2620 = vrot.slane %v2514, 1
        %v2621 = vsel %vm1480, %v2619, %v2620
        %v2622 = vrot.slane %v2515, 1
        %v2623 = vsel %vm1480, %v2620, %v2622
        %v2624 = vrot.slane %v2516, 1
        %v2625 = vrot.slane %v2517, 1
        %v2626 = vsel %vm1480, %v2624, %v2625
        %v2627 = vrot.slane %v2518, 1
        %v2628 = vsel %vm1480, %v2625, %v2627
        %v2629 = vrot.slane %v2519, 1
        %v2630 = vrot.slane %v2520, 1
        %v2631 = vsel %vm1480, %v2629, %v2630
        %v2632 = vrot.slane %v2521, 1
        %v2633 = vsel %vm1480, %v2630, %v2632
        %v2634 = vrot.slane %v2522, 1
        %v2635 = vrot.slane %v2523, 1
        %v2636 = vsel %vm1480, %v2634, %v2635
        %v2637 = vrot.slane %v2524, 1
        %v2638 = vsel %vm1480, %v2635, %v2637
        %v2639 = vrot.slane %v2525, 1
        %v2640 = vrot.slane %v2526, 1
        %v2641 = vsel %vm1480, %v2639, %v2640
        %v2642 = vrot.slane %v2527, 1
        %v2643 = vsel %vm1480, %v2640, %v2642
        %v2644 = vrot.slane %v2528, 1
        %v2645 = vrot.slane %v2529, 1
        %v2646 = vsel %vm1480, %v2644, %v2645
        %v2647 = vrot.slane %v2530, 1
        %v2648 = vsel %vm1480, %v2645, %v2647
        %v2649 = vrot.slane %v2531, 1
        %v2650 = vrot.slane %v2532, 1
        %v2651 = vsel %vm1480, %v2649, %v2650
        %v2652 = vrot.slane %v2533, 1
        %v2653 = vsel %vm1480, %v2650, %v2652
        %v2654 = vrot.slane %v2534, 1
        %v2655 = vrot.slane %v2535, 1
        %v2656 = vsel %vm1480, %v2654, %v2655
        %v2657 = vrot.slane %v2536, 1
        %v2658 = vsel %vm1480, %v2655, %v2657
        %v2659 = vrot.slane %v2537, 1
        %v2660 = vrot.slane %v2538, 1
        %v2661 = vsel %vm1480, %v2659, %v2660
        %v2662 = vrot.slane %v2539, 1
        %v2663 = vsel %vm1480, %v2660, %v2662
        %v2664 = vrot.slane %v2540, 1
        %v2665 = vrot.slane %v2541, 1
        %v2666 = vsel %vm1480, %v2664, %v2665
        %v2667 = vrot.slane %v2542, 1
        %v2668 = vsel %vm1480, %v2665, %v2667
        %v2669 = vrot.slane %v2543, 1
        %v2670 = vrot.slane %v2544, 1
        %v2671 = vsel %vm1480, %v2669, %v2670
        %v2672 = vrot.slane %v2545, 1
        %v2673 = vsel %vm1480, %v2670, %v2672
        %v2706 = vadd.f32 %v2462, %v2596
        %v2707 = vadd.f32 %v2463, %v2598
        %v2708 = vadd.f32 %v2464, %v2601
        %v2709 = vadd.f32 %v2465, %v2603
        %v2710 = vadd.f32 %v2466, %v2606
        %v2711 = vadd.f32 %v2467, %v2608
        %v2712 = vadd.f32 %v2468, %v2611
        %v2713 = vadd.f32 %v2469, %v2613
        %v2714 = vadd.f32 %v2470, %v2616
        %v2715 = vadd.f32 %v2471, %v2618
        %v2716 = vadd.f32 %v2472, %v2621
        %v2717 = vadd.f32 %v2473, %v2623
        %v2718 = vadd.f32 %v2474, %v2626
        %v2719 = vadd.f32 %v2475, %v2628
        %v2720 = vadd.f32 %v2476, %v2631
        %v2721 = vadd.f32 %v2477, %v2633
        %v2722 = vadd.f32 %v2478, %v2636
        %v2723 = vadd.f32 %v2479, %v2638
        %v2724 = vadd.f32 %v2480, %v2641
        %v2725 = vadd.f32 %v2481, %v2643
        %v2726 = vadd.f32 %v2482, %v2646
        %v2727 = vadd.f32 %v2483, %v2648
        %v2728 = vadd.f32 %v2484, %v2651
        %v2729 = vadd.f32 %v2485, %v2653
        %v2730 = vadd.f32 %v2486, %v2656
        %v2731 = vadd.f32 %v2487, %v2658
        %v2732 = vadd.f32 %v2488, %v2661
        %v2733 = vadd.f32 %v2489, %v2663
        %v2734 = vadd.f32 %v2490, %v2666
        %v2735 = vadd.f32 %v2491, %v2668
        %v2736 = vadd.f32 %v2492, %v2671
        %v2737 = vadd.f32 %v2493, %v2673
        %v2738 = vlaneseq
        %v2739 = vshrl.u32 %v2738, 7
        %v2740 = vsub.s32 0, %v2739
        %v2741 = vrot.slane %v1311, %v2740
        %v2742 = vmul.f32 %v1262, %v2741
        %v2743 = vmul.f32 %v1263, %v2741
        %v2744 = vmul.f32 %v1264, %v2741
        %v2745 = vmul.f32 %v1265, %v2741
        %v2746 = vmul.f32 %v1266, %v2741
        %v2747 = vmul.f32 %v1267, %v2741
        %v2748 = vmul.f32 %v1268, %v2741
        %v2749 = vmul.f32 %v1269, %v2741
        %v2750 = vmul.f32 %v1270, %v2741
        %v2751 = vmul.f32 %v1271, %v2741
        %v2752 = vmul.f32 %v1272, %v2741
        %v2753 = vmul.f32 %v1273, %v2741
        %v2754 = vmul.f32 %v1274, %v2741
        %v2755 = vmul.f32 %v1275, %v2741
        %v2756 = vmul.f32 %v1276, %v2741
        %v2757 = vmul.f32 %v1277, %v2741
        %v2758 = vmul.f32 %v1278, %v2741
        %v2759 = vmul.f32 %v1279, %v2741
        %v2760 = vmul.f32 %v1280, %v2741
        %v2761 = vmul.f32 %v1281, %v2741
        %v2762 = vmul.f32 %v1282, %v2741
        %v2763 = vmul.f32 %v1283, %v2741
        %v2764 = vmul.f32 %v1284, %v2741
        %v2765 = vmul.f32 %v1285, %v2741
        %v2766 = vmul.f32 %v1286, %v2741
        %v2767 = vmul.f32 %v1287, %v2741
        %v2768 = vmul.f32 %v1288, %v2741
        %v2769 = vmul.f32 %v1289, %v2741
        %v2770 = vmul.f32 %v1290, %v2741
        %v2771 = vmul.f32 %v1291, %v2741
        %v2772 = vmul.f32 %v1292, %v2741
        %v2773 = vmul.f32 %v1293, %v2741
        %v2774 = vmul.f32 %v1294, %v2741
        %v2775 = vmul.f32 %v1295, %v2741
        %v2776 = vmul.f32 %v1296, %v2741
        %v2777 = vmul.f32 %v1297, %v2741
        %v2778 = vmul.f32 %v1298, %v2741
        %v2779 = vmul.f32 %v1299, %v2741
        %v2780 = vmul.f32 %v1300, %v2741
        %v2781 = vmul.f32 %v1301, %v2741
        %v2782 = vmul.f32 %v1302, %v2741
        %v2783 = vmul.f32 %v1303, %v2741
        %v2784 = vmul.f32 %v1304, %v2741
        %v2785 = vmul.f32 %v1305, %v2741
        %v2786 = vmul.f32 %v1306, %v2741
        %v2787 = vmul.f32 %v1307, %v2741
        %v2788 = vmul.f32 %v1308, %v2741
        %v2789 = vmul.f32 %v1309, %v2741
        %v2838 = vrot.slane %v2742, 2
        %v2839 = vrot.slane %v2743, 2
        %v2840 = vsel %vm1725, %v2838, %v2839
        %v2841 = vrot.slane %v2744, 2
        %v2842 = vsel %vm1725, %v2839, %v2841
        %v2843 = vrot.slane %v2745, 2
        %v2844 = vrot.slane %v2746, 2
        %v2845 = vsel %vm1725, %v2843, %v2844
        %v2846 = vrot.slane %v2747, 2
        %v2847 = vsel %vm1725, %v2844, %v2846
        %v2848 = vrot.slane %v2748, 2
        %v2849 = vrot.slane %v2749, 2
        %v2850 = vsel %vm1725, %v2848, %v2849
        %v2851 = vrot.slane %v2750, 2
        %v2852 = vsel %vm1725, %v2849, %v2851
        %v2853 = vrot.slane %v2751, 2
        %v2854 = vrot.slane %v2752, 2
        %v2855 = vsel %vm1725, %v2853, %v2854
        %v2856 = vrot.slane %v2753, 2
        %v2857 = vsel %vm1725, %v2854, %v2856
        %v2858 = vrot.slane %v2754, 2
        %v2859 = vrot.slane %v2755, 2
        %v2860 = vsel %vm1725, %v2858, %v2859
        %v2861 = vrot.slane %v2756, 2
        %v2862 = vsel %vm1725, %v2859, %v2861
        %v2863 = vrot.slane %v2757, 2
        %v2864 = vrot.slane %v2758, 2
        %v2865 = vsel %vm1725, %v2863, %v2864
        %v2866 = vrot.slane %v2759, 2
        %v2867 = vsel %vm1725, %v2864, %v2866
        %v2868 = vrot.slane %v2760, 2
        %v2869 = vrot.slane %v2761, 2
        %v2870 = vsel %vm1725, %v2868, %v2869
        %v2871 = vrot.slane %v2762, 2
        %v2872 = vsel %vm1725, %v2869, %v2871
        %v2873 = vrot.slane %v2763, 2
        %v2874 = vrot.slane %v2764, 2
        %v2875 = vsel %vm1725, %v2873, %v2874
        %v2876 = vrot.slane %v2765, 2
        %v2877 = vsel %vm1725, %v2874, %v2876
        %v2878 = vrot.slane %v2766, 2
        %v2879 = vrot.slane %v2767, 2
        %v2880 = vsel %vm1725, %v2878, %v2879
        %v2881 = vrot.slane %v2768, 2
        %v2882 = vsel %vm1725, %v2879, %v2881
        %v2883 = vrot.slane %v2769, 2
        %v2884 = vrot.slane %v2770, 2
        %v2885 = vsel %vm1725, %v2883, %v2884
        %v2886 = vrot.slane %v2771, 2
        %v2887 = vsel %vm1725, %v2884, %v2886
        %v2888 = vrot.slane %v2772, 2
        %v2889 = vrot.slane %v2773, 2
        %v2890 = vsel %vm1725, %v2888, %v2889
        %v2891 = vrot.slane %v2774, 2
        %v2892 = vsel %vm1725, %v2889, %v2891
        %v2893 = vrot.slane %v2775, 2
        %v2894 = vrot.slane %v2776, 2
        %v2895 = vsel %vm1725, %v2893, %v2894
        %v2896 = vrot.slane %v2777, 2
        %v2897 = vsel %vm1725, %v2894, %v2896
        %v2898 = vrot.slane %v2778, 2
        %v2899 = vrot.slane %v2779, 2
        %v2900 = vsel %vm1725, %v2898, %v2899
        %v2901 = vrot.slane %v2780, 2
        %v2902 = vsel %vm1725, %v2899, %v2901
        %v2903 = vrot.slane %v2781, 2
        %v2904 = vrot.slane %v2782, 2
        %v2905 = vsel %vm1725, %v2903, %v2904
        %v2906 = vrot.slane %v2783, 2
        %v2907 = vsel %vm1725, %v2904, %v2906
        %v2908 = vrot.slane %v2784, 2
        %v2909 = vrot.slane %v2785, 2
        %v2910 = vsel %vm1725, %v2908, %v2909
        %v2911 = vrot.slane %v2786, 2
        %v2912 = vsel %vm1725, %v2909, %v2911
        %v2913 = vrot.slane %v2787, 2
        %v2914 = vrot.slane %v2788, 2
        %v2915 = vsel %vm1725, %v2913, %v2914
        %v2916 = vrot.slane %v2789, 2
        %v2917 = vsel %vm1725, %v2914, %v2916
        %v2950 = vadd.f32 %v2706, %v2840
        %v2951 = vadd.f32 %v2707, %v2842
        %v2952 = vadd.f32 %v2708, %v2845
        %v2953 = vadd.f32 %v2709, %v2847
        %v2954 = vadd.f32 %v2710, %v2850
        %v2955 = vadd.f32 %v2711, %v2852
        %v2956 = vadd.f32 %v2712, %v2855
        %v2957 = vadd.f32 %v2713, %v2857
        %v2958 = vadd.f32 %v2714, %v2860
        %v2959 = vadd.f32 %v2715, %v2862
        %v2960 = vadd.f32 %v2716, %v2865
        %v2961 = vadd.f32 %v2717, %v2867
        %v2962 = vadd.f32 %v2718, %v2870
        %v2963 = vadd.f32 %v2719, %v2872
        %v2964 = vadd.f32 %v2720, %v2875
        %v2965 = vadd.f32 %v2721, %v2877
        %v2966 = vadd.f32 %v2722, %v2880
        %v2967 = vadd.f32 %v2723, %v2882
        %v2968 = vadd.f32 %v2724, %v2885
        %v2969 = vadd.f32 %v2725, %v2887
        %v2970 = vadd.f32 %v2726, %v2890
        %v2971 = vadd.f32 %v2727, %v2892
        %v2972 = vadd.f32 %v2728, %v2895
        %v2973 = vadd.f32 %v2729, %v2897
        %v2974 = vadd.f32 %v2730, %v2900
        %v2975 = vadd.f32 %v2731, %v2902
        %v2976 = vadd.f32 %v2732, %v2905
        %v2977 = vadd.f32 %v2733, %v2907
        %v2978 = vadd.f32 %v2734, %v2910
        %v2979 = vadd.f32 %v2735, %v2912
        %v2980 = vadd.f32 %v2736, %v2915
        %v2981 = vadd.f32 %v2737, %v2917
        %v2982 = vld [vmem:[%s6] sm:$0x1]
        %v2984 = vlaneseq
        %v2985 = vshrl.u32 %v2984, 7
        %v2986 = vsub.s32 0, %v2985
        %v2987 = vrot.slane %v2982, %v2986
        %v2989 = vmul.f32 %v2950, %v2987
        %v2990 = vmul.f32 %v2951, %v2987
        %v2991 = vmul.f32 %v2952, %v2987
        %v2992 = vmul.f32 %v2953, %v2987
        %v2993 = vmul.f32 %v2954, %v2987
        %v2994 = vmul.f32 %v2955, %v2987
        %v2995 = vmul.f32 %v2956, %v2987
        %v2996 = vmul.f32 %v2957, %v2987
        %v2997 = vmul.f32 %v2958, %v2987
        %v2998 = vmul.f32 %v2959, %v2987
        %v2999 = vmul.f32 %v2960, %v2987
        %v3000 = vmul.f32 %v2961, %v2987
        %v3001 = vmul.f32 %v2962, %v2987
        %v3002 = vmul.f32 %v2963, %v2987
        %v3003 = vmul.f32 %v2964, %v2987
        %v3004 = vmul.f32 %v2965, %v2987
        %v3005 = vmul.f32 %v2966, %v2987
        %v3006 = vmul.f32 %v2967, %v2987
        %v3007 = vmul.f32 %v2968, %v2987
        %v3008 = vmul.f32 %v2969, %v2987
        %v3009 = vmul.f32 %v2970, %v2987
        %v3010 = vmul.f32 %v2971, %v2987
        %v3011 = vmul.f32 %v2972, %v2987
        %v3012 = vmul.f32 %v2973, %v2987
        %v3013 = vmul.f32 %v2974, %v2987
        %v3014 = vmul.f32 %v2975, %v2987
        %v3015 = vmul.f32 %v2976, %v2987
        %v3016 = vmul.f32 %v2977, %v2987
        %v3017 = vmul.f32 %v2978, %v2987
        %v3018 = vmul.f32 %v2979, %v2987
        %v3019 = vmul.f32 %v2980, %v2987
        %v3020 = vmul.f32 %v2981, %v2987
        %v3021 = vld [vmem:[%s7] sm:$0x1]
        %v3023 = vlaneseq
        %v3024 = vshrl.u32 %v3023, 7
        %v3025 = vsub.s32 0, %v3024
        %v3026 = vrot.slane %v3021, %v3025
        %v3028 = vadd.f32 %v2989, %v3026
        %v3029 = vadd.f32 %v2990, %v3026
        %v3030 = vadd.f32 %v2991, %v3026
        %v3031 = vadd.f32 %v2992, %v3026
        %v3032 = vadd.f32 %v2993, %v3026
        %v3033 = vadd.f32 %v2994, %v3026
        %v3034 = vadd.f32 %v2995, %v3026
        %v3035 = vadd.f32 %v2996, %v3026
        %v3036 = vadd.f32 %v2997, %v3026
        %v3037 = vadd.f32 %v2998, %v3026
        %v3038 = vadd.f32 %v2999, %v3026
        %v3039 = vadd.f32 %v3000, %v3026
        %v3040 = vadd.f32 %v3001, %v3026
        %v3041 = vadd.f32 %v3002, %v3026
        %v3042 = vadd.f32 %v3003, %v3026
        %v3043 = vadd.f32 %v3004, %v3026
        %v3044 = vadd.f32 %v3005, %v3026
        %v3045 = vadd.f32 %v3006, %v3026
        %v3046 = vadd.f32 %v3007, %v3026
        %v3047 = vadd.f32 %v3008, %v3026
        %v3048 = vadd.f32 %v3009, %v3026
        %v3049 = vadd.f32 %v3010, %v3026
        %v3050 = vadd.f32 %v3011, %v3026
        %v3051 = vadd.f32 %v3012, %v3026
        %v3052 = vadd.f32 %v3013, %v3026
        %v3053 = vadd.f32 %v3014, %v3026
        %v3054 = vadd.f32 %v3015, %v3026
        %v3055 = vadd.f32 %v3016, %v3026
        %v3056 = vadd.f32 %v3017, %v3026
        %v3057 = vadd.f32 %v3018, %v3026
        %v3058 = vadd.f32 %v3019, %v3026
        %v3059 = vadd.f32 %v3020, %v3026
        %v3060 = vxor.u32 %v3028, 2147483648
        %v3061 = vxor.u32 %v3029, 2147483648
        %v3062 = vxor.u32 %v3030, 2147483648
        %v3063 = vxor.u32 %v3031, 2147483648
        %v3064 = vxor.u32 %v3032, 2147483648
        %v3065 = vxor.u32 %v3033, 2147483648
        %v3066 = vxor.u32 %v3034, 2147483648
        %v3067 = vxor.u32 %v3035, 2147483648
        %v3068 = vxor.u32 %v3036, 2147483648
        %v3069 = vxor.u32 %v3037, 2147483648
        %v3070 = vxor.u32 %v3038, 2147483648
        %v3071 = vxor.u32 %v3039, 2147483648
        %v3072 = vxor.u32 %v3040, 2147483648
        %v3073 = vxor.u32 %v3041, 2147483648
        %v3074 = vxor.u32 %v3042, 2147483648
        %v3075 = vxor.u32 %v3043, 2147483648
        %v3076 = vxor.u32 %v3044, 2147483648
        %v3077 = vxor.u32 %v3045, 2147483648
        %v3078 = vxor.u32 %v3046, 2147483648
        %v3079 = vxor.u32 %v3047, 2147483648
        %v3080 = vxor.u32 %v3048, 2147483648
        %v3081 = vxor.u32 %v3049, 2147483648
        %v3082 = vxor.u32 %v3050, 2147483648
        %v3083 = vxor.u32 %v3051, 2147483648
        %v3084 = vxor.u32 %v3052, 2147483648
        %v3085 = vxor.u32 %v3053, 2147483648
        %v3086 = vxor.u32 %v3054, 2147483648
        %v3087 = vxor.u32 %v3055, 2147483648
        %v3088 = vxor.u32 %v3056, 2147483648
        %v3089 = vxor.u32 %v3057, 2147483648
        %v3090 = vxor.u32 %v3058, 2147483648
        %v3091 = vxor.u32 %v3059, 2147483648
        %v3092 = vmul.f32 %v3060, 1.442695
        %v3093 = vpow.pop %v3092
        %v3094 = vmul.f32 %v3061, 1.442695
        %v3095 = vpow.pop %v3094
        %v3096 = vmul.f32 %v3062, 1.442695
        %v3097 = vpow.pop %v3096
        %v3098 = vmul.f32 %v3063, 1.442695
        %v3099 = vpow.pop %v3098
        %v3100 = vmul.f32 %v3064, 1.442695
        %v3101 = vpow.pop %v3100
        %v3102 = vmul.f32 %v3065, 1.442695
        %v3103 = vpow.pop %v3102
        %v3104 = vmul.f32 %v3066, 1.442695
        %v3105 = vpow.pop %v3104
        %v3106 = vmul.f32 %v3067, 1.442695
        %v3107 = vpow.pop %v3106
        %v3108 = vmul.f32 %v3068, 1.442695
        %v3109 = vpow.pop %v3108
        %v3110 = vmul.f32 %v3069, 1.442695
        %v3111 = vpow.pop %v3110
        %v3112 = vmul.f32 %v3070, 1.442695
        %v3113 = vpow.pop %v3112
        %v3114 = vmul.f32 %v3071, 1.442695
        %v3115 = vpow.pop %v3114
        %v3116 = vmul.f32 %v3072, 1.442695
        %v3117 = vpow.pop %v3116
        %v3118 = vmul.f32 %v3073, 1.442695
        %v3119 = vpow.pop %v3118
        %v3120 = vmul.f32 %v3074, 1.442695
        %v3121 = vpow.pop %v3120
        %v3122 = vmul.f32 %v3075, 1.442695
        %v3123 = vpow.pop %v3122
        %v3124 = vmul.f32 %v3076, 1.442695
        %v3125 = vpow.pop %v3124
        %v3126 = vmul.f32 %v3077, 1.442695
        %v3127 = vpow.pop %v3126
        %v3128 = vmul.f32 %v3078, 1.442695
        %v3129 = vpow.pop %v3128
        %v3130 = vmul.f32 %v3079, 1.442695
        %v3131 = vpow.pop %v3130
        %v3132 = vmul.f32 %v3080, 1.442695
        %v3133 = vpow.pop %v3132
        %v3134 = vmul.f32 %v3081, 1.442695
        %v3135 = vpow.pop %v3134
        %v3136 = vmul.f32 %v3082, 1.442695
        %v3137 = vpow.pop %v3136
        %v3138 = vmul.f32 %v3083, 1.442695
        %v3139 = vpow.pop %v3138
        %v3140 = vmul.f32 %v3084, 1.442695
        %v3141 = vpow.pop %v3140
        %v3142 = vmul.f32 %v3085, 1.442695
        %v3143 = vpow.pop %v3142
        %v3144 = vmul.f32 %v3086, 1.442695
        %v3145 = vpow.pop %v3144
        %v3146 = vmul.f32 %v3087, 1.442695
        %v3147 = vpow.pop %v3146
        %v3148 = vmul.f32 %v3088, 1.442695
        %v3149 = vpow.pop %v3148
        %v3150 = vmul.f32 %v3089, 1.442695
        %v3151 = vpow.pop %v3150
        %v3152 = vmul.f32 %v3090, 1.442695
        %v3153 = vpow.pop %v3152
        %v3154 = vmul.f32 %v3091, 1.442695
        %v3155 = vpow.pop %v3154
        %v3156 = vadd.f32 %v3093, 1.0
        %v3157 = vadd.f32 %v3095, 1.0
        %v3158 = vadd.f32 %v3097, 1.0
        %v3159 = vadd.f32 %v3099, 1.0
        %v3160 = vadd.f32 %v3101, 1.0
        %v3161 = vadd.f32 %v3103, 1.0
        %v3162 = vadd.f32 %v3105, 1.0
        %v3163 = vadd.f32 %v3107, 1.0
        %v3164 = vadd.f32 %v3109, 1.0
        %v3165 = vadd.f32 %v3111, 1.0
        %v3166 = vadd.f32 %v3113, 1.0
        %v3167 = vadd.f32 %v3115, 1.0
        %v3168 = vadd.f32 %v3117, 1.0
        %v3169 = vadd.f32 %v3119, 1.0
        %v3170 = vadd.f32 %v3121, 1.0
        %v3171 = vadd.f32 %v3123, 1.0
        %v3172 = vadd.f32 %v3125, 1.0
        %v3173 = vadd.f32 %v3127, 1.0
        %v3174 = vadd.f32 %v3129, 1.0
        %v3175 = vadd.f32 %v3131, 1.0
        %v3176 = vadd.f32 %v3133, 1.0
        %v3177 = vadd.f32 %v3135, 1.0
        %v3178 = vadd.f32 %v3137, 1.0
        %v3179 = vadd.f32 %v3139, 1.0
        %v3180 = vadd.f32 %v3141, 1.0
        %v3181 = vadd.f32 %v3143, 1.0
        %v3182 = vadd.f32 %v3145, 1.0
        %v3183 = vadd.f32 %v3147, 1.0
        %v3184 = vadd.f32 %v3149, 1.0
        %v3185 = vadd.f32 %v3151, 1.0
        %v3186 = vadd.f32 %v3153, 1.0
        %v3187 = vadd.f32 %v3155, 1.0
        %v3188 = vrcp.pop %v3156
        %v3189 = vmul.f32 1.0, %v3188
        %v3190 = vrcp.pop %v3157
        %v3191 = vmul.f32 1.0, %v3190
        %v3192 = vrcp.pop %v3158
        %v3193 = vmul.f32 1.0, %v3192
        %v3194 = vrcp.pop %v3159
        %v3195 = vmul.f32 1.0, %v3194
        %v3196 = vrcp.pop %v3160
        %v3197 = vmul.f32 1.0, %v3196
        %v3198 = vrcp.pop %v3161
        %v3199 = vmul.f32 1.0, %v3198
        %v3200 = vrcp.pop %v3162
        %v3201 = vmul.f32 1.0, %v3200
        %v3202 = vrcp.pop %v3163
        %v3203 = vmul.f32 1.0, %v3202
        %v3204 = vrcp.pop %v3164
        %v3205 = vmul.f32 1.0, %v3204
        %v3206 = vrcp.pop %v3165
        %v3207 = vmul.f32 1.0, %v3206
        %v3208 = vrcp.pop %v3166
        %v3209 = vmul.f32 1.0, %v3208
        %v3210 = vrcp.pop %v3167
        %v3211 = vmul.f32 1.0, %v3210
        %v3212 = vrcp.pop %v3168
        %v3213 = vmul.f32 1.0, %v3212
        %v3214 = vrcp.pop %v3169
        %v3215 = vmul.f32 1.0, %v3214
        %v3216 = vrcp.pop %v3170
        %v3217 = vmul.f32 1.0, %v3216
        %v3218 = vrcp.pop %v3171
        %v3219 = vmul.f32 1.0, %v3218
        %v3220 = vrcp.pop %v3172
        %v3221 = vmul.f32 1.0, %v3220
        %v3222 = vrcp.pop %v3173
        %v3223 = vmul.f32 1.0, %v3222
        %v3224 = vrcp.pop %v3174
        %v3225 = vmul.f32 1.0, %v3224
        %v3226 = vrcp.pop %v3175
        %v3227 = vmul.f32 1.0, %v3226
        %v3228 = vrcp.pop %v3176
        %v3229 = vmul.f32 1.0, %v3228
        %v3230 = vrcp.pop %v3177
        %v3231 = vmul.f32 1.0, %v3230
        %v3232 = vrcp.pop %v3178
        %v3233 = vmul.f32 1.0, %v3232
        %v3234 = vrcp.pop %v3179
        %v3235 = vmul.f32 1.0, %v3234
        %v3236 = vrcp.pop %v3180
        %v3237 = vmul.f32 1.0, %v3236
        %v3238 = vrcp.pop %v3181
        %v3239 = vmul.f32 1.0, %v3238
        %v3240 = vrcp.pop %v3182
        %v3241 = vmul.f32 1.0, %v3240
        %v3242 = vrcp.pop %v3183
        %v3243 = vmul.f32 1.0, %v3242
        %v3244 = vrcp.pop %v3184
        %v3245 = vmul.f32 1.0, %v3244
        %v3246 = vrcp.pop %v3185
        %v3247 = vmul.f32 1.0, %v3246
        %v3248 = vrcp.pop %v3186
        %v3249 = vmul.f32 1.0, %v3248
        %v3250 = vrcp.pop %v3187
        %v3251 = vmul.f32 1.0, %v3250
        %v3252 = vmul.f32 %v3028, %v3189
        %v3253 = vmul.f32 %v3029, %v3191
        %v3254 = vmul.f32 %v3030, %v3193
        %v3255 = vmul.f32 %v3031, %v3195
        %v3256 = vmul.f32 %v3032, %v3197
        %v3257 = vmul.f32 %v3033, %v3199
        %v3258 = vmul.f32 %v3034, %v3201
        %v3259 = vmul.f32 %v3035, %v3203
        %v3260 = vmul.f32 %v3036, %v3205
        %v3261 = vmul.f32 %v3037, %v3207
        %v3262 = vmul.f32 %v3038, %v3209
        %v3263 = vmul.f32 %v3039, %v3211
        %v3264 = vmul.f32 %v3040, %v3213
        %v3265 = vmul.f32 %v3041, %v3215
        %v3266 = vmul.f32 %v3042, %v3217
        %v3267 = vmul.f32 %v3043, %v3219
        %v3268 = vmul.f32 %v3044, %v3221
        %v3269 = vmul.f32 %v3045, %v3223
        %v3270 = vmul.f32 %v3046, %v3225
        %v3271 = vmul.f32 %v3047, %v3227
        %v3272 = vmul.f32 %v3048, %v3229
        %v3273 = vmul.f32 %v3049, %v3231
        %v3274 = vmul.f32 %v3050, %v3233
        %v3275 = vmul.f32 %v3051, %v3235
        %v3276 = vmul.f32 %v3052, %v3237
        %v3277 = vmul.f32 %v3053, %v3239
        %v3278 = vmul.f32 %v3054, %v3241
        %v3279 = vmul.f32 %v3055, %v3243
        %v3280 = vmul.f32 %v3056, %v3245
        %v3281 = vmul.f32 %v3057, %v3247
        %v3282 = vmul.f32 %v3058, %v3249
        %v3283 = vmul.f32 %v3059, %v3251
        %v3284 = vsel %vm1167, %v3252, 0.0
        %v3285 = vsel %vm1167, %v3253, 0.0
        %v3286 = vadd.f32 %v3284, %v3285
        %v3287 = vsel %vm1167, %v3254, 0.0
        %v3288 = vadd.f32 %v3286, %v3287
        %v3289 = vsel %vm1167, %v3255, 0.0
        %v3290 = vadd.f32 %v3288, %v3289
        %v3291 = vsel %vm1167, %v3256, 0.0
        %v3292 = vadd.f32 %v3290, %v3291
        %v3293 = vsel %vm1167, %v3257, 0.0
        %v3294 = vadd.f32 %v3292, %v3293
        %v3295 = vsel %vm1167, %v3258, 0.0
        %v3296 = vadd.f32 %v3294, %v3295
        %v3297 = vsel %vm1167, %v3259, 0.0
        %v3298 = vadd.f32 %v3296, %v3297
        %v3299 = vsel %vm1167, %v3260, 0.0
        %v3300 = vadd.f32 %v3298, %v3299
        %v3301 = vsel %vm1167, %v3261, 0.0
        %v3302 = vadd.f32 %v3300, %v3301
        %v3303 = vsel %vm1167, %v3262, 0.0
        %v3304 = vadd.f32 %v3302, %v3303
        %v3305 = vsel %vm1167, %v3263, 0.0
        %v3306 = vadd.f32 %v3304, %v3305
        %v3307 = vsel %vm1167, %v3264, 0.0
        %v3308 = vadd.f32 %v3306, %v3307
        %v3309 = vsel %vm1167, %v3265, 0.0
        %v3310 = vadd.f32 %v3308, %v3309
        %v3311 = vsel %vm1167, %v3266, 0.0
        %v3312 = vadd.f32 %v3310, %v3311
        %v3313 = vsel %vm1167, %v3267, 0.0
        %v3314 = vadd.f32 %v3312, %v3313
        %v3315 = vsel %vm1167, %v3268, 0.0
        %v3316 = vadd.f32 %v3314, %v3315
        %v3317 = vsel %vm1167, %v3269, 0.0
        %v3318 = vadd.f32 %v3316, %v3317
        %v3319 = vsel %vm1167, %v3270, 0.0
        %v3320 = vadd.f32 %v3318, %v3319
        %v3321 = vsel %vm1167, %v3271, 0.0
        %v3322 = vadd.f32 %v3320, %v3321
        %v3323 = vsel %vm1167, %v3272, 0.0
        %v3324 = vadd.f32 %v3322, %v3323
        %v3325 = vsel %vm1167, %v3273, 0.0
        %v3326 = vadd.f32 %v3324, %v3325
        %v3327 = vsel %vm1167, %v3274, 0.0
        %v3328 = vadd.f32 %v3326, %v3327
        %v3329 = vsel %vm1167, %v3275, 0.0
        %v3330 = vadd.f32 %v3328, %v3329
        %v3331 = vsel %vm1167, %v3276, 0.0
        %v3332 = vadd.f32 %v3330, %v3331
        %v3333 = vsel %vm1167, %v3277, 0.0
        %v3334 = vadd.f32 %v3332, %v3333
        %v3335 = vsel %vm1167, %v3278, 0.0
        %v3336 = vadd.f32 %v3334, %v3335
        %v3337 = vsel %vm1167, %v3279, 0.0
        %v3338 = vadd.f32 %v3336, %v3337
        %v3339 = vsel %vm1167, %v3280, 0.0
        %v3340 = vadd.f32 %v3338, %v3339
        %v3341 = vsel %vm1167, %v3281, 0.0
        %v3342 = vadd.f32 %v3340, %v3341
        %v3343 = vsel %vm1167, %v3282, 0.0
        %v3344 = vadd.f32 %v3342, %v3343
        %v3345 = vsel %vm1167, %v3283, 0.0
        %v3346 = vadd.f32 %v3344, %v3345
        %v3347 = vrot.slane %v3346, 4
        %v3348 = vadd.f32 %v3346, %v3347
        %v3349 = vrot.slane %v3348, 2
        %v3350 = vadd.f32 %v3348, %v3349
        %v3351 = vrot.slane %v3350, 1
        %v3352 = vadd.f32 %v3350, %v3351
        %v3353 = vrcp.pop 256.0
        %v3354 = vmul.f32 %v3352, %v3353
        %v3355 = vld [vmem:[%s8] sm:$0xff]
        %v3356 = vld [vmem:[%s8 + $0x8] sm:$0xff]
        %v3357 = vld [vmem:[%s8 + $0x10] sm:$0xff]
        %v3358 = vld [vmem:[%s8 + $0x18] sm:$0xff]
        %v3359 = vld [vmem:[%s8 + $0x20] sm:$0xff]
        %v3360 = vld [vmem:[%s8 + $0x28] sm:$0xff]
        %v3361 = vld [vmem:[%s8 + $0x30] sm:$0xff]
        %v3362 = vld [vmem:[%s8 + $0x38] sm:$0xff]
        %v3363 = vld [vmem:[%s9] sm:$0x1]
        %v3365 = vsel %vm1167, %v3354, 0
        %3367 = vmatprep.subr.mxu0 0.0
        %3368 = vmatpush1.msra.mxu0 %v3355
        %3369 = vmatprep.subr.mxu0 0.0
        %3370 = vmatpush1.msra.mxu0 %v3356
        %3371 = vmatprep.subr.mxu0 0.0
        %3372 = vmatpush1.msra.mxu0 %v3357
        %3373 = vmatprep.subr.mxu0 0.0
        %3374 = vmatpush1.msra.mxu0 %v3358
        %3375 = vmatprep.subr.mxu0 0.0
        %3376 = vmatpush1.msra.mxu0 %v3359
        %3377 = vmatprep.subr.mxu0 0.0
        %3378 = vmatpush1.msra.mxu0 %v3360
        %3379 = vmatprep.subr.mxu0 0.0
        %3380 = vmatpush1.msra.mxu0 %v3361
        %3381 = vmatprep.subr.mxu0 0.0
        %3382 = vmatpush1.msra.mxu0 %v3362
        %3383 = vmatprep.subr.mxu0 0.0
        %3384 = vmatpush1.msra.mxu0 0.0
        %3385 = vmatprep.subr.mxu0 0.0
        %3386 = vmatpush1.msra.mxu0 0.0
        %3387 = vmatprep.subr.mxu0 0.0
        %3388 = vmatpush1.msra.mxu0 0.0
        %3389 = vmatprep.subr.mxu0 0.0
        %3390 = vmatpush1.msra.mxu0 0.0
        %3391 = vmatprep.subr.mxu0 0.0
        %3392 = vmatpush1.msra.mxu0 0.0
        %3393 = vmatprep.subr.mxu0 0.0
        %3394 = vmatpush1.msra.mxu0 0.0
        %3395 = vmatprep.subr.mxu0 0.0
        %3396 = vmatpush1.msra.mxu0 0.0
        %3397 = vmatprep.subr.mxu0 0.0
        %3398 = vmatpush1.msra.mxu0 0.0
        %3399 = vmatprep.subr.mxu0 0.0
        %3400 = vmatpush1.msra.mxu0 0.0
        %3401 = vmatprep.subr.mxu0 0.0
        %3402 = vmatpush1.msra.mxu0 0.0
        %3403 = vmatprep.subr.mxu0 0.0
        %3404 = vmatpush1.msra.mxu0 0.0
        %3405 = vmatprep.subr.mxu0 0.0
        %3406 = vmatpush1.msra.mxu0 0.0
        %3407 = vmatprep.subr.mxu0 0.0
        %3408 = vmatpush1.msra.mxu0 0.0
        %3409 = vmatprep.subr.mxu0 0.0
        %3410 = vmatpush1.msra.mxu0 0.0
        %3411 = vmatprep.subr.mxu0 0.0
        %3412 = vmatpush1.msra.mxu0 0.0
        %3413 = vmatprep.subr.mxu0 0.0
        %3414 = vmatpush1.msra.mxu0 0.0
        %3415 = vmatprep.subr.mxu0 0.0
        %3416 = vmatpush1.msra.mxu0 0.0
        %3417 = vmatprep.subr.mxu0 0.0
        %3418 = vmatpush1.msra.mxu0 0.0
        %3419 = vmatprep.subr.mxu0 0.0
        %3420 = vmatpush1.msra.mxu0 0.0
        %3421 = vmatprep.subr.mxu0 0.0
        %3422 = vmatpush1.msra.mxu0 0.0
        %3423 = vmatprep.subr.mxu0 0.0
        %3424 = vmatpush1.msra.mxu0 0.0
        %3425 = vmatprep.subr.mxu0 0.0
        %3426 = vmatpush1.msra.mxu0 0.0
        %3427 = vmatprep.subr.mxu0 0.0
        %3428 = vmatpush1.msra.mxu0 0.0
        %3429 = vmatprep.subr.mxu0 0.0
        %3430 = vmatpush1.msra.mxu0 0.0
        %3431 = vmatprep.mubr.f32.mxu0 0.0
        %3432 = vmatmul.mubr.f32.gmra.mrb[0].mxu0 %v3365
        %v3433 = vpop.f32.mrb[0].mxu0
        %v3434 = vadd.f32 %v3363, %v3433
        %v3435 = vpop.f32.mrb[0].mxu0
        %3436 = vdwg.mxu0
        %v3437 = vxor.u32 %v3434, 2147483648
        %v3438 = vmul.f32 %v3437, 1.442695
        %v3439 = vpow.pop %v3438
        %v3440 = vadd.f32 %v3439, 1.0
        %v3441 = vrcp.pop %v3440
        %v3442 = vmul.f32 1.0, %v3441
        %v3443 = vmul.f32 %v3434, %v3442
        %v3444 = vld [vmem:[%s10] sm:$0xf]
        %v3445 = vld [vmem:[%s11] sm:$0x1]
        %vm3446 = vcmask 31744
        %v3448 = vsel %vm3446, %v3443, 0
        %vm3450 = vcmask 1043456
        %v3452 = vsel %vm3450, %v3444, 0
        %3454 = vmatprep.subr.mxu0 0.0
        %3455 = vmatpush1.msra.mxu0 %v3452
        %3456 = vmatprep.subr.mxu0 0.0
        %3457 = vmatpush1.msra.mxu0 0.0
        %3458 = vmatprep.subr.mxu0 0.0
        %3459 = vmatpush1.msra.mxu0 0.0
        %3460 = vmatprep.subr.mxu0 0.0
        %3461 = vmatpush1.msra.mxu0 0.0
        %3462 = vmatprep.subr.mxu0 0.0
        %3463 = vmatpush1.msra.mxu0 0.0
        %3464 = vmatprep.subr.mxu0 0.0
        %3465 = vmatpush1.msra.mxu0 0.0
        %3466 = vmatprep.subr.mxu0 0.0
        %3467 = vmatpush1.msra.mxu0 0.0
        %3468 = vmatprep.subr.mxu0 0.0
        %3469 = vmatpush1.msra.mxu0 0.0
        %3470 = vmatprep.subr.mxu0 0.0
        %3471 = vmatpush1.msra.mxu0 0.0
        %3472 = vmatprep.subr.mxu0 0.0
        %3473 = vmatpush1.msra.mxu0 0.0
        %3474 = vmatprep.subr.mxu0 0.0
        %3475 = vmatpush1.msra.mxu0 0.0
        %3476 = vmatprep.subr.mxu0 0.0
        %3477 = vmatpush1.msra.mxu0 0.0
        %3478 = vmatprep.subr.mxu0 0.0
        %3479 = vmatpush1.msra.mxu0 0.0
        %3480 = vmatprep.subr.mxu0 0.0
        %3481 = vmatpush1.msra.mxu0 0.0
        %3482 = vmatprep.subr.mxu0 0.0
        %3483 = vmatpush1.msra.mxu0 0.0
        %3484 = vmatprep.subr.mxu0 0.0
        %3485 = vmatpush1.msra.mxu0 0.0
        %3486 = vmatprep.subr.mxu0 0.0
        %3487 = vmatpush1.msra.mxu0 0.0
        %3488 = vmatprep.subr.mxu0 0.0
        %3489 = vmatpush1.msra.mxu0 0.0
        %3490 = vmatprep.subr.mxu0 0.0
        %3491 = vmatpush1.msra.mxu0 0.0
        %3492 = vmatprep.subr.mxu0 0.0
        %3493 = vmatpush1.msra.mxu0 0.0
        %3494 = vmatprep.subr.mxu0 0.0
        %3495 = vmatpush1.msra.mxu0 0.0
        %3496 = vmatprep.subr.mxu0 0.0
        %3497 = vmatpush1.msra.mxu0 0.0
        %3498 = vmatprep.subr.mxu0 0.0
        %3499 = vmatpush1.msra.mxu0 0.0
        %3500 = vmatprep.subr.mxu0 0.0
        %3501 = vmatpush1.msra.mxu0 0.0
        %3502 = vmatprep.subr.mxu0 0.0
        %3503 = vmatpush1.msra.mxu0 0.0
        %3504 = vmatprep.subr.mxu0 0.0
        %3505 = vmatpush1.msra.mxu0 0.0
        %3506 = vmatprep.subr.mxu0 0.0
        %3507 = vmatpush1.msra.mxu0 0.0
        %3508 = vmatprep.subr.mxu0 0.0
        %3509 = vmatpush1.msra.mxu0 0.0
        %3510 = vmatprep.subr.mxu0 0.0
        %3511 = vmatpush1.msra.mxu0 0.0
        %3512 = vmatprep.subr.mxu0 0.0
        %3513 = vmatpush1.msra.mxu0 0.0
        %3514 = vmatprep.subr.mxu0 0.0
        %3515 = vmatpush1.msra.mxu0 0.0
        %3516 = vmatprep.subr.mxu0 0.0
        %3517 = vmatpush1.msra.mxu0 0.0
        %3518 = vmatprep.mubr.f32.mxu0 0.0
        %3519 = vmatmul.mubr.f32.gmra.mrb[0].mxu0 %v3448
        %v3520 = vpop.f32.mrb[0].mxu0
        %v3521 = vadd.f32 %v3445, %v3520
        %v3522 = vpop.f32.mrb[0].mxu0
        %3523 = vdwg.mxu0
        %v3524 = vxor.u32 %v3521, 2147483648
        %v3525 = vmul.f32 %v3524, 1.442695
        %v3526 = vpow.pop %v3525
        %v3527 = vadd.f32 %v3526, 1.0
        %v3528 = vrcp.pop %v3527
        %v3529 = vmul.f32 1.0, %v3528
        %v3530 = vlaneseq
        %v3531 = vshrl.u32 %v3530, 7
        %v3532 = vsub.s32 0, %v3531
        %v3533 = vrot.slane %v3529, %v3532
        %v3534 = vmul.f32 %v3252, %v3533
        %v3535 = vmul.f32 %v3253, %v3533
        %v3536 = vmul.f32 %v3254, %v3533
        %v3537 = vmul.f32 %v3255, %v3533
        %v3538 = vmul.f32 %v3256, %v3533
        %v3539 = vmul.f32 %v3257, %v3533
        %v3540 = vmul.f32 %v3258, %v3533
        %v3541 = vmul.f32 %v3259, %v3533
        %v3542 = vmul.f32 %v3260, %v3533
        %v3543 = vmul.f32 %v3261, %v3533
        %v3544 = vmul.f32 %v3262, %v3533
        %v3545 = vmul.f32 %v3263, %v3533
        %v3546 = vmul.f32 %v3264, %v3533
        %v3547 = vmul.f32 %v3265, %v3533
        %v3548 = vmul.f32 %v3266, %v3533
        %v3549 = vmul.f32 %v3267, %v3533
        %v3550 = vmul.f32 %v3268, %v3533
        %v3551 = vmul.f32 %v3269, %v3533
        %v3552 = vmul.f32 %v3270, %v3533
        %v3553 = vmul.f32 %v3271, %v3533
        %v3554 = vmul.f32 %v3272, %v3533
        %v3555 = vmul.f32 %v3273, %v3533
        %v3556 = vmul.f32 %v3274, %v3533
        %v3557 = vmul.f32 %v3275, %v3533
        %v3558 = vmul.f32 %v3276, %v3533
        %v3559 = vmul.f32 %v3277, %v3533
        %v3560 = vmul.f32 %v3278, %v3533
        %v3561 = vmul.f32 %v3279, %v3533
        %v3562 = vmul.f32 %v3280, %v3533
        %v3563 = vmul.f32 %v3281, %v3533
        %v3564 = vmul.f32 %v3282, %v3533
        %v3565 = vmul.f32 %v3283, %v3533
        %v3566 = vld [vmem:[%s12] sm:$0xff]
        %v3567 = vld [vmem:[%s12 + $0x8] sm:$0xff]
        %v3568 = vld [vmem:[%s12 + $0x10] sm:$0xff]
        %v3569 = vld [vmem:[%s12 + $0x18] sm:$0xff]
        %v3570 = vld [vmem:[%s12 + $0x20] sm:$0xff]
        %v3571 = vld [vmem:[%s12 + $0x28] sm:$0xff]
        %v3572 = vld [vmem:[%s12 + $0x30] sm:$0xff]
        %v3573 = vld [vmem:[%s12 + $0x38] sm:$0xff]
        %v3575 = vsel %vm1167, %v3534, 0
        %v3578 = vsel %vm1167, %v3535, 0
        %v3581 = vsel %vm1167, %v3536, 0
        %v3584 = vsel %vm1167, %v3537, 0
        %v3587 = vsel %vm1167, %v3538, 0
        %v3590 = vsel %vm1167, %v3539, 0
        %v3593 = vsel %vm1167, %v3540, 0
        %v3596 = vsel %vm1167, %v3541, 0
        %v3599 = vsel %vm1167, %v3542, 0
        %v3602 = vsel %vm1167, %v3543, 0
        %v3605 = vsel %vm1167, %v3544, 0
        %v3608 = vsel %vm1167, %v3545, 0
        %v3611 = vsel %vm1167, %v3546, 0
        %v3614 = vsel %vm1167, %v3547, 0
        %v3617 = vsel %vm1167, %v3548, 0
        %v3620 = vsel %vm1167, %v3549, 0
        %v3623 = vsel %vm1167, %v3550, 0
        %v3626 = vsel %vm1167, %v3551, 0
        %v3629 = vsel %vm1167, %v3552, 0
        %v3632 = vsel %vm1167, %v3553, 0
        %v3635 = vsel %vm1167, %v3554, 0
        %v3638 = vsel %vm1167, %v3555, 0
        %v3641 = vsel %vm1167, %v3556, 0
        %v3644 = vsel %vm1167, %v3557, 0
        %v3647 = vsel %vm1167, %v3558, 0
        %v3650 = vsel %vm1167, %v3559, 0
        %v3653 = vsel %vm1167, %v3560, 0
        %v3656 = vsel %vm1167, %v3561, 0
        %v3659 = vsel %vm1167, %v3562, 0
        %v3662 = vsel %vm1167, %v3563, 0
        %v3665 = vsel %vm1167, %v3564, 0
        %v3668 = vsel %vm1167, %v3565, 0
        %3670 = vmatprep.subr.mxu0 0.0
        %3671 = vmatpush1.msra.mxu0 %v3566
        %3672 = vmatprep.subr.mxu0 0.0
        %3673 = vmatpush1.msra.mxu0 %v3567
        %3674 = vmatprep.subr.mxu0 0.0
        %3675 = vmatpush1.msra.mxu0 %v3568
        %3676 = vmatprep.subr.mxu0 0.0
        %3677 = vmatpush1.msra.mxu0 %v3569
        %3678 = vmatprep.subr.mxu0 0.0
        %3679 = vmatpush1.msra.mxu0 %v3570
        %3680 = vmatprep.subr.mxu0 0.0
        %3681 = vmatpush1.msra.mxu0 %v3571
        %3682 = vmatprep.subr.mxu0 0.0
        %3683 = vmatpush1.msra.mxu0 %v3572
        %3684 = vmatprep.subr.mxu0 0.0
        %3685 = vmatpush1.msra.mxu0 %v3573
        %3686 = vmatprep.subr.mxu0 0.0
        %3687 = vmatpush1.msra.mxu0 0.0
        %3688 = vmatprep.subr.mxu0 0.0
        %3689 = vmatpush1.msra.mxu0 0.0
        %3690 = vmatprep.subr.mxu0 0.0
        %3691 = vmatpush1.msra.mxu0 0.0
        %3692 = vmatprep.subr.mxu0 0.0
        %3693 = vmatpush1.msra.mxu0 0.0
        %3694 = vmatprep.subr.mxu0 0.0
        %3695 = vmatpush1.msra.mxu0 0.0
        %3696 = vmatprep.subr.mxu0 0.0
        %3697 = vmatpush1.msra.mxu0 0.0
        %3698 = vmatprep.subr.mxu0 0.0
        %3699 = vmatpush1.msra.mxu0 0.0
        %3700 = vmatprep.subr.mxu0 0.0
        %3701 = vmatpush1.msra.mxu0 0.0
        %3702 = vmatprep.subr.mxu0 0.0
        %3703 = vmatpush1.msra.mxu0 0.0
        %3704 = vmatprep.subr.mxu0 0.0
        %3705 = vmatpush1.msra.mxu0 0.0
        %3706 = vmatprep.subr.mxu0 0.0
        %3707 = vmatpush1.msra.mxu0 0.0
        %3708 = vmatprep.subr.mxu0 0.0
        %3709 = vmatpush1.msra.mxu0 0.0
        %3710 = vmatprep.subr.mxu0 0.0
        %3711 = vmatpush1.msra.mxu0 0.0
        %3712 = vmatprep.subr.mxu0 0.0
        %3713 = vmatpush1.msra.mxu0 0.0
        %3714 = vmatprep.subr.mxu0 0.0
        %3715 = vmatpush1.msra.mxu0 0.0
        %3716 = vmatprep.subr.mxu0 0.0
        %3717 = vmatpush1.msra.mxu0 0.0
        %3718 = vmatprep.subr.mxu0 0.0
        %3719 = vmatpush1.msra.mxu0 0.0
        %3720 = vmatprep.subr.mxu0 0.0
        %3721 = vmatpush1.msra.mxu0 0.0
        %3722 = vmatprep.subr.mxu0 0.0
        %3723 = vmatpush1.msra.mxu0 0.0
        %3724 = vmatprep.subr.mxu0 0.0
        %3725 = vmatpush1.msra.mxu0 0.0
        %3726 = vmatprep.subr.mxu0 0.0
        %3727 = vmatpush1.msra.mxu0 0.0
        %3728 = vmatprep.subr.mxu0 0.0
        %3729 = vmatpush1.msra.mxu0 0.0
        %3730 = vmatprep.subr.mxu0 0.0
        %3731 = vmatpush1.msra.mxu0 0.0
        %3732 = vmatprep.subr.mxu0 0.0
        %3733 = vmatpush1.msra.mxu0 0.0
        %3734 = vmatprep.mubr.f32.mxu0 0.0
        %3735 = vmatmul.mubr.f32.gmra.mrb[0].mxu0 %v3575
        %v3736 = vpop.f32.mrb[0].mxu0
        %v3737 = vadd.f32 0.0, %v3736
        %v3738 = vpop.f32.mrb[0].mxu0
        %3739 = vmatprep.mubr.f32.mxu0 0.0
        %3740 = vmatmul.mubr.f32.gmra.mrb[0].mxu0 %v3578
        %v3741 = vpop.f32.mrb[0].mxu0
        %v3742 = vadd.f32 0.0, %v3741
        %v3743 = vpop.f32.mrb[0].mxu0
        %3744 = vmatprep.mubr.f32.mxu0 0.0
        %3745 = vmatmul.mubr.f32.gmra.mrb[0].mxu0 %v3581
        %v3746 = vpop.f32.mrb[0].mxu0
        %v3747 = vadd.f32 0.0, %v3746
        %v3748 = vpop.f32.mrb[0].mxu0
        %3749 = vmatprep.mubr.f32.mxu0 0.0
        %3750 = vmatmul.mubr.f32.gmra.mrb[0].mxu0 %v3584
        %v3751 = vpop.f32.mrb[0].mxu0
        %v3752 = vadd.f32 0.0, %v3751
        %v3753 = vpop.f32.mrb[0].mxu0
        %3754 = vmatprep.mubr.f32.mxu0 0.0
        %3755 = vmatmul.mubr.f32.gmra.mrb[0].mxu0 %v3587
        %v3756 = vpop.f32.mrb[0].mxu0
        %v3757 = vadd.f32 0.0, %v3756
        %v3758 = vpop.f32.mrb[0].mxu0
        %3759 = vmatprep.mubr.f32.mxu0 0.0
        %3760 = vmatmul.mubr.f32.gmra.mrb[0].mxu0 %v3590
        %v3761 = vpop.f32.mrb[0].mxu0
        %v3762 = vadd.f32 0.0, %v3761
        %v3763 = vpop.f32.mrb[0].mxu0
        %3764 = vmatprep.mubr.f32.mxu0 0.0
        %3765 = vmatmul.mubr.f32.gmra.mrb[0].mxu0 %v3593
        %v3766 = vpop.f32.mrb[0].mxu0
        %v3767 = vadd.f32 0.0, %v3766
        %v3768 = vpop.f32.mrb[0].mxu0
        %3769 = vmatprep.mubr.f32.mxu0 0.0
        %3770 = vmatmul.mubr.f32.gmra.mrb[0].mxu0 %v3596
        %v3771 = vpop.f32.mrb[0].mxu0
        %v3772 = vadd.f32 0.0, %v3771
        %v3773 = vpop.f32.mrb[0].mxu0
        %3774 = vmatprep.mubr.f32.mxu0 0.0
        %3775 = vmatmul.mubr.f32.gmra.mrb[0].mxu0 %v3599
        %v3776 = vpop.f32.mrb[0].mxu0
        %v3777 = vadd.f32 0.0, %v3776
        %v3778 = vpop.f32.mrb[0].mxu0
        %3779 = vmatprep.mubr.f32.mxu0 0.0
        %3780 = vmatmul.mubr.f32.gmra.mrb[0].mxu0 %v3602
        %v3781 = vpop.f32.mrb[0].mxu0
        %v3782 = vadd.f32 0.0, %v3781
        %v3783 = vpop.f32.mrb[0].mxu0
        %3784 = vmatprep.mubr.f32.mxu0 0.0
        %3785 = vmatmul.mubr.f32.gmra.mrb[0].mxu0 %v3605
        %v3786 = vpop.f32.mrb[0].mxu0
        %v3787 = vadd.f32 0.0, %v3786
        %v3788 = vpop.f32.mrb[0].mxu0
        %3789 = vmatprep.mubr.f32.mxu0 0.0
        %3790 = vmatmul.mubr.f32.gmra.mrb[0].mxu0 %v3608
        %v3791 = vpop.f32.mrb[0].mxu0
        %v3792 = vadd.f32 0.0, %v3791
        %v3793 = vpop.f32.mrb[0].mxu0
        %3794 = vmatprep.mubr.f32.mxu0 0.0
        %3795 = vmatmul.mubr.f32.gmra.mrb[0].mxu0 %v3611
        %v3796 = vpop.f32.mrb[0].mxu0
        %v3797 = vadd.f32 0.0, %v3796
        %v3798 = vpop.f32.mrb[0].mxu0
        %3799 = vmatprep.mubr.f32.mxu0 0.0
        %3800 = vmatmul.mubr.f32.gmra.mrb[0].mxu0 %v3614
        %v3801 = vpop.f32.mrb[0].mxu0
        %v3802 = vadd.f32 0.0, %v3801
        %v3803 = vpop.f32.mrb[0].mxu0
        %3804 = vmatprep.mubr.f32.mxu0 0.0
        %3805 = vmatmul.mubr.f32.gmra.mrb[0].mxu0 %v3617
        %v3806 = vpop.f32.mrb[0].mxu0
        %v3807 = vadd.f32 0.0, %v3806
        %v3808 = vpop.f32.mrb[0].mxu0
        %3809 = vmatprep.mubr.f32.mxu0 0.0
        %3810 = vmatmul.mubr.f32.gmra.mrb[0].mxu0 %v3620
        %v3811 = vpop.f32.mrb[0].mxu0
        %v3812 = vadd.f32 0.0, %v3811
        %v3813 = vpop.f32.mrb[0].mxu0
        %3814 = vmatprep.mubr.f32.mxu0 0.0
        %3815 = vmatmul.mubr.f32.gmra.mrb[0].mxu0 %v3623
        %v3816 = vpop.f32.mrb[0].mxu0
        %v3817 = vadd.f32 0.0, %v3816
        %v3818 = vpop.f32.mrb[0].mxu0
        %3819 = vmatprep.mubr.f32.mxu0 0.0
        %3820 = vmatmul.mubr.f32.gmra.mrb[0].mxu0 %v3626
        %v3821 = vpop.f32.mrb[0].mxu0
        %v3822 = vadd.f32 0.0, %v3821
        %v3823 = vpop.f32.mrb[0].mxu0
        %3824 = vmatprep.mubr.f32.mxu0 0.0
        %3825 = vmatmul.mubr.f32.gmra.mrb[0].mxu0 %v3629
        %v3826 = vpop.f32.mrb[0].mxu0
        %v3827 = vadd.f32 0.0, %v3826
        %v3828 = vpop.f32.mrb[0].mxu0
        %3829 = vmatprep.mubr.f32.mxu0 0.0
        %3830 = vmatmul.mubr.f32.gmra.mrb[0].mxu0 %v3632
        %v3831 = vpop.f32.mrb[0].mxu0
        %v3832 = vadd.f32 0.0, %v3831
        %v3833 = vpop.f32.mrb[0].mxu0
        %3834 = vmatprep.mubr.f32.mxu0 0.0
        %3835 = vmatmul.mubr.f32.gmra.mrb[0].mxu0 %v3635
        %v3836 = vpop.f32.mrb[0].mxu0
        %v3837 = vadd.f32 0.0, %v3836
        %v3838 = vpop.f32.mrb[0].mxu0
        %3839 = vmatprep.mubr.f32.mxu0 0.0
        %3840 = vmatmul.mubr.f32.gmra.mrb[0].mxu0 %v3638
        %v3841 = vpop.f32.mrb[0].mxu0
        %v3842 = vadd.f32 0.0, %v3841
        %v3843 = vpop.f32.mrb[0].mxu0
        %3844 = vmatprep.mubr.f32.mxu0 0.0
        %3845 = vmatmul.mubr.f32.gmra.mrb[0].mxu0 %v3641
        %v3846 = vpop.f32.mrb[0].mxu0
        %v3847 = vadd.f32 0.0, %v3846
        %v3848 = vpop.f32.mrb[0].mxu0
        %3849 = vmatprep.mubr.f32.mxu0 0.0
        %3850 = vmatmul.mubr.f32.gmra.mrb[0].mxu0 %v3644
        %v3851 = vpop.f32.mrb[0].mxu0
        %v3852 = vadd.f32 0.0, %v3851
        %v3853 = vpop.f32.mrb[0].mxu0
        %3854 = vmatprep.mubr.f32.mxu0 0.0
        %3855 = vmatmul.mubr.f32.gmra.mrb[0].mxu0 %v3647
        %v3856 = vpop.f32.mrb[0].mxu0
        %v3857 = vadd.f32 0.0, %v3856
        %v3858 = vpop.f32.mrb[0].mxu0
        %3859 = vmatprep.mubr.f32.mxu0 0.0
        %3860 = vmatmul.mubr.f32.gmra.mrb[0].mxu0 %v3650
        %v3861 = vpop.f32.mrb[0].mxu0
        %v3862 = vadd.f32 0.0, %v3861
        %v3863 = vpop.f32.mrb[0].mxu0
        %3864 = vmatprep.mubr.f32.mxu0 0.0
        %3865 = vmatmul.mubr.f32.gmra.mrb[0].mxu0 %v3653
        %v3866 = vpop.f32.mrb[0].mxu0
        %v3867 = vadd.f32 0.0, %v3866
        %v3868 = vpop.f32.mrb[0].mxu0
        %3869 = vmatprep.mubr.f32.mxu0 0.0
        %3870 = vmatmul.mubr.f32.gmra.mrb[0].mxu0 %v3656
        %v3871 = vpop.f32.mrb[0].mxu0
        %v3872 = vadd.f32 0.0, %v3871
        %v3873 = vpop.f32.mrb[0].mxu0
        %3874 = vmatprep.mubr.f32.mxu0 0.0
        %3875 = vmatmul.mubr.f32.gmra.mrb[0].mxu0 %v3659
        %v3876 = vpop.f32.mrb[0].mxu0
        %v3877 = vadd.f32 0.0, %v3876
        %v3878 = vpop.f32.mrb[0].mxu0
        %3879 = vmatprep.mubr.f32.mxu0 0.0
        %3880 = vmatmul.mubr.f32.gmra.mrb[0].mxu0 %v3662
        %v3881 = vpop.f32.mrb[0].mxu0
        %v3882 = vadd.f32 0.0, %v3881
        %v3883 = vpop.f32.mrb[0].mxu0
        %3884 = vmatprep.mubr.f32.mxu0 0.0
        %3885 = vmatmul.mubr.f32.gmra.mrb[0].mxu0 %v3665
        %v3886 = vpop.f32.mrb[0].mxu0
        %v3887 = vadd.f32 0.0, %v3886
        %v3888 = vpop.f32.mrb[0].mxu0
        %3889 = vmatprep.mubr.f32.mxu0 0.0
        %3890 = vmatmul.mubr.f32.gmra.mrb[0].mxu0 %v3668
        %v3891 = vpop.f32.mrb[0].mxu0
        %v3892 = vadd.f32 0.0, %v3891
        %v3893 = vpop.f32.mrb[0].mxu0
        %3894 = vdwg.mxu0
        %v3895 = vld [vmem:[%s13] sm:$0x1]
        %v3897 = vlaneseq
        %v3898 = vshrl.u32 %v3897, 7
        %v3899 = vsub.s32 0, %v3898
        %v3900 = vrot.slane %v3895, %v3899
        %v3902 = vmul.f32 %v3737, %v3900
        %v3903 = vmul.f32 %v3742, %v3900
        %v3904 = vmul.f32 %v3747, %v3900
        %v3905 = vmul.f32 %v3752, %v3900
        %v3906 = vmul.f32 %v3757, %v3900
        %v3907 = vmul.f32 %v3762, %v3900
        %v3908 = vmul.f32 %v3767, %v3900
        %v3909 = vmul.f32 %v3772, %v3900
        %v3910 = vmul.f32 %v3777, %v3900
        %v3911 = vmul.f32 %v3782, %v3900
        %v3912 = vmul.f32 %v3787, %v3900
        %v3913 = vmul.f32 %v3792, %v3900
        %v3914 = vmul.f32 %v3797, %v3900
        %v3915 = vmul.f32 %v3802, %v3900
        %v3916 = vmul.f32 %v3807, %v3900
        %v3917 = vmul.f32 %v3812, %v3900
        %v3918 = vmul.f32 %v3817, %v3900
        %v3919 = vmul.f32 %v3822, %v3900
        %v3920 = vmul.f32 %v3827, %v3900
        %v3921 = vmul.f32 %v3832, %v3900
        %v3922 = vmul.f32 %v3837, %v3900
        %v3923 = vmul.f32 %v3842, %v3900
        %v3924 = vmul.f32 %v3847, %v3900
        %v3925 = vmul.f32 %v3852, %v3900
        %v3926 = vmul.f32 %v3857, %v3900
        %v3927 = vmul.f32 %v3862, %v3900
        %v3928 = vmul.f32 %v3867, %v3900
        %v3929 = vmul.f32 %v3872, %v3900
        %v3930 = vmul.f32 %v3877, %v3900
        %v3931 = vmul.f32 %v3882, %v3900
        %v3932 = vmul.f32 %v3887, %v3900
        %v3933 = vmul.f32 %v3892, %v3900
        %v3934 = vld [vmem:[%s14] sm:$0x1]
        %v3936 = vlaneseq
        %v3937 = vshrl.u32 %v3936, 7
        %v3938 = vsub.s32 0, %v3937
        %v3939 = vrot.slane %v3934, %v3938
        %v3941 = vadd.f32 %v3902, %v3939
        %v3942 = vadd.f32 %v3903, %v3939
        %v3943 = vadd.f32 %v3904, %v3939
        %v3944 = vadd.f32 %v3905, %v3939
        %v3945 = vadd.f32 %v3906, %v3939
        %v3946 = vadd.f32 %v3907, %v3939
        %v3947 = vadd.f32 %v3908, %v3939
        %v3948 = vadd.f32 %v3909, %v3939
        %v3949 = vadd.f32 %v3910, %v3939
        %v3950 = vadd.f32 %v3911, %v3939
        %v3951 = vadd.f32 %v3912, %v3939
        %v3952 = vadd.f32 %v3913, %v3939
        %v3953 = vadd.f32 %v3914, %v3939
        %v3954 = vadd.f32 %v3915, %v3939
        %v3955 = vadd.f32 %v3916, %v3939
        %v3956 = vadd.f32 %v3917, %v3939
        %v3957 = vadd.f32 %v3918, %v3939
        %v3958 = vadd.f32 %v3919, %v3939
        %v3959 = vadd.f32 %v3920, %v3939
        %v3960 = vadd.f32 %v3921, %v3939
        %v3961 = vadd.f32 %v3922, %v3939
        %v3962 = vadd.f32 %v3923, %v3939
        %v3963 = vadd.f32 %v3924, %v3939
        %v3964 = vadd.f32 %v3925, %v3939
        %v3965 = vadd.f32 %v3926, %v3939
        %v3966 = vadd.f32 %v3927, %v3939
        %v3967 = vadd.f32 %v3928, %v3939
        %v3968 = vadd.f32 %v3929, %v3939
        %v3969 = vadd.f32 %v3930, %v3939
        %v3970 = vadd.f32 %v3931, %v3939
        %v3971 = vadd.f32 %v3932, %v3939
        %v3972 = vadd.f32 %v3933, %v3939
        %3973 = vxpose.xlu0.b32.start [1/16] %v3941, 128
        %3974 = vxpose.xlu0.b32.cont [2/16] %v3942, 128
        %3975 = vxpose.xlu0.b32.cont [3/16] %v3943, 128
        %3976 = vxpose.xlu0.b32.cont [4/16] %v3944, 128
        %3977 = vxpose.xlu0.b32.cont [5/16] %v3945, 128
        %3978 = vxpose.xlu0.b32.cont [6/16] %v3946, 128
        %3979 = vxpose.xlu0.b32.cont [7/16] %v3947, 128
        %3980 = vxpose.xlu0.b32.cont [8/16] %v3948, 128
        %3981 = vxpose.xlu0.b32.cont [9/16] %v3949, 128
        %3982 = vxpose.xlu0.b32.cont [10/16] %v3950, 128
        %3983 = vxpose.xlu0.b32.cont [11/16] %v3951, 128
        %3984 = vxpose.xlu0.b32.cont [12/16] %v3952, 128
        %3985 = vxpose.xlu0.b32.cont [13/16] %v3953, 128
        %3986 = vxpose.xlu0.b32.cont [14/16] %v3954, 128
        %3987 = vxpose.xlu0.b32.cont [15/16] %v3955, 128
        %3988 = vxpose.xlu0.b32.end [16/16] %v3956, 128
        %v3989 = vpop.trf.xlu0
        %v3990 = vpop.trf.xlu0
        %v3991 = vpop.trf.xlu0
        %v3992 = vpop.trf.xlu0
        %v3993 = vpop.trf.xlu0
        %v3994 = vpop.trf.xlu0
        %v3995 = vpop.trf.xlu0
        %v3996 = vpop.trf.xlu0
        %v3997 = vpop.trf.xlu0
        %v3998 = vpop.trf.xlu0
        %v3999 = vpop.trf.xlu0
        %v4000 = vpop.trf.xlu0
        %v4001 = vpop.trf.xlu0
        %v4002 = vpop.trf.xlu0
        %v4003 = vpop.trf.xlu0
        %v4004 = vpop.trf.xlu0
        %4005 = vxpose.xlu0.b32.start [1/16] %v3957, 128
        %4006 = vxpose.xlu0.b32.cont [2/16] %v3958, 128
        %4007 = vxpose.xlu0.b32.cont [3/16] %v3959, 128
        %4008 = vxpose.xlu0.b32.cont [4/16] %v3960, 128
        %4009 = vxpose.xlu0.b32.cont [5/16] %v3961, 128
        %4010 = vxpose.xlu0.b32.cont [6/16] %v3962, 128
        %4011 = vxpose.xlu0.b32.cont [7/16] %v3963, 128
        %4012 = vxpose.xlu0.b32.cont [8/16] %v3964, 128
        %4013 = vxpose.xlu0.b32.cont [9/16] %v3965, 128
        %4014 = vxpose.xlu0.b32.cont [10/16] %v3966, 128
        %4015 = vxpose.xlu0.b32.cont [11/16] %v3967, 128
        %4016 = vxpose.xlu0.b32.cont [12/16] %v3968, 128
        %4017 = vxpose.xlu0.b32.cont [13/16] %v3969, 128
        %4018 = vxpose.xlu0.b32.cont [14/16] %v3970, 128
        %4019 = vxpose.xlu0.b32.cont [15/16] %v3971, 128
        %4020 = vxpose.xlu0.b32.end [16/16] %v3972, 128
        %v4021 = vpop.trf.xlu0
        %v4022 = vpop.trf.xlu0
        %v4023 = vpop.trf.xlu0
        %v4024 = vpop.trf.xlu0
        %v4025 = vpop.trf.xlu0
        %v4026 = vpop.trf.xlu0
        %v4027 = vpop.trf.xlu0
        %v4028 = vpop.trf.xlu0
        %v4029 = vpop.trf.xlu0
        %v4030 = vpop.trf.xlu0
        %v4031 = vpop.trf.xlu0
        %v4032 = vpop.trf.xlu0
        %v4033 = vpop.trf.xlu0
        %v4034 = vpop.trf.xlu0
        %v4035 = vpop.trf.xlu0
        %v4036 = vpop.trf.xlu0
        %s4037 = sld [smem:[#allocation4 + %s35]]
        %s4038 = scvt.s32.f32 %s4037
        %s4039 = smul.f32 %s4038, 1.3333334
        %v4040 = vstv %s4039
        %v4041 = vmul.f32 %v3989, %v4040
        %v4042 = vmul.f32 %v4021, %v4040
        %v4043 = vmul.f32 %v3990, %v4040
        %v4044 = vmul.f32 %v4022, %v4040
        %v4045 = vadd.f32 %v4041, %v473
        %v4046 = vadd.f32 %v4042, %v474
        %v4047 = vadd.f32 %v4043, %v475
        %v4048 = vadd.f32 %v4044, %v476
        %4049 = vst [vmem:[%s467] sm:$0xff] %v4045
        %4050 = vst [vmem:[%s467 + $0x8] sm:$0xff] %v4046
        %4051 = vst [vmem:[%s467 + $0x10] sm:$0xff] %v4047
        %4052 = vst [vmem:[%s467 + $0x18] sm:$0xff] %v4048
        %s4053 = sand.u32 %s342, 1
        %s4054 = scalar_lea.sflag [#allocation6], %s4053
        %s4055 = sand.u32 %s342, 1
        %s4056 = smul.addr %s4055, 32
        %s4057 = scalar_lea.vmem [#allocation5], %s4056
        // Predicated region
        $region77: #{tpu_custom_call.1} parent=75 // pred_check
          %p4058 = pneg %p352
        $region78: #{tpu_custom_call.1} parent=75 // pred_check_branch
          %4060 = sbr.rel (%p4058) target = $region80
        $region79: #{tpu_custom_call.1} parent=75 // pred_region
          %s4062 = ssub.s32 512, 512
          %4063 = vsyncadd %s4054, %s4062
          %s4064 = smul.addr %s35, 4
          %s4065 = smul.addr %s4064, 128
          %s4066 = scalar_lea.hbm %s15, %s4065
          %s4067 = sshll.u32 %s4057, 4
          %s4068 = int_to_ptr.vmem [resolvable:$true] %s4067
          %4073 = dma.vmem_to_hbm [thread:$0]  %s4068, 512, %s4066, %s4054, 256, 256, 16
        $region80: #{tpu_custom_call.1} parent=75 // pred_fallthru
          _
      $region76: #{tpu_custom_call.1} parent=5 // pred_fallthru
        _
      %p4074 = scmp.le.s32.totalorder 2, %s30
      // Predicated region
      $region81: #{tpu_custom_call.1} parent=5 // pred_check
        %p4075 = pneg %p4074
      $region82: #{tpu_custom_call.1} parent=5 // pred_check_branch
        %4077 = sbr.rel (%p4075) target = $region84
      $region83: #{tpu_custom_call.1} parent=5 // pred_region
        %s4078 = ssub.s32 %s30, 2
        // Predicated region
        $region85: #{tpu_custom_call.1} parent=83 // pred_check
          %p4079 = pneg %p358
        $region86: #{tpu_custom_call.1} parent=83 // pred_check_branch
          %4081 = sbr.rel (%p4079) target = $region88
        $region87: #{tpu_custom_call.1} parent=83 // pred_region
          %s4082 = sand.u32 %s343, 1
          %s4083 = scalar_lea.sflag [#allocation6], %s4082
          %s4084 = sand.u32 %s343, 1
          %s4085 = smul.addr %s4084, 32
          %s4086 = scalar_lea.vmem [#allocation5], %s4085
          %4087 = dma.done %s4083, 512
        $region88: #{tpu_custom_call.1} parent=83 // pred_fallthru
          _
      $region84: #{tpu_custom_call.1} parent=5 // pred_fallthru
        _
    $region6: #{tpu_custom_call.1} parent=1 // loop_footer
      %s34 = sadd.s32 1, %s30
    $region7: #{tpu_custom_call.1} parent=1 // loop_footer_branch
      %29 = sbr.rel target = $region3
    $region8: #{tpu_custom_call.1} parent=1 // loop_exit
      _
    %4088 = vsyncpa [#allocation6], 1
    %s4089 = scalar_lea.sflag [#allocation6], 1
    %4090 = vsyncpa %s4089, 1

</llo_original>
